<compile_context>
chip_gen: v5e
topology: v5e:2x2
jax: 0.10.0
libtpu: 0.0.40
codegen_flags: <defaults>
</compile_context>

<pallas_src>
import functools
import math

import jax
import jax.numpy as jnp
from jax.experimental import pallas as pl
from jax.experimental.pallas import tpu as pltpu

_EPS = 1e-5
_LANE = 128
_VMEM_LIMIT_BYTES = 44 * 1024 * 1024     # < 64 MiB physical on v7x, generous on v5e/v6e
_CONV_STEP_BUDGET = 20 * 1024 * 1024     # per-grid-step block bytes (double-buffered)
_BN_STEP_BUDGET = 10 * 1024 * 1024


# ---------------------------------------------------------------------------
# small helpers
# ---------------------------------------------------------------------------
def _round_up(n, m):
    return ((n + m - 1) // m) * m


def _largest_divisor_leq(n, cap):
    cap = max(1, min(n, cap))
    for d in range(cap, 0, -1):
        if n % d == 0:
            return d
    return 1


def _pick_rows(m, bytes_per_row, budget):
    """Largest row tile <= VMEM budget; prefers multiples of 8 that divide m."""
    cap = max(8, budget // max(1, bytes_per_row))
    if m <= cap:
        return m
    d = (cap // 8) * 8
    while d >= 8:
        if m % d == 0:
            return d
        d -= 8
    return m      # rare awkward m: fall back to a single full block


def _pad_last(a, to):
    pad = to - a.shape[-1]
    if pad == 0:
        return a
    return jnp.pad(a, [(0, 0)] * (a.ndim - 1) + [(0, pad)])


# ---------------------------------------------------------------------------
# Kernel A: 3x3 conv (9 accumulated tap-matmuls into a f32 VMEM scratch) +
#           per-tile BN partial stats, optionally fused with the 1x1
#           projection-shortcut matmul + its stats.
# ---------------------------------------------------------------------------
def _conv_taps_kernel(*refs, stride, hq, th, wo, nb, has_shortcut):
    if has_shortcut:
        x_ref, w_ref, xs_ref, ws_ref, y_ref, st_ref, ys_ref, sts_ref, acc_ref = refs
    else:
        x_ref, w_ref, y_ref, st_ref, acc_ref = refs

    r0 = pl.program_id(1) * th                 # first output row of this row tile
    cin_p = x_ref.shape[-1]
    cout_p = y_ref.shape[-1]
    m = nb * th * wo

    # 9 tap-matmuls accumulated into an f32 VMEM scratch (MRB chaining on v7x,
    # bounded vreg pressure at large M on all generations).
    for t in range(9):                          # static unroll over the 9 taps
        di, dj = divmod(t, 3)
        p, oi = di % stride, di // stride       # stride phase / in-phase row offset
        q, oj = dj % stride, dj // stride
        base = (p * stride + q) * hq + oi       # static row base inside phase layout
        patch = x_ref[:, pl.ds(base + r0, th), pl.ds(oj, wo), :]
        patch = patch.reshape(m, cin_p)
        contrib = jnp.dot(patch, w_ref[t], preferred_element_type=jnp.float32)
        if t == 0:
            acc_ref[...] = contrib
        else:
            acc_ref[...] += contrib

    acc = acc_ref[...]
    y_ref[...] = acc.reshape(nb, 1, th * wo, cout_p).astype(y_ref.dtype)
    st_ref[...] = jnp.concatenate(
        [jnp.sum(acc, axis=0, keepdims=True),
         jnp.sum(acc * acc, axis=0, keepdims=True)], axis=0,
    ).reshape(1, 1, 2, cout_p)

    if has_shortcut:
        xs = xs_ref[...].reshape(m, xs_ref.shape[-1])
        acc_s = jnp.dot(xs, ws_ref[...], preferred_element_type=jnp.float32)
        ys_ref[...] = acc_s.reshape(nb, 1, th * wo, cout_p).astype(ys_ref.dtype)
        sts_ref[...] = jnp.concatenate(
            [jnp.sum(acc_s, axis=0, keepdims=True),
             jnp.sum(acc_s * acc_s, axis=0, keepdims=True)], axis=0,
        ).reshape(1, 1, 2, cout_p)


def _conv3x3_stats(x_ph, w_taps, *, stride, hq, wq, ho, wo, cout_p, shortcut=None):
    b = x_ph.shape[0]
    cin_p = x_ph.shape[-1]
    sh = x_ph.shape[1]                          # = stride*stride*hq
    dtype = x_ph.dtype
    isz = dtype.itemsize
    has_sc = shortcut is not None
    cs_p = shortcut[0].shape[-1] if has_sc else 0

    w_bytes = 9 * cin_p * cout_p * isz + (cs_p * cout_p * isz if has_sc else 0)

    def step_bytes(nb, th):
        blk = nb * sh * wq * cin_p * isz               # input phase block
        blk += nb * th * wo * cout_p * isz             # conv output block
        if has_sc:
            blk += nb * th * wo * (cs_p + cout_p) * isz
        scratch = nb * th * wo * cout_p * 4            # f32 accumulator
        return 2 * (blk + w_bytes) + scratch           # x2: double-buffered pipeline

    # Start from whole-image rows and all images per step; shrink to VMEM budget.
    th = ho
    nb = b
    while nb > 1 and step_bytes(nb, th) > _CONV_STEP_BUDGET:
        nb = _largest_divisor_leq(b, nb - 1)
    while th > 1 and step_bytes(nb, th) > _CONV_STEP_BUDGET:
        th = _largest_divisor_leq(ho, th - 1)
    n_h = ho // th
    n_b = b // nb

    kernel = functools.partial(_conv_taps_kernel, stride=stride, hq=hq, th=th,
                               wo=wo, nb=nb, has_shortcut=has_sc)

    in_specs = [
        pl.BlockSpec((nb, sh, wq, cin_p), lambda bb, hh: (bb, 0, 0, 0)),
        pl.BlockSpec((9, cin_p, cout_p), lambda bb, hh: (0, 0, 0)),
    ]
    out_shape = [
        jax.ShapeDtypeStruct((b, n_h, th * wo, cout_p), dtype),        # conv out: compute dtype
        jax.ShapeDtypeStruct((n_b, n_h, 2, cout_p), jnp.float32),      # stats stay f32
    ]
    out_specs = [
        pl.BlockSpec((nb, 1, th * wo, cout_p), lambda bb, hh: (bb, hh, 0, 0)),
        pl.BlockSpec((1, 1, 2, cout_p), lambda bb, hh: (bb, hh, 0, 0)),
    ]
    args = [x_ph, w_taps]

    if has_sc:
        xs, ws = shortcut
        xs = xs.reshape(b, n_h, th * wo, cs_p)
        in_specs += [
            pl.BlockSpec((nb, 1, th * wo, cs_p), lambda bb, hh: (bb, hh, 0, 0)),
            pl.BlockSpec((cs_p, cout_p), lambda bb, hh: (0, 0)),
        ]
        out_shape += [
            jax.ShapeDtypeStruct((b, n_h, th * wo, cout_p), dtype),
            jax.ShapeDtypeStruct((n_b, n_h, 2, cout_p), jnp.float32),
        ]
        out_specs += [
            pl.BlockSpec((nb, 1, th * wo, cout_p), lambda bb, hh: (bb, hh, 0, 0)),
            pl.BlockSpec((1, 1, 2, cout_p), lambda bb, hh: (bb, hh, 0, 0)),
        ]
        args += [xs, ws]

    flops = 2 * b * ho * wo * 9 * cin_p * cout_p
    if has_sc:
        flops += 2 * b * ho * wo * cs_p * cout_p
    bytes_accessed = sum(int(a.size) * a.dtype.itemsize for a in args)
    bytes_accessed += sum(math.prod(o.shape) * jnp.dtype(o.dtype).itemsize
                          for o in out_shape)

    return pl.pallas_call(
        kernel,
        grid=(n_b, n_h),
        in_specs=in_specs,
        out_specs=tuple(out_specs),
        out_shape=tuple(out_shape),
        scratch_shapes=[pltpu.VMEM((nb * th * wo, cout_p), jnp.float32)],
        compiler_params=pltpu.CompilerParams(
            dimension_semantics=("parallel", "parallel"),
            vmem_limit_bytes=_VMEM_LIMIT_BYTES),
        cost_estimate=pl.CostEstimate(flops=int(flops), transcendentals=0,
                                      bytes_accessed=int(bytes_accessed)),
    )(*args)


# ---------------------------------------------------------------------------
# Kernel B: lane-dense elementwise BN-affine (+ optional residual[-BN]) (+ ReLU)
# ---------------------------------------------------------------------------
def _bn_act_kernel(*refs, has_res, res_affine, relu):
    if has_res and res_affine:
        y_ref, sc_ref, bi_ref, r_ref, rsc_ref, rbi_ref, o_ref = refs
    elif has_res:
        y_ref, sc_ref, bi_ref, r_ref, o_ref = refs
    else:
        y_ref, sc_ref, bi_ref, o_ref = refs
    out = y_ref[...].astype(jnp.float32) * sc_ref[...] + bi_ref[...]
    if has_res:
        r = r_ref[...].astype(jnp.float32)
        if res_affine:
            r = r * rsc_ref[...] + rbi_ref[...]
        out = out + r
    if relu:
        out = jnp.maximum(out, 0.0)
    o_ref[...] = out.astype(o_ref.dtype)


def _bn_act(y, scale, bias, residual=None, res_scale=None, res_bias=None,
            *, relu, out_dtype):
    m, c_p = y.shape
    has_res = residual is not None
    res_affine = res_scale is not None

    bytes_per_row = c_p * y.dtype.itemsize + c_p * jnp.dtype(out_dtype).itemsize
    if has_res:
        bytes_per_row += residual.shape[-1] * residual.dtype.itemsize
    tm = _pick_rows(m, 2 * bytes_per_row, _BN_STEP_BUDGET)

    kernel = functools.partial(_bn_act_kernel, has_res=has_res,
                               res_affine=res_affine, relu=relu)
    in_specs = [
        pl.BlockSpec((tm, c_p), lambda i: (i, 0)),
        pl.BlockSpec((1, c_p), lambda i: (0, 0)),
        pl.BlockSpec((1, c_p), lambda i: (0, 0)),
    ]
    args = [y, scale, bias]
    if has_res:
        in_specs.append(pl.BlockSpec((tm, residual.shape[-1]), lambda i: (i, 0)))
        args.append(residual)
        if res_affine:
            in_specs += [pl.BlockSpec((1, residual.shape[-1]), lambda i: (0, 0)),
                         pl.BlockSpec((1, residual.shape[-1]), lambda i: (0, 0))]
            args += [res_scale, res_bias]

    return pl.pallas_call(
        kernel,
        grid=(m // tm,),
        in_specs=in_specs,
        out_specs=pl.BlockSpec((tm, c_p), lambda i: (i, 0)),
        out_shape=jax.ShapeDtypeStruct((m, c_p), out_dtype),
        compiler_params=pltpu.CompilerParams(
            dimension_semantics=("parallel",),
            vmem_limit_bytes=_VMEM_LIMIT_BYTES),
    )(*args)


# ---------------------------------------------------------------------------
# JAX-side plumbing: phase decomposition, weight reshapes, BN stat folding
# ---------------------------------------------------------------------------
def _phase_decompose(x_pad, s):
    """(B, Hp, Wp, C) padded input -> (B, s*s*Hq, Wq, C) stride-phase layout.

    phase(p, q)[i, j] == x_pad[i*s + p, j*s + q]; flat dim-1 index = (p*s+q)*Hq + i.
    Total size == input size (1x reorganization, no 9x im2col blow-up).
    """
    b, hp, wp, c = x_pad.shape
    ho = (hp - 3) // s + 1
    wo = (wp - 3) // s + 1
    extra = (3 - 1) // s                     # max in-phase offset of a 3-tap window
    hq = ho + extra
    wq = wo + extra
    xp = jnp.pad(x_pad, ((0, 0), (0, max(0, s * hq - hp)),
                         (0, max(0, s * wq - wp)), (0, 0)))
    xp = xp[:, :s * hq, :s * wq, :]
    xp = xp.reshape(b, hq, s, wq, s, c).transpose(0, 2, 4, 1, 3, 5)
    xp = xp.reshape(b, s * s * hq, wq, c)
    return xp, hq, wq, ho, wo


def _w3x3_taps(w_oihw, cin_p, cout_p, dtype):
    cout, cin = w_oihw.shape[0], w_oihw.shape[1]
    wt = jnp.transpose(w_oihw, (2, 3, 1, 0)).reshape(9, cin, cout)
    wt = jnp.pad(wt, ((0, 0), (0, cin_p - cin), (0, cout_p - cout)))
    return wt.astype(dtype)


def _w1x1_mat(w_oi11, cin_p, cout_p, dtype):
    cout, cin = w_oi11.shape[0], w_oi11.shape[1]
    wm = jnp.transpose(w_oi11.reshape(cout, cin), (1, 0))
    wm = jnp.pad(wm, ((0, cin_p - cin), (0, cout_p - cout)))
    return wm.astype(dtype)


def _bn_scale_bias(stats, count, gamma, beta, cout_p):
    # stats: (Bblocks, n_h, 2, Cout_p) per-tile partial [sum, sum-of-squares].
    s = jnp.sum(stats[:, :, 0, :], axis=(0, 1))
    ss = jnp.sum(stats[:, :, 1, :], axis=(0, 1))
    mean = s / count
    var = jnp.maximum(ss / count - mean * mean, 0.0)     # biased, training-mode BN
    inv = jax.lax.rsqrt(var + _EPS)
    g = _pad_last(gamma.astype(jnp.float32), cout_p)
    b = _pad_last(beta.astype(jnp.float32), cout_p)
    scale = (g * inv).reshape(1, cout_p)
    bias = (b - mean * g * inv).reshape(1, cout_p)
    return scale, bias


# ---------------------------------------------------------------------------
# BasicBlock forward (Pallas-backed)
# ---------------------------------------------------------------------------
def basic_block_forward(x_nchw, params, stride, compute_dtype=jnp.bfloat16):
    b, cin, h, w = x_nchw.shape
    cout = params["w1"].shape[0]
    cin_p = _round_up(cin, _LANE)
    cout_p = _round_up(cout, _LANE)

    # NHWC, channel-padded, kept in compute dtype end-to-end (no f32 copy of x).
    x_p = _pad_last(jnp.transpose(x_nchw, (0, 2, 3, 1)), cin_p).astype(compute_dtype)

    # ---- conv1 (3x3, stride, pad=1) + bn1 (batch stats) + relu --------------
    x_pad = jnp.pad(x_p, ((0, 0), (1, 1), (1, 1), (0, 0)))
    x_ph, hq1, wq1, ho, wo = _phase_decompose(x_pad, stride)
    w1t = _w3x3_taps(params["w1"], cin_p, cout_p, compute_dtype)
    y1, st1 = _conv3x3_stats(x_ph, w1t, stride=stride, hq=hq1, wq=wq1,
                             ho=ho, wo=wo, cout_p=cout_p)
    m = b * ho * wo
    sc1, bi1 = _bn_scale_bias(st1, m, params["g1"], params["b1"], cout_p)
    out1 = _bn_act(y1.reshape(m, cout_p), sc1, bi1, relu=True,
                   out_dtype=compute_dtype)

    # ---- conv2 (3x3, s=1, pad=1) [+ fused 1x1 projection shortcut] ----------
    # TODO(synk): fold this pad into the BN1 kernel's out_spec (offset write into a
    # pre-padded buffer) to save one activation HBM round trip.
    out1_pad = jnp.pad(out1.reshape(b, ho, wo, cout_p),
                       ((0, 0), (1, 1), (1, 1), (0, 0)))
    o_ph, hq2, wq2, _, _ = _phase_decompose(out1_pad, 1)
    w2t = _w3x3_taps(params["w2"], cout_p, cout_p, compute_dtype)

    projection = (stride != 1) or (cin != cout)
    if projection:
        xs = x_p[:, ::stride, ::stride, :][:, :ho, :wo, :]
        ws = _w1x1_mat(params["ws"], cin_p, cout_p, compute_dtype)
        y2, st2, ys, sts = _conv3x3_stats(o_ph, w2t, stride=1, hq=hq2, wq=wq2,
                                          ho=ho, wo=wo, cout_p=cout_p,
                                          shortcut=(xs, ws))
        scs, bis = _bn_scale_bias(sts, m, params["gs"], params["bs"], cout_p)
        residual, rsc, rbi = ys.reshape(m, cout_p), scs, bis
    else:
        y2, st2 = _conv3x3_stats(o_ph, w2t, stride=1, hq=hq2, wq=wq2,
                                 ho=ho, wo=wo, cout_p=cout_p)
        residual, rsc, rbi = x_p.reshape(m, cout_p), None, None   # plain add, no affine
    sc2, bi2 = _bn_scale_bias(st2, m, params["g2"], params["b2"], cout_p)

    # ---- bn2 + shortcut add + relu (single fused lane-dense pass) -----------
    out = _bn_act(y2.reshape(m, cout_p), sc2, bi2, residual=residual,
                  res_scale=rsc, res_bias=rbi, relu=True, out_dtype=jnp.float32)
    out = out.reshape(b, ho, wo, cout_p)[:, :, :, :cout]
    return jnp.transpose(out, (0, 3, 1, 2))               # NCHW f32 (drop-in layout)


# ---------------------------------------------------------------------------
# Pure-JAX reference (numerical verification)
# ---------------------------------------------------------------------------
def _ref_conv(x_nhwc, w_oihw, stride, pad):
    w_hwio = jnp.transpose(w_oihw, (2, 3, 1, 0))
    return jax.lax.conv_general_dilated(
        x_nhwc, w_hwio, (stride, stride), [(pad, pad), (pad, pad)],
        dimension_numbers=("NHWC", "HWIO", "NHWC"),
        precision=jax.lax.Precision.HIGHEST)


def _ref_bn(y, g, b):
    mean = jnp.mean(y, axis=(0, 1, 2), keepdims=True)
    var = jnp.mean(jnp.square(y - mean), axis=(0, 1, 2), keepdims=True)
    return (y - mean) * jax.lax.rsqrt(var + _EPS) * g + b


def ref_forward(x_nchw, params, stride):
    x = jnp.transpose(x_nchw, (0, 2, 3, 1)).astype(jnp.float32)
    cin, cout = x.shape[-1], params["w1"].shape[0]
    out = jax.nn.relu(_ref_bn(_ref_conv(x, params["w1"], stride, 1),
                              params["g1"], params["b1"]))
    out = _ref_bn(_ref_conv(out, params["w2"], 1, 1), params["g2"], params["b2"])
    if stride != 1 or cin != cout:
        short = _ref_bn(_ref_conv(x, params["ws"], stride, 0),
                        params["gs"], params["bs"])
    else:
        short = x
    out = jax.nn.relu(out + short)
    return jnp.transpose(out, (0, 3, 1, 2))


# ---------------------------------------------------------------------------
def _make_params(key, cin, cout, projection):
    ks = jax.random.split(key, 9)
    p = {
        "w1": 0.1 * jax.random.normal(ks[0], (cout, cin, 3, 3), jnp.float32),
        "g1": 1.0 + 0.1 * jax.random.normal(ks[1], (cout,), jnp.float32),
        "b1": 0.1 * jax.random.normal(ks[2], (cout,), jnp.float32),
        "w2": 0.1 * jax.random.normal(ks[3], (cout, cout, 3, 3), jnp.float32),
        "g2": 1.0 + 0.1 * jax.random.normal(ks[4], (cout,), jnp.float32),
        "b2": 0.1 * jax.random.normal(ks[5], (cout,), jnp.float32),
    }
    if projection:
        p["ws"] = 0.1 * jax.random.normal(ks[6], (cout, cin, 1, 1), jnp.float32)
        p["gs"] = 1.0 + 0.1 * jax.random.normal(ks[7], (cout,), jnp.float32)
        p["bs"] = 0.1 * jax.random.normal(ks[8], (cout,), jnp.float32)
    return p


if __name__ == "__main__":
    key = jax.random.PRNGKey(0)
    kx, kp1, kp2 = jax.random.split(key, 3)
    x = jax.random.normal(kx, (2, 4, 16, 16), jnp.float32)

    fwd = jax.jit(basic_block_forward, static_argnums=(2, 3))

    # Case 1: projection shortcut (cin != cout, stride=2)
    params_proj = _make_params(kp1, 4, 8, projection=True)
    ref_p = ref_forward(x, params_proj, stride=2)

    out_p32 = jax.block_until_ready(fwd(x, params_proj, 2, jnp.float32))
    assert out_p32.shape == (2, 8, 8, 8)
    assert bool(jnp.all(jnp.isfinite(out_p32)))
    err = float(jnp.max(jnp.abs(out_p32 - ref_p)))
    assert err < 2e-3, f"f32 projection-path max abs err {err}"

    out_pbf = jax.block_until_ready(fwd(x, params_proj, 2, jnp.bfloat16))
    err = float(jnp.max(jnp.abs(out_pbf - ref_p)))
    assert err < 2e-1, f"bf16 projection-path max abs err {err}"

    # Case 2: identity shortcut (cin == cout, stride=1)
    params_id = _make_params(kp2, 4, 4, projection=False)
    ref_i = ref_forward(x, params_id, stride=1)

    out_i32 = jax.block_until_ready(fwd(x, params_id, 1, jnp.float32))
    assert out_i32.shape == (2, 4, 16, 16)
    assert bool(jnp.all(jnp.isfinite(out_i32)))
    err = float(jnp.max(jnp.abs(out_i32 - ref_i)))
    assert err < 2e-3, f"f32 identity-path max abs err {err}"

    out_ibf = jax.block_until_ready(fwd(x, params_id, 1, jnp.bfloat16))
    err = float(jnp.max(jnp.abs(out_ibf - ref_i)))
    assert err < 2e-1, f"bf16 identity-path max abs err {err}"

    print("KERNEL_OK")
</pallas_src>

<mosaic_0001>
module attributes {stable_mosaic.version = 11 : i64} {
  func.func @_conv_taps_kernel(%arg0: i32, %arg1: i32, %arg2: memref<2x36x9x128xf32, #tpu.memory_space<vmem>>, %arg3: memref<9x128x128xf32, #tpu.memory_space<vmem>>, %arg4: memref<2x1x64x128xf32, #tpu.memory_space<vmem>>, %arg5: memref<1x1x2x128xf32, #tpu.memory_space<vmem>>, %arg6: memref<128x128xf32, #tpu.memory_space<vmem>>) attributes {dimension_semantics = [#tpu.dimension_semantics<parallel>, #tpu.dimension_semantics<parallel>], iteration_bounds = array<i64: 1, 1>, scalar_prefetch = 0 : i64, scratch_operands = 1 : i64, tpu.core_type = #tpu.core_type<tc>, window_params = [{transform_indices = @transform_0, window_bounds = array<i64: 2, 36, 9, 128>}, {pipeline_mode = #tpu.pipeline_mode<synchronous>, transform_indices = @transform_1, window_bounds = array<i64: 9, 128, 128>}, {transform_indices = @transform_2, window_bounds = array<i64: 2, 1, 64, 128>}, {transform_indices = @transform_3, window_bounds = array<i64: 1, 1, 2, 128>}]} {
    %c8_i32 = arith.constant 8 : i32
    %0 = arith.muli %arg1, %c8_i32 : i32
    %c0_i32 = arith.constant 0 : i32
    %1 = arith.addi %c0_i32, %0 : i32
    %c0 = arith.constant 0 : index
    %2 = arith.index_cast %1 : i32 to index
    %c0_0 = arith.constant 0 : index
    %c0_1 = arith.constant 0 : index
    %3 = vector.load %arg2[%c0, %2, %c0_0, %c0_1] : memref<2x36x9x128xf32, #tpu.memory_space<vmem>>, vector<2x8x8x128xf32>
    %4 = vector.shape_cast %3 : vector<2x8x8x128xf32> to vector<128x128xf32>
    %c0_2 = arith.constant 0 : index
    %c0_3 = arith.constant 0 : index
    %c0_4 = arith.constant 0 : index
    %5 = vector.load %arg3[%c0_2, %c0_3, %c0_4] : memref<9x128x128xf32, #tpu.memory_space<vmem>>, vector<1x128x128xf32>
    %6 = vector.shape_cast %5 : vector<1x128x128xf32> to vector<128x128xf32>
    %cst = arith.constant dense<0.000000e+00> : vector<128x128xf32>
    %7 = tpu.matmul %4, %6, %cst {dimension_numbers = #tpu.dot_dimension_numbers<[1], [0], [0], [1], [0, 0, 1, 1], [], []>} : vector<128x128xf32>, vector<128x128xf32>, vector<128x128xf32> -> vector<128x128xf32>
    %c0_5 = arith.constant 0 : index
    %c0_6 = arith.constant 0 : index
    %8 = vector.load %arg6[%c0_5, %c0_6] : memref<128x128xf32, #tpu.memory_space<vmem>>, vector<128x128xf32>
    tpu.vector_store %arg6[%c0_5, %c0_6], %7 {strides = array<i32>} : memref<128x128xf32, #tpu.memory_space<vmem>>, vector<128x128xf32>,
    %c9_i32 = arith.constant 9 : i32
    %9 = arith.addi %c9_i32, %0 : i32
    %c0_7 = arith.constant 0 : index
    %10 = arith.index_cast %9 : i32 to index
    %c0_8 = arith.constant 0 : index
    %c0_9 = arith.constant 0 : index
    %11 = vector.load %arg2[%c0_7, %10, %c0_8, %c0_9] : memref<2x36x9x128xf32, #tpu.memory_space<vmem>>, vector<2x8x8x128xf32>
    %12 = vector.shape_cast %11 : vector<2x8x8x128xf32> to vector<128x128xf32>
    %c1 = arith.constant 1 : index
    %c0_10 = arith.constant 0 : index
    %c0_11 = arith.constant 0 : index
    %13 = vector.load %arg3[%c1, %c0_10, %c0_11] : memref<9x128x128xf32, #tpu.memory_space<vmem>>, vector<1x128x128xf32>
    %14 = vector.shape_cast %13 : vector<1x128x128xf32> to vector<128x128xf32>
    %cst_12 = arith.constant dense<0.000000e+00> : vector<128x128xf32>
    %15 = tpu.matmul %12, %14, %cst_12 {dimension_numbers = #tpu.dot_dimension_numbers<[1], [0], [0], [1], [0, 0, 1, 1], [], []>} : vector<128x128xf32>, vector<128x128xf32>, vector<128x128xf32> -> vector<128x128xf32>
    %c0_13 = arith.constant 0 : index
    %c0_14 = arith.constant 0 : index
    %16 = vector.load %arg6[%c0_13, %c0_14] : memref<128x128xf32, #tpu.memory_space<vmem>>, vector<128x128xf32>
    %17 = arith.addf %16, %15 : vector<128x128xf32>
    %c0_15 = arith.constant 0 : index
    %c0_16 = arith.constant 0 : index
    %18 = vector.load %arg6[%c0_15, %c0_16] : memref<128x128xf32, #tpu.memory_space<vmem>>, vector<128x128xf32>
    tpu.vector_store %arg6[%c0_15, %c0_16], %17 {strides = array<i32>} : memref<128x128xf32, #tpu.memory_space<vmem>>, vector<128x128xf32>,
    %c0_i32_17 = arith.constant 0 : i32
    %19 = arith.addi %c0_i32_17, %0 : i32
    %c0_18 = arith.constant 0 : index
    %20 = arith.index_cast %19 : i32 to index
    %c1_19 = arith.constant 1 : index
    %c0_20 = arith.constant 0 : index
    %21 = vector.load %arg2[%c0_18, %20, %c1_19, %c0_20] : memref<2x36x9x128xf32, #tpu.memory_space<vmem>>, vector<2x8x8x128xf32>
    %22 = vector.shape_cast %21 : vector<2x8x8x128xf32> to vector<128x128xf32>
    %c2 = arith.constant 2 : index
    %c0_21 = arith.constant 0 : index
    %c0_22 = arith.constant 0 : index
    %23 = vector.load %arg3[%c2, %c0_21, %c0_22] : memref<9x128x128xf32, #tpu.memory_space<vmem>>, vector<1x128x128xf32>
    %24 = vector.shape_cast %23 : vector<1x128x128xf32> to vector<128x128xf32>
    %cst_23 = arith.constant dense<0.000000e+00> : vector<128x128xf32>
    %25 = tpu.matmul %22, %24, %cst_23 {dimension_numbers = #tpu.dot_dimension_numbers<[1], [0], [0], [1], [0, 0, 1, 1], [], []>} : vector<128x128xf32>, vector<128x128xf32>, vector<128x128xf32> -> vector<128x128xf32>
    %c0_24 = arith.constant 0 : index
    %c0_25 = arith.constant 0 : index
    %26 = vector.load %arg6[%c0_24, %c0_25] : memref<128x128xf32, #tpu.memory_space<vmem>>, vector<128x128xf32>
    %27 = arith.addf %26, %25 : vector<128x128xf32>
    %c0_26 = arith.constant 0 : index
    %c0_27 = arith.constant 0 : index
    %28 = vector.load %arg6[%c0_26, %c0_27] : memref<128x128xf32, #tpu.memory_space<vmem>>, vector<128x128xf32>
    tpu.vector_store %arg6[%c0_26, %c0_27], %27 {strides = array<i32>} : memref<128x128xf32, #tpu.memory_space<vmem>>, vector<128x128xf32>,
    %c18_i32 = arith.constant 18 : i32
    %29 = arith.addi %c18_i32, %0 : i32
    %c0_28 = arith.constant 0 : index
    %30 = arith.index_cast %29 : i32 to index
    %c0_29 = arith.constant 0 : index
    %c0_30 = arith.constant 0 : index
    %31 = vector.load %arg2[%c0_28, %30, %c0_29, %c0_30] : memref<2x36x9x128xf32, #tpu.memory_space<vmem>>, vector<2x8x8x128xf32>
    %32 = vector.shape_cast %31 : vector<2x8x8x128xf32> to vector<128x128xf32>
    %c3 = arith.constant 3 : index
    %c0_31 = arith.constant 0 : index
    %c0_32 = arith.constant 0 : index
    %33 = vector.load %arg3[%c3, %c0_31, %c0_32] : memref<9x128x128xf32, #tpu.memory_space<vmem>>, vector<1x128x128xf32>
    %34 = vector.shape_cast %33 : vector<1x128x128xf32> to vector<128x128xf32>
    %cst_33 = arith.constant dense<0.000000e+00> : vector<128x128xf32>
    %35 = tpu.matmul %32, %34, %cst_33 {dimension_numbers = #tpu.dot_dimension_numbers<[1], [0], [0], [1], [0, 0, 1, 1], [], []>} : vector<128x128xf32>, vector<128x128xf32>, vector<128x128xf32> -> vector<128x128xf32>
    %c0_34 = arith.constant 0 : index
    %c0_35 = arith.constant 0 : index
    %36 = vector.load %arg6[%c0_34, %c0_35] : memref<128x128xf32, #tpu.memory_space<vmem>>, vector<128x128xf32>
    %37 = arith.addf %36, %35 : vector<128x128xf32>
    %c0_36 = arith.constant 0 : index
    %c0_37 = arith.constant 0 : index
    %38 = vector.load %arg6[%c0_36, %c0_37] : memref<128x128xf32, #tpu.memory_space<vmem>>, vector<128x128xf32>
    tpu.vector_store %arg6[%c0_36, %c0_37], %37 {strides = array<i32>} : memref<128x128xf32, #tpu.memory_space<vmem>>, vector<128x128xf32>,
    %c27_i32 = arith.constant 27 : i32
    %39 = arith.addi %c27_i32, %0 : i32
    %c0_38 = arith.constant 0 : index
    %40 = arith.index_cast %39 : i32 to index
    %c0_39 = arith.constant 0 : index
    %c0_40 = arith.constant 0 : index
    %41 = vector.load %arg2[%c0_38, %40, %c0_39, %c0_40] : memref<2x36x9x128xf32, #tpu.memory_space<vmem>>, vector<2x8x8x128xf32>
    %42 = vector.shape_cast %41 : vector<2x8x8x128xf32> to vector<128x128xf32>
    %c4 = arith.constant 4 : index
    %c0_41 = arith.constant 0 : index
    %c0_42 = arith.constant 0 : index
    %43 = vector.load %arg3[%c4, %c0_41, %c0_42] : memref<9x128x128xf32, #tpu.memory_space<vmem>>, vector<1x128x128xf32>
    %44 = vector.shape_cast %43 : vector<1x128x128xf32> to vector<128x128xf32>
    %cst_43 = arith.constant dense<0.000000e+00> : vector<128x128xf32>
    %45 = tpu.matmul %42, %44, %cst_43 {dimension_numbers = #tpu.dot_dimension_numbers<[1], [0], [0], [1], [0, 0, 1, 1], [], []>} : vector<128x128xf32>, vector<128x128xf32>, vector<128x128xf32> -> vector<128x128xf32>
    %c0_44 = arith.constant 0 : index
    %c0_45 = arith.constant 0 : index
    %46 = vector.load %arg6[%c0_44, %c0_45] : memref<128x128xf32, #tpu.memory_space<vmem>>, vector<128x128xf32>
    %47 = arith.addf %46, %45 : vector<128x128xf32>
    %c0_46 = arith.constant 0 : index
    %c0_47 = arith.constant 0 : index
    %48 = vector.load %arg6[%c0_46, %c0_47] : memref<128x128xf32, #tpu.memory_space<vmem>>, vector<128x128xf32>
    tpu.vector_store %arg6[%c0_46, %c0_47], %47 {strides = array<i32>} : memref<128x128xf32, #tpu.memory_space<vmem>>, vector<128x128xf32>,
    %c18_i32_48 = arith.constant 18 : i32
    %49 = arith.addi %c18_i32_48, %0 : i32
    %c0_49 = arith.constant 0 : index
    %50 = arith.index_cast %49 : i32 to index
    %c1_50 = arith.constant 1 : index
    %c0_51 = arith.constant 0 : index
    %51 = vector.load %arg2[%c0_49, %50, %c1_50, %c0_51] : memref<2x36x9x128xf32, #tpu.memory_space<vmem>>, vector<2x8x8x128xf32>
    %52 = vector.shape_cast %51 : vector<2x8x8x128xf32> to vector<128x128xf32>
    %c5 = arith.constant 5 : index
    %c0_52 = arith.constant 0 : index
    %c0_53 = arith.constant 0 : index
    %53 = vector.load %arg3[%c5, %c0_52, %c0_53] : memref<9x128x128xf32, #tpu.memory_space<vmem>>, vector<1x128x128xf32>
    %54 = vector.shape_cast %53 : vector<1x128x128xf32> to vector<128x128xf32>
    %cst_54 = arith.constant dense<0.000000e+00> : vector<128x128xf32>
    %55 = tpu.matmul %52, %54, %cst_54 {dimension_numbers = #tpu.dot_dimension_numbers<[1], [0], [0], [1], [0, 0, 1, 1], [], []>} : vector<128x128xf32>, vector<128x128xf32>, vector<128x128xf32> -> vector<128x128xf32>
    %c0_55 = arith.constant 0 : index
    %c0_56 = arith.constant 0 : index
    %56 = vector.load %arg6[%c0_55, %c0_56] : memref<128x128xf32, #tpu.memory_space<vmem>>, vector<128x128xf32>
    %57 = arith.addf %56, %55 : vector<128x128xf32>
    %c0_57 = arith.constant 0 : index
    %c0_58 = arith.constant 0 : index
    %58 = vector.load %arg6[%c0_57, %c0_58] : memref<128x128xf32, #tpu.memory_space<vmem>>, vector<128x128xf32>
    tpu.vector_store %arg6[%c0_57, %c0_58], %57 {strides = array<i32>} : memref<128x128xf32, #tpu.memory_space<vmem>>, vector<128x128xf32>,
    %c1_i32 = arith.constant 1 : i32
    %59 = arith.addi %c1_i32, %0 : i32
    %c0_59 = arith.constant 0 : index
    %60 = arith.index_cast %59 : i32 to index
    %c0_60 = arith.constant 0 : index
    %c0_61 = arith.constant 0 : index
    %61 = vector.load %arg2[%c0_59, %60, %c0_60, %c0_61] : memref<2x36x9x128xf32, #tpu.memory_space<vmem>>, vector<2x8x8x128xf32>
    %62 = vector.shape_cast %61 : vector<2x8x8x128xf32> to vector<128x128xf32>
    %c6 = arith.constant 6 : index
    %c0_62 = arith.constant 0 : index
    %c0_63 = arith.constant 0 : index
    %63 = vector.load %arg3[%c6, %c0_62, %c0_63] : memref<9x128x128xf32, #tpu.memory_space<vmem>>, vector<1x128x128xf32>
    %64 = vector.shape_cast %63 : vector<1x128x128xf32> to vector<128x128xf32>
    %cst_64 = arith.constant dense<0.000000e+00> : vector<128x128xf32>
    %65 = tpu.matmul %62, %64, %cst_64 {dimension_numbers = #tpu.dot_dimension_numbers<[1], [0], [0], [1], [0, 0, 1, 1], [], []>} : vector<128x128xf32>, vector<128x128xf32>, vector<128x128xf32> -> vector<128x128xf32>
    %c0_65 = arith.constant 0 : index
    %c0_66 = arith.constant 0 : index
    %66 = vector.load %arg6[%c0_65, %c0_66] : memref<128x128xf32, #tpu.memory_space<vmem>>, vector<128x128xf32>
    %67 = arith.addf %66, %65 : vector<128x128xf32>
    %c0_67 = arith.constant 0 : index
    %c0_68 = arith.constant 0 : index
    %68 = vector.load %arg6[%c0_67, %c0_68] : memref<128x128xf32, #tpu.memory_space<vmem>>, vector<128x128xf32>
    tpu.vector_store %arg6[%c0_67, %c0_68], %67 {strides = array<i32>} : memref<128x128xf32, #tpu.memory_space<vmem>>, vector<128x128xf32>,
    %c10_i32 = arith.constant 10 : i32
    %69 = arith.addi %c10_i32, %0 : i32
    %c0_69 = arith.constant 0 : index
    %70 = arith.index_cast %69 : i32 to index
    %c0_70 = arith.constant 0 : index
    %c0_71 = arith.constant 0 : index
    %71 = vector.load %arg2[%c0_69, %70, %c0_70, %c0_71] : memref<2x36x9x128xf32, #tpu.memory_space<vmem>>, vector<2x8x8x128xf32>
    %72 = vector.shape_cast %71 : vector<2x8x8x128xf32> to vector<128x128xf32>
    %c7 = arith.constant 7 : index
    %c0_72 = arith.constant 0 : index
    %c0_73 = arith.constant 0 : index
    %73 = vector.load %arg3[%c7, %c0_72, %c0_73] : memref<9x128x128xf32, #tpu.memory_space<vmem>>, vector<1x128x128xf32>
    %74 = vector.shape_cast %73 : vector<1x128x128xf32> to vector<128x128xf32>
    %cst_74 = arith.constant dense<0.000000e+00> : vector<128x128xf32>
    %75 = tpu.matmul %72, %74, %cst_74 {dimension_numbers = #tpu.dot_dimension_numbers<[1], [0], [0], [1], [0, 0, 1, 1], [], []>} : vector<128x128xf32>, vector<128x128xf32>, vector<128x128xf32> -> vector<128x128xf32>
    %c0_75 = arith.constant 0 : index
    %c0_76 = arith.constant 0 : index
    %76 = vector.load %arg6[%c0_75, %c0_76] : memref<128x128xf32, #tpu.memory_space<vmem>>, vector<128x128xf32>
    %77 = arith.addf %76, %75 : vector<128x128xf32>
    %c0_77 = arith.constant 0 : index
    %c0_78 = arith.constant 0 : index
    %78 = vector.load %arg6[%c0_77, %c0_78] : memref<128x128xf32, #tpu.memory_space<vmem>>, vector<128x128xf32>
    tpu.vector_store %arg6[%c0_77, %c0_78], %77 {strides = array<i32>} : memref<128x128xf32, #tpu.memory_space<vmem>>, vector<128x128xf32>,
    %c1_i32_79 = arith.constant 1 : i32
    %79 = arith.addi %c1_i32_79, %0 : i32
    %c0_80 = arith.constant 0 : index
    %80 = arith.index_cast %79 : i32 to index
    %c1_81 = arith.constant 1 : index
    %c0_82 = arith.constant 0 : index
    %81 = vector.load %arg2[%c0_80, %80, %c1_81, %c0_82] : memref<2x36x9x128xf32, #tpu.memory_space<vmem>>, vector<2x8x8x128xf32>
    %82 = vector.shape_cast %81 : vector<2x8x8x128xf32> to vector<128x128xf32>
    %c8 = arith.constant 8 : index
    %c0_83 = arith.constant 0 : index
    %c0_84 = arith.constant 0 : index
    %83 = vector.load %arg3[%c8, %c0_83, %c0_84] : memref<9x128x128xf32, #tpu.memory_space<vmem>>, vector<1x128x128xf32>
    %84 = vector.shape_cast %83 : vector<1x128x128xf32> to vector<128x128xf32>
    %cst_85 = arith.constant dense<0.000000e+00> : vector<128x128xf32>
    %85 = tpu.matmul %82, %84, %cst_85 {dimension_numbers = #tpu.dot_dimension_numbers<[1], [0], [0], [1], [0, 0, 1, 1], [], []>} : vector<128x128xf32>, vector<128x128xf32>, vector<128x128xf32> -> vector<128x128xf32>
    %c0_86 = arith.constant 0 : index
    %c0_87 = arith.constant 0 : index
    %86 = vector.load %arg6[%c0_86, %c0_87] : memref<128x128xf32, #tpu.memory_space<vmem>>, vector<128x128xf32>
    %87 = arith.addf %86, %85 : vector<128x128xf32>
    %c0_88 = arith.constant 0 : index
    %c0_89 = arith.constant 0 : index
    %88 = vector.load %arg6[%c0_88, %c0_89] : memref<128x128xf32, #tpu.memory_space<vmem>>, vector<128x128xf32>
    tpu.vector_store %arg6[%c0_88, %c0_89], %87 {strides = array<i32>} : memref<128x128xf32, #tpu.memory_space<vmem>>, vector<128x128xf32>,
    %c0_90 = arith.constant 0 : index
    %c0_91 = arith.constant 0 : index
    %89 = vector.load %arg6[%c0_90, %c0_91] : memref<128x128xf32, #tpu.memory_space<vmem>>, vector<128x128xf32>
    %90 = vector.shape_cast %89 : vector<128x128xf32> to vector<2x1x64x128xf32>
    %c0_92 = arith.constant 0 : index
    %c0_93 = arith.constant 0 : index
    %c0_94 = arith.constant 0 : index
    %c0_95 = arith.constant 0 : index
    %91 = vector.load %arg4[%c0_92, %c0_93, %c0_94, %c0_95] : memref<2x1x64x128xf32, #tpu.memory_space<vmem>>, vector<2x1x64x128xf32>
    tpu.vector_store %arg4[%c0_92, %c0_93, %c0_94, %c0_95], %90 {strides = array<i32>} : memref<2x1x64x128xf32, #tpu.memory_space<vmem>>, vector<2x1x64x128xf32>,
    %cst_96 = arith.constant dense<0.000000e+00> : vector<128xf32>
    %92 = vector.multi_reduction <add>, %89, %cst_96 [0] : vector<128x128xf32> to vector<128xf32>
    %93 = vector.shape_cast %92 : vector<128xf32> to vector<1x128xf32>
    %94 = arith.mulf %89, %89 : vector<128x128xf32>
    %cst_97 = arith.constant dense<0.000000e+00> : vector<128xf32>
    %95 = vector.multi_reduction <add>, %94, %cst_97 [0] : vector<128x128xf32> to vector<128xf32>
    %96 = vector.shape_cast %95 : vector<128xf32> to vector<1x128xf32>
    %97 = tpu.concatenate %93, %96 in 0 : vector<1x128xf32>, vector<1x128xf32> -> vector<2x128xf32>
    %98 = vector.shape_cast %97 : vector<2x128xf32> to vector<1x1x2x128xf32>
    %c0_98 = arith.constant 0 : index
    %c0_99 = arith.constant 0 : index
    %c0_100 = arith.constant 0 : index
    %c0_101 = arith.constant 0 : index
    %99 = vector.load %arg5[%c0_98, %c0_99, %c0_100, %c0_101] : memref<1x1x2x128xf32, #tpu.memory_space<vmem>>, vector<1x1x2x128xf32>
    tpu.vector_store %arg5[%c0_98, %c0_99, %c0_100, %c0_101], %98 {strides = array<i32>} : memref<1x1x2x128xf32, #tpu.memory_space<vmem>>, vector<1x1x2x128xf32>,
    return
  }
  func.func @transform_0(%arg0: i32, %arg1: i32) -> (i32, i32, i32, i32) {
    %c0_i32 = arith.constant 0 : i32
    %c0_i32_0 = arith.constant 0 : i32
    %c0_i32_1 = arith.constant 0 : i32
    %c0_i32_2 = arith.constant 0 : i32
    return %arg0, %c0_i32, %c0_i32_0, %c0_i32_1 : i32, i32, i32, i32
  }
  func.func @transform_1(%arg0: i32, %arg1: i32) -> (i32, i32, i32) {
    %c0_i32 = arith.constant 0 : i32
    %c0_i32_0 = arith.constant 0 : i32
    %c0_i32_1 = arith.constant 0 : i32
    %c0_i32_2 = arith.constant 0 : i32
    return %c0_i32, %c0_i32_0, %c0_i32_1 : i32, i32, i32
  }
  func.func @transform_2(%arg0: i32, %arg1: i32) -> (i32, i32, i32, i32) {
    %c0_i32 = arith.constant 0 : i32
    %c0_i32_0 = arith.constant 0 : i32
    %c0_i32_1 = arith.constant 0 : i32
    return %arg0, %arg1, %c0_i32, %c0_i32_0 : i32, i32, i32, i32
  }
  func.func @transform_3(%arg0: i32, %arg1: i32) -> (i32, i32, i32, i32) {
    %c0_i32 = arith.constant 0 : i32
    %c0_i32_0 = arith.constant 0 : i32
    %c0_i32_1 = arith.constant 0 : i32
    return %arg0, %arg1, %c0_i32, %c0_i32_0 : i32, i32, i32, i32
  }
}

module attributes {stable_mosaic.version = 11 : i64} {
  func.func @_bn_act_kernel(%arg0: i32, %arg1: memref<128x128xf32, #tpu.memory_space<vmem>>, %arg2: memref<1x128xf32, #tpu.memory_space<vmem>>, %arg3: memref<1x128xf32, #tpu.memory_space<vmem>>, %arg4: memref<128x128xf32, #tpu.memory_space<vmem>>) attributes {dimension_semantics = [#tpu.dimension_semantics<parallel>], iteration_bounds = array<i64: 1>, scalar_prefetch = 0 : i64, scratch_operands = 0 : i64, tpu.core_type = #tpu.core_type<tc>, window_params = [{transform_indices = @transform_0, window_bounds = array<i64: 128, 128>}, {pipeline_mode = #tpu.pipeline_mode<synchronous>, transform_indices = @transform_1, window_bounds = array<i64: 1, 128>}, {pipeline_mode = #tpu.pipeline_mode<synchronous>, transform_indices = @transform_2, window_bounds = array<i64: 1, 128>}, {transform_indices = @transform_3, window_bounds = array<i64: 128, 128>}]} {
    %c0 = arith.constant 0 : index
    %c0_0 = arith.constant 0 : index
    %0 = vector.load %arg1[%c0, %c0_0] : memref<128x128xf32, #tpu.memory_space<vmem>>, vector<128x128xf32>
    %c0_1 = arith.constant 0 : index
    %c0_2 = arith.constant 0 : index
    %1 = vector.load %arg2[%c0_1, %c0_2] : memref<1x128xf32, #tpu.memory_space<vmem>>, vector<1x128xf32>
    %2 = vector.broadcast %1 : vector<1x128xf32> to vector<128x128xf32>
    %3 = arith.mulf %0, %2 : vector<128x128xf32>
    %c0_3 = arith.constant 0 : index
    %c0_4 = arith.constant 0 : index
    %4 = vector.load %arg3[%c0_3, %c0_4] : memref<1x128xf32, #tpu.memory_space<vmem>>, vector<1x128xf32>
    %5 = vector.broadcast %4 : vector<1x128xf32> to vector<128x128xf32>
    %6 = arith.addf %3, %5 : vector<128x128xf32>
    %cst = arith.constant 0.000000e+00 : f32
    %7 = vector.broadcast %cst : f32 to vector<128x128xf32>
    %8 = arith.maximumf %6, %7 : vector<128x128xf32>
    %c0_5 = arith.constant 0 : index
    %c0_6 = arith.constant 0 : index
    %9 = vector.load %arg4[%c0_5, %c0_6] : memref<128x128xf32, #tpu.memory_space<vmem>>, vector<128x128xf32>
    tpu.vector_store %arg4[%c0_5, %c0_6], %8 {strides = array<i32>} : memref<128x128xf32, #tpu.memory_space<vmem>>, vector<128x128xf32>,
    return
  }
  func.func @transform_0(%arg0: i32) -> (i32, i32) {
    %c0_i32 = arith.constant 0 : i32
    %c0_i32_0 = arith.constant 0 : i32
    return %arg0, %c0_i32 : i32, i32
  }
  func.func @transform_1(%arg0: i32) -> (i32, i32) {
    %c0_i32 = arith.constant 0 : i32
    %c0_i32_0 = arith.constant 0 : i32
    %c0_i32_1 = arith.constant 0 : i32
    return %c0_i32, %c0_i32_0 : i32, i32
  }
  func.func @transform_2(%arg0: i32) -> (i32, i32) {
    %c0_i32 = arith.constant 0 : i32
    %c0_i32_0 = arith.constant 0 : i32
    %c0_i32_1 = arith.constant 0 : i32
    return %c0_i32, %c0_i32_0 : i32, i32
  }
  func.func @transform_3(%arg0: i32) -> (i32, i32) {
    %c0_i32 = arith.constant 0 : i32
    %c0_i32_0 = arith.constant 0 : i32
    return %arg0, %c0_i32 : i32, i32
  }
}

module attributes {stable_mosaic.version = 11 : i64} {
  func.func @_bn_act_kernel(%arg0: i32, %arg1: memref<128x128xf32, #tpu.memory_space<vmem>>, %arg2: memref<1x128xf32, #tpu.memory_space<vmem>>, %arg3: memref<1x128xf32, #tpu.memory_space<vmem>>, %arg4: memref<128x128xf32, #tpu.memory_space<vmem>>, %arg5: memref<1x128xf32, #tpu.memory_space<vmem>>, %arg6: memref<1x128xf32, #tpu.memory_space<vmem>>, %arg7: memref<128x128xf32, #tpu.memory_space<vmem>>) attributes {dimension_semantics = [#tpu.dimension_semantics<parallel>], iteration_bounds = array<i64: 1>, scalar_prefetch = 0 : i64, scratch_operands = 0 : i64, tpu.core_type = #tpu.core_type<tc>, window_params = [{transform_indices = @transform_0, window_bounds = array<i64: 128, 128>}, {pipeline_mode = #tpu.pipeline_mode<synchronous>, transform_indices = @transform_1, window_bounds = array<i64: 1, 128>}, {pipeline_mode = #tpu.pipeline_mode<synchronous>, transform_indices = @transform_2, window_bounds = array<i64: 1, 128>}, {transform_indices = @transform_3, window_bounds = array<i64: 128, 128>}, {pipeline_mode = #tpu.pipeline_mode<synchronous>, transform_indices = @transform_4, window_bounds = array<i64: 1, 128>}, {pipeline_mode = #tpu.pipeline_mode<synchronous>, transform_indices = @transform_5, window_bounds = array<i64: 1, 128>}, {transform_indices = @transform_6, window_bounds = array<i64: 128, 128>}]} {
    %c0 = arith.constant 0 : index
    %c0_0 = arith.constant 0 : index
    %0 = vector.load %arg1[%c0, %c0_0] : memref<128x128xf32, #tpu.memory_space<vmem>>, vector<128x128xf32>
    %c0_1 = arith.constant 0 : index
    %c0_2 = arith.constant 0 : index
    %1 = vector.load %arg2[%c0_1, %c0_2] : memref<1x128xf32, #tpu.memory_space<vmem>>, vector<1x128xf32>
    %2 = vector.broadcast %1 : vector<1x128xf32> to vector<128x128xf32>
    %3 = arith.mulf %0, %2 : vector<128x128xf32>
    %c0_3 = arith.constant 0 : index
    %c0_4 = arith.constant 0 : index
    %4 = vector.load %arg3[%c0_3, %c0_4] : memref<1x128xf32, #tpu.memory_space<vmem>>, vector<1x128xf32>
    %5 = vector.broadcast %4 : vector<1x128xf32> to vector<128x128xf32>
    %6 = arith.addf %3, %5 : vector<128x128xf32>
    %c0_5 = arith.constant 0 : index
    %c0_6 = arith.constant 0 : index
    %7 = vector.load %arg4[%c0_5, %c0_6] : memref<128x128xf32, #tpu.memory_space<vmem>>, vector<128x128xf32>
    %c0_7 = arith.constant 0 : index
    %c0_8 = arith.constant 0 : index
    %8 = vector.load %arg5[%c0_7, %c0_8] : memref<1x128xf32, #tpu.memory_space<vmem>>, vector<1x128xf32>
    %9 = vector.broadcast %8 : vector<1x128xf32> to vector<128x128xf32>
    %10 = arith.mulf %7, %9 : vector<128x128xf32>
    %c0_9 = arith.constant 0 : index
    %c0_10 = arith.constant 0 : index
    %11 = vector.load %arg6[%c0_9, %c0_10] : memref<1x128xf32, #tpu.memory_space<vmem>>, vector<1x128xf32>
    %12 = vector.broadcast %11 : vector<1x128xf32> to vector<128x128xf32>
    %13 = arith.addf %10, %12 : vector<128x128xf32>
    %14 = arith.addf %6, %13 : vector<128x128xf32>
    %cst = arith.constant 0.000000e+00 : f32
    %15 = vector.broadcast %cst : f32 to vector<128x128xf32>
    %16 = arith.maximumf %14, %15 : vector<128x128xf32>
    %c0_11 = arith.constant 0 : index
    %c0_12 = arith.constant 0 : index
    %17 = vector.load %arg7[%c0_11, %c0_12] : memref<128x128xf32, #tpu.memory_space<vmem>>, vector<128x128xf32>
    tpu.vector_store %arg7[%c0_11, %c0_12], %16 {strides = array<i32>} : memref<128x128xf32, #tpu.memory_space<vmem>>, vector<128x128xf32>,
    return
  }
  func.func @transform_0(%arg0: i32) -> (i32, i32) {
    %c0_i32 = arith.constant 0 : i32
    %c0_i32_0 = arith.constant 0 : i32
    return %arg0, %c0_i32 : i32, i32
  }
  func.func @transform_1(%arg0: i32) -> (i32, i32) {
    %c0_i32 = arith.constant 0 : i32
    %c0_i32_0 = arith.constant 0 : i32
    %c0_i32_1 = arith.constant 0 : i32
    return %c0_i32, %c0_i32_0 : i32, i32
  }
  func.func @transform_2(%arg0: i32) -> (i32, i32) {
    %c0_i32 = arith.constant 0 : i32
    %c0_i32_0 = arith.constant 0 : i32
    %c0_i32_1 = arith.constant 0 : i32
    return %c0_i32, %c0_i32_0 : i32, i32
  }
  func.func @transform_3(%arg0: i32) -> (i32, i32) {
    %c0_i32 = arith.constant 0 : i32
    %c0_i32_0 = arith.constant 0 : i32
    return %arg0, %c0_i32 : i32, i32
  }
  func.func @transform_4(%arg0: i32) -> (i32, i32) {
    %c0_i32 = arith.constant 0 : i32
    %c0_i32_0 = arith.constant 0 : i32
    %c0_i32_1 = arith.constant 0 : i32
    return %c0_i32, %c0_i32_0 : i32, i32
  }
  func.func @transform_5(%arg0: i32) -> (i32, i32) {
    %c0_i32 = arith.constant 0 : i32
    %c0_i32_0 = arith.constant 0 : i32
    %c0_i32_1 = arith.constant 0 : i32
    return %c0_i32, %c0_i32_0 : i32, i32
  }
  func.func @transform_6(%arg0: i32) -> (i32, i32) {
    %c0_i32 = arith.constant 0 : i32
    %c0_i32_0 = arith.constant 0 : i32
    return %arg0, %c0_i32 : i32, i32
  }
}

module attributes {stable_mosaic.version = 11 : i64} {
  func.func @_conv_taps_kernel(%arg0: i32, %arg1: i32, %arg2: memref<2x10x10x128xf32, #tpu.memory_space<vmem>>, %arg3: memref<9x128x128xf32, #tpu.memory_space<vmem>>, %arg4: memref<2x1x64x128xf32, #tpu.memory_space<vmem>>, %arg5: memref<128x128xf32, #tpu.memory_space<vmem>>, %arg6: memref<2x1x64x128xf32, #tpu.memory_space<vmem>>, %arg7: memref<1x1x2x128xf32, #tpu.memory_space<vmem>>, %arg8: memref<2x1x64x128xf32, #tpu.memory_space<vmem>>, %arg9: memref<1x1x2x128xf32, #tpu.memory_space<vmem>>, %arg10: memref<128x128xf32, #tpu.memory_space<vmem>>) attributes {dimension_semantics = [#tpu.dimension_semantics<parallel>, #tpu.dimension_semantics<parallel>], iteration_bounds = array<i64: 1, 1>, scalar_prefetch = 0 : i64, scratch_operands = 1 : i64, tpu.core_type = #tpu.core_type<tc>, window_params = [{transform_indices = @transform_0, window_bounds = array<i64: 2, 10, 10, 128>}, {pipeline_mode = #tpu.pipeline_mode<synchronous>, transform_indices = @transform_1, window_bounds = array<i64: 9, 128, 128>}, {transform_indices = @transform_2, window_bounds = array<i64: 2, 1, 64, 128>}, {pipeline_mode = #tpu.pipeline_mode<synchronous>, transform_indices = @transform_3, window_bounds = array<i64: 128, 128>}, {transform_indices = @transform_4, window_bounds = array<i64: 2, 1, 64, 128>}, {transform_indices = @transform_5, window_bounds = array<i64: 1, 1, 2, 128>}, {transform_indices = @transform_6, window_bounds = array<i64: 2, 1, 64, 128>}, {transform_indices = @transform_7, window_bounds = array<i64: 1, 1, 2, 128>}]} {
    %c8_i32 = arith.constant 8 : i32
    %0 = arith.muli %arg1, %c8_i32 : i32
    %c0_i32 = arith.constant 0 : i32
    %1 = arith.addi %c0_i32, %0 : i32
    %c0 = arith.constant 0 : index
    %2 = arith.index_cast %1 : i32 to index
    %c0_0 = arith.constant 0 : index
    %c0_1 = arith.constant 0 : index
    %3 = vector.load %arg2[%c0, %2, %c0_0, %c0_1] : memref<2x10x10x128xf32, #tpu.memory_space<vmem>>, vector<2x8x8x128xf32>
    %4 = vector.shape_cast %3 : vector<2x8x8x128xf32> to vector<128x128xf32>
    %c0_2 = arith.constant 0 : index
    %c0_3 = arith.constant 0 : index
    %c0_4 = arith.constant 0 : index
    %5 = vector.load %arg3[%c0_2, %c0_3, %c0_4] : memref<9x128x128xf32, #tpu.memory_space<vmem>>, vector<1x128x128xf32>
    %6 = vector.shape_cast %5 : vector<1x128x128xf32> to vector<128x128xf32>
    %cst = arith.constant dense<0.000000e+00> : vector<128x128xf32>
    %7 = tpu.matmul %4, %6, %cst {dimension_numbers = #tpu.dot_dimension_numbers<[1], [0], [0], [1], [0, 0, 1, 1], [], []>} : vector<128x128xf32>, vector<128x128xf32>, vector<128x128xf32> -> vector<128x128xf32>
    %c0_5 = arith.constant 0 : index
    %c0_6 = arith.constant 0 : index
    %8 = vector.load %arg10[%c0_5, %c0_6] : memref<128x128xf32, #tpu.memory_space<vmem>>, vector<128x128xf32>
    tpu.vector_store %arg10[%c0_5, %c0_6], %7 {strides = array<i32>} : memref<128x128xf32, #tpu.memory_space<vmem>>, vector<128x128xf32>,
    %c0_i32_7 = arith.constant 0 : i32
    %9 = arith.addi %c0_i32_7, %0 : i32
    %c0_8 = arith.constant 0 : index
    %10 = arith.index_cast %9 : i32 to index
    %c1 = arith.constant 1 : index
    %c0_9 = arith.constant 0 : index
    %11 = vector.load %arg2[%c0_8, %10, %c1, %c0_9] : memref<2x10x10x128xf32, #tpu.memory_space<vmem>>, vector<2x8x8x128xf32>
    %12 = vector.shape_cast %11 : vector<2x8x8x128xf32> to vector<128x128xf32>
    %c1_10 = arith.constant 1 : index
    %c0_11 = arith.constant 0 : index
    %c0_12 = arith.constant 0 : index
    %13 = vector.load %arg3[%c1_10, %c0_11, %c0_12] : memref<9x128x128xf32, #tpu.memory_space<vmem>>, vector<1x128x128xf32>
    %14 = vector.shape_cast %13 : vector<1x128x128xf32> to vector<128x128xf32>
    %cst_13 = arith.constant dense<0.000000e+00> : vector<128x128xf32>
    %15 = tpu.matmul %12, %14, %cst_13 {dimension_numbers = #tpu.dot_dimension_numbers<[1], [0], [0], [1], [0, 0, 1, 1], [], []>} : vector<128x128xf32>, vector<128x128xf32>, vector<128x128xf32> -> vector<128x128xf32>
    %c0_14 = arith.constant 0 : index
    %c0_15 = arith.constant 0 : index
    %16 = vector.load %arg10[%c0_14, %c0_15] : memref<128x128xf32, #tpu.memory_space<vmem>>, vector<128x128xf32>
    %17 = arith.addf %16, %15 : vector<128x128xf32>
    %c0_16 = arith.constant 0 : index
    %c0_17 = arith.constant 0 : index
    %18 = vector.load %arg10[%c0_16, %c0_17] : memref<128x128xf32, #tpu.memory_space<vmem>>, vector<128x128xf32>
    tpu.vector_store %arg10[%c0_16, %c0_17], %17 {strides = array<i32>} : memref<128x128xf32, #tpu.memory_space<vmem>>, vector<128x128xf32>,
    %c0_i32_18 = arith.constant 0 : i32
    %19 = arith.addi %c0_i32_18, %0 : i32
    %c0_19 = arith.constant 0 : index
    %20 = arith.index_cast %19 : i32 to index
    %c2 = arith.constant 2 : index
    %c0_20 = arith.constant 0 : index
    %21 = vector.load %arg2[%c0_19, %20, %c2, %c0_20] : memref<2x10x10x128xf32, #tpu.memory_space<vmem>>, vector<2x8x8x128xf32>
    %22 = vector.shape_cast %21 : vector<2x8x8x128xf32> to vector<128x128xf32>
    %c2_21 = arith.constant 2 : index
    %c0_22 = arith.constant 0 : index
    %c0_23 = arith.constant 0 : index
    %23 = vector.load %arg3[%c2_21, %c0_22, %c0_23] : memref<9x128x128xf32, #tpu.memory_space<vmem>>, vector<1x128x128xf32>
    %24 = vector.shape_cast %23 : vector<1x128x128xf32> to vector<128x128xf32>
    %cst_24 = arith.constant dense<0.000000e+00> : vector<128x128xf32>
    %25 = tpu.matmul %22, %24, %cst_24 {dimension_numbers = #tpu.dot_dimension_numbers<[1], [0], [0], [1], [0, 0, 1, 1], [], []>} : vector<128x128xf32>, vector<128x128xf32>, vector<128x128xf32> -> vector<128x128xf32>
    %c0_25 = arith.constant 0 : index
    %c0_26 = arith.constant 0 : index
    %26 = vector.load %arg10[%c0_25, %c0_26] : memref<128x128xf32, #tpu.memory_space<vmem>>, vector<128x128xf32>
    %27 = arith.addf %26, %25 : vector<128x128xf32>
    %c0_27 = arith.constant 0 : index
    %c0_28 = arith.constant 0 : index
    %28 = vector.load %arg10[%c0_27, %c0_28] : memref<128x128xf32, #tpu.memory_space<vmem>>, vector<128x128xf32>
    tpu.vector_store %arg10[%c0_27, %c0_28], %27 {strides = array<i32>} : memref<128x128xf32, #tpu.memory_space<vmem>>, vector<128x128xf32>,
    %c1_i32 = arith.constant 1 : i32
    %29 = arith.addi %c1_i32, %0 : i32
    %c0_29 = arith.constant 0 : index
    %30 = arith.index_cast %29 : i32 to index
    %c0_30 = arith.constant 0 : index
    %c0_31 = arith.constant 0 : index
    %31 = vector.load %arg2[%c0_29, %30, %c0_30, %c0_31] : memref<2x10x10x128xf32, #tpu.memory_space<vmem>>, vector<2x8x8x128xf32>
    %32 = vector.shape_cast %31 : vector<2x8x8x128xf32> to vector<128x128xf32>
    %c3 = arith.constant 3 : index
    %c0_32 = arith.constant 0 : index
    %c0_33 = arith.constant 0 : index
    %33 = vector.load %arg3[%c3, %c0_32, %c0_33] : memref<9x128x128xf32, #tpu.memory_space<vmem>>, vector<1x128x128xf32>
    %34 = vector.shape_cast %33 : vector<1x128x128xf32> to vector<128x128xf32>
    %cst_34 = arith.constant dense<0.000000e+00> : vector<128x128xf32>
    %35 = tpu.matmul %32, %34, %cst_34 {dimension_numbers = #tpu.dot_dimension_numbers<[1], [0], [0], [1], [0, 0, 1, 1], [], []>} : vector<128x128xf32>, vector<128x128xf32>, vector<128x128xf32> -> vector<128x128xf32>
    %c0_35 = arith.constant 0 : index
    %c0_36 = arith.constant 0 : index
    %36 = vector.load %arg10[%c0_35, %c0_36] : memref<128x128xf32, #tpu.memory_space<vmem>>, vector<128x128xf32>
    %37 = arith.addf %36, %35 : vector<128x128xf32>
    %c0_37 = arith.constant 0 : index
    %c0_38 = arith.constant 0 : index
    %38 = vector.load %arg10[%c0_37, %c0_38] : memref<128x128xf32, #tpu.memory_space<vmem>>, vector<128x128xf32>
    tpu.vector_store %arg10[%c0_37, %c0_38], %37 {strides = array<i32>} : memref<128x128xf32, #tpu.memory_space<vmem>>, vector<128x128xf32>,
    %c1_i32_39 = arith.constant 1 : i32
    %39 = arith.addi %c1_i32_39, %0 : i32
    %c0_40 = arith.constant 0 : index
    %40 = arith.index_cast %39 : i32 to index
    %c1_41 = arith.constant 1 : index
    %c0_42 = arith.constant 0 : index
    %41 = vector.load %arg2[%c0_40, %40, %c1_41, %c0_42] : memref<2x10x10x128xf32, #tpu.memory_space<vmem>>, vector<2x8x8x128xf32>
    %42 = vector.shape_cast %41 : vector<2x8x8x128xf32> to vector<128x128xf32>
    %c4 = arith.constant 4 : index
    %c0_43 = arith.constant 0 : index
    %c0_44 = arith.constant 0 : index
    %43 = vector.load %arg3[%c4, %c0_43, %c0_44] : memref<9x128x128xf32, #tpu.memory_space<vmem>>, vector<1x128x128xf32>
    %44 = vector.shape_cast %43 : vector<1x128x128xf32> to vector<128x128xf32>
    %cst_45 = arith.constant dense<0.000000e+00> : vector<128x128xf32>
    %45 = tpu.matmul %42, %44, %cst_45 {dimension_numbers = #tpu.dot_dimension_numbers<[1], [0], [0], [1], [0, 0, 1, 1], [], []>} : vector<128x128xf32>, vector<128x128xf32>, vector<128x128xf32> -> vector<128x128xf32>
    %c0_46 = arith.constant 0 : index
    %c0_47 = arith.constant 0 : index
    %46 = vector.load %arg10[%c0_46, %c0_47] : memref<128x128xf32, #tpu.memory_space<vmem>>, vector<128x128xf32>
    %47 = arith.addf %46, %45 : vector<128x128xf32>
    %c0_48 = arith.constant 0 : index
    %c0_49 = arith.constant 0 : index
    %48 = vector.load %arg10[%c0_48, %c0_49] : memref<128x128xf32, #tpu.memory_space<vmem>>, vector<128x128xf32>
    tpu.vector_store %arg10[%c0_48, %c0_49], %47 {strides = array<i32>} : memref<128x128xf32, #tpu.memory_space<vmem>>, vector<128x128xf32>,
    %c1_i32_50 = arith.constant 1 : i32
    %49 = arith.addi %c1_i32_50, %0 : i32
    %c0_51 = arith.constant 0 : index
    %50 = arith.index_cast %49 : i32 to index
    %c2_52 = arith.constant 2 : index
    %c0_53 = arith.constant 0 : index
    %51 = vector.load %arg2[%c0_51, %50, %c2_52, %c0_53] : memref<2x10x10x128xf32, #tpu.memory_space<vmem>>, vector<2x8x8x128xf32>
    %52 = vector.shape_cast %51 : vector<2x8x8x128xf32> to vector<128x128xf32>
    %c5 = arith.constant 5 : index
    %c0_54 = arith.constant 0 : index
    %c0_55 = arith.constant 0 : index
    %53 = vector.load %arg3[%c5, %c0_54, %c0_55] : memref<9x128x128xf32, #tpu.memory_space<vmem>>, vector<1x128x128xf32>
    %54 = vector.shape_cast %53 : vector<1x128x128xf32> to vector<128x128xf32>
    %cst_56 = arith.constant dense<0.000000e+00> : vector<128x128xf32>
    %55 = tpu.matmul %52, %54, %cst_56 {dimension_numbers = #tpu.dot_dimension_numbers<[1], [0], [0], [1], [0, 0, 1, 1], [], []>} : vector<128x128xf32>, vector<128x128xf32>, vector<128x128xf32> -> vector<128x128xf32>
    %c0_57 = arith.constant 0 : index
    %c0_58 = arith.constant 0 : index
    %56 = vector.load %arg10[%c0_57, %c0_58] : memref<128x128xf32, #tpu.memory_space<vmem>>, vector<128x128xf32>
    %57 = arith.addf %56, %55 : vector<128x128xf32>
    %c0_59 = arith.constant 0 : index
    %c0_60 = arith.constant 0 : index
    %58 = vector.load %arg10[%c0_59, %c0_60] : memref<128x128xf32, #tpu.memory_space<vmem>>, vector<128x128xf32>
    tpu.vector_store %arg10[%c0_59, %c0_60], %57 {strides = array<i32>} : memref<128x128xf32, #tpu.memory_space<vmem>>, vector<128x128xf32>,
    %c2_i32 = arith.constant 2 : i32
    %59 = arith.addi %c2_i32, %0 : i32
    %c0_61 = arith.constant 0 : index
    %60 = arith.index_cast %59 : i32 to index
    %c0_62 = arith.constant 0 : index
    %c0_63 = arith.constant 0 : index
    %61 = vector.load %arg2[%c0_61, %60, %c0_62, %c0_63] : memref<2x10x10x128xf32, #tpu.memory_space<vmem>>, vector<2x8x8x128xf32>
    %62 = vector.shape_cast %61 : vector<2x8x8x128xf32> to vector<128x128xf32>
    %c6 = arith.constant 6 : index
    %c0_64 = arith.constant 0 : index
    %c0_65 = arith.constant 0 : index
    %63 = vector.load %arg3[%c6, %c0_64, %c0_65] : memref<9x128x128xf32, #tpu.memory_space<vmem>>, vector<1x128x128xf32>
    %64 = vector.shape_cast %63 : vector<1x128x128xf32> to vector<128x128xf32>
    %cst_66 = arith.constant dense<0.000000e+00> : vector<128x128xf32>
    %65 = tpu.matmul %62, %64, %cst_66 {dimension_numbers = #tpu.dot_dimension_numbers<[1], [0], [0], [1], [0, 0, 1, 1], [], []>} : vector<128x128xf32>, vector<128x128xf32>, vector<128x128xf32> -> vector<128x128xf32>
    %c0_67 = arith.constant 0 : index
    %c0_68 = arith.constant 0 : index
    %66 = vector.load %arg10[%c0_67, %c0_68] : memref<128x128xf32, #tpu.memory_space<vmem>>, vector<128x128xf32>
    %67 = arith.addf %66, %65 : vector<128x128xf32>
    %c0_69 = arith.constant 0 : index
    %c0_70 = arith.constant 0 : index
    %68 = vector.load %arg10[%c0_69, %c0_70] : memref<128x128xf32, #tpu.memory_space<vmem>>, vector<128x128xf32>
    tpu.vector_store %arg10[%c0_69, %c0_70], %67 {strides = array<i32>} : memref<128x128xf32, #tpu.memory_space<vmem>>, vector<128x128xf32>,
    %c2_i32_71 = arith.constant 2 : i32
    %69 = arith.addi %c2_i32_71, %0 : i32
    %c0_72 = arith.constant 0 : index
    %70 = arith.index_cast %69 : i32 to index
    %c1_73 = arith.constant 1 : index
    %c0_74 = arith.constant 0 : index
    %71 = vector.load %arg2[%c0_72, %70, %c1_73, %c0_74] : memref<2x10x10x128xf32, #tpu.memory_space<vmem>>, vector<2x8x8x128xf32>
    %72 = vector.shape_cast %71 : vector<2x8x8x128xf32> to vector<128x128xf32>
    %c7 = arith.constant 7 : index
    %c0_75 = arith.constant 0 : index
    %c0_76 = arith.constant 0 : index
    %73 = vector.load %arg3[%c7, %c0_75, %c0_76] : memref<9x128x128xf32, #tpu.memory_space<vmem>>, vector<1x128x128xf32>
    %74 = vector.shape_cast %73 : vector<1x128x128xf32> to vector<128x128xf32>
    %cst_77 = arith.constant dense<0.000000e+00> : vector<128x128xf32>
    %75 = tpu.matmul %72, %74, %cst_77 {dimension_numbers = #tpu.dot_dimension_numbers<[1], [0], [0], [1], [0, 0, 1, 1], [], []>} : vector<128x128xf32>, vector<128x128xf32>, vector<128x128xf32> -> vector<128x128xf32>
    %c0_78 = arith.constant 0 : index
    %c0_79 = arith.constant 0 : index
    %76 = vector.load %arg10[%c0_78, %c0_79] : memref<128x128xf32, #tpu.memory_space<vmem>>, vector<128x128xf32>
    %77 = arith.addf %76, %75 : vector<128x128xf32>
    %c0_80 = arith.constant 0 : index
    %c0_81 = arith.constant 0 : index
    %78 = vector.load %arg10[%c0_80, %c0_81] : memref<128x128xf32, #tpu.memory_space<vmem>>, vector<128x128xf32>
    tpu.vector_store %arg10[%c0_80, %c0_81], %77 {strides = array<i32>} : memref<128x128xf32, #tpu.memory_space<vmem>>, vector<128x128xf32>,
    %c2_i32_82 = arith.constant 2 : i32
    %79 = arith.addi %c2_i32_82, %0 : i32
    %c0_83 = arith.constant 0 : index
    %80 = arith.index_cast %79 : i32 to index
    %c2_84 = arith.constant 2 : index
    %c0_85 = arith.constant 0 : index
    %81 = vector.load %arg2[%c0_83, %80, %c2_84, %c0_85] : memref<2x10x10x128xf32, #tpu.memory_space<vmem>>, vector<2x8x8x128xf32>
    %82 = vector.shape_cast %81 : vector<2x8x8x128xf32> to vector<128x128xf32>
    %c8 = arith.constant 8 : index
    %c0_86 = arith.constant 0 : index
    %c0_87 = arith.constant 0 : index
    %83 = vector.load %arg3[%c8, %c0_86, %c0_87] : memref<9x128x128xf32, #tpu.memory_space<vmem>>, vector<1x128x128xf32>
    %84 = vector.shape_cast %83 : vector<1x128x128xf32> to vector<128x128xf32>
    %cst_88 = arith.constant dense<0.000000e+00> : vector<128x128xf32>
    %85 = tpu.matmul %82, %84, %cst_88 {dimension_numbers = #tpu.dot_dimension_numbers<[1], [0], [0], [1], [0, 0, 1, 1], [], []>} : vector<128x128xf32>, vector<128x128xf32>, vector<128x128xf32> -> vector<128x128xf32>
    %c0_89 = arith.constant 0 : index
    %c0_90 = arith.constant 0 : index
    %86 = vector.load %arg10[%c0_89, %c0_90] : memref<128x128xf32, #tpu.memory_space<vmem>>, vector<128x128xf32>
    %87 = arith.addf %86, %85 : vector<128x128xf32>
    %c0_91 = arith.constant 0 : index
    %c0_92 = arith.constant 0 : index
    %88 = vector.load %arg10[%c0_91, %c0_92] : memref<128x128xf32, #tpu.memory_space<vmem>>, vector<128x128xf32>
    tpu.vector_store %arg10[%c0_91, %c0_92], %87 {strides = array<i32>} : memref<128x128xf32, #tpu.memory_space<vmem>>, vector<128x128xf32>,
    %c0_93 = arith.constant 0 : index
    %c0_94 = arith.constant 0 : index
    %89 = vector.load %arg10[%c0_93, %c0_94] : memref<128x128xf32, #tpu.memory_space<vmem>>, vector<128x128xf32>
    %90 = vector.shape_cast %89 : vector<128x128xf32> to vector<2x1x64x128xf32>
    %c0_95 = arith.constant 0 : index
    %c0_96 = arith.constant 0 : index
    %c0_97 = arith.constant 0 : index
    %c0_98 = arith.constant 0 : index
    %91 = vector.load %arg6[%c0_95, %c0_96, %c0_97, %c0_98] : memref<2x1x64x128xf32, #tpu.memory_space<vmem>>, vector<2x1x64x128xf32>
    tpu.vector_store %arg6[%c0_95, %c0_96, %c0_97, %c0_98], %90 {strides = array<i32>} : memref<2x1x64x128xf32, #tpu.memory_space<vmem>>, vector<2x1x64x128xf32>,
    %cst_99 = arith.constant dense<0.000000e+00> : vector<128xf32>
    %92 = vector.multi_reduction <add>, %89, %cst_99 [0] : vector<128x128xf32> to vector<128xf32>
    %93 = vector.shape_cast %92 : vector<128xf32> to vector<1x128xf32>
    %94 = arith.mulf %89, %89 : vector<128x128xf32>
    %cst_100 = arith.constant dense<0.000000e+00> : vector<128xf32>
    %95 = vector.multi_reduction <add>, %94, %cst_100 [0] : vector<128x128xf32> to vector<128xf32>
    %96 = vector.shape_cast %95 : vector<128xf32> to vector<1x128xf32>
    %97 = tpu.concatenate %93, %96 in 0 : vector<1x128xf32>, vector<1x128xf32> -> vector<2x128xf32>
    %98 = vector.shape_cast %97 : vector<2x128xf32> to vector<1x1x2x128xf32>
    %c0_101 = arith.constant 0 : index
    %c0_102 = arith.constant 0 : index
    %c0_103 = arith.constant 0 : index
    %c0_104 = arith.constant 0 : index
    %99 = vector.load %arg7[%c0_101, %c0_102, %c0_103, %c0_104] : memref<1x1x2x128xf32, #tpu.memory_space<vmem>>, vector<1x1x2x128xf32>
    tpu.vector_store %arg7[%c0_101, %c0_102, %c0_103, %c0_104], %98 {strides = array<i32>} : memref<1x1x2x128xf32, #tpu.memory_space<vmem>>, vector<1x1x2x128xf32>,
    %c0_105 = arith.constant 0 : index
    %c0_106 = arith.constant 0 : index
    %c0_107 = arith.constant 0 : index
    %c0_108 = arith.constant 0 : index
    %100 = vector.load %arg4[%c0_105, %c0_106, %c0_107, %c0_108] : memref<2x1x64x128xf32, #tpu.memory_space<vmem>>, vector<2x1x64x128xf32>
    %101 = vector.shape_cast %100 : vector<2x1x64x128xf32> to vector<128x128xf32>
    %c0_109 = arith.constant 0 : index
    %c0_110 = arith.constant 0 : index
    %102 = vector.load %arg5[%c0_109, %c0_110] : memref<128x128xf32, #tpu.memory_space<vmem>>, vector<128x128xf32>
    %cst_111 = arith.constant dense<0.000000e+00> : vector<128x128xf32>
    %103 = tpu.matmul %101, %102, %cst_111 {dimension_numbers = #tpu.dot_dimension_numbers<[1], [0], [0], [1], [0, 0, 1, 1], [], []>} : vector<128x128xf32>, vector<128x128xf32>, vector<128x128xf32> -> vector<128x128xf32>
    %104 = vector.shape_cast %103 : vector<128x128xf32> to vector<2x1x64x128xf32>
    %c0_112 = arith.constant 0 : index
    %c0_113 = arith.constant 0 : index
    %c0_114 = arith.constant 0 : index
    %c0_115 = arith.constant 0 : index
    %105 = vector.load %arg8[%c0_112, %c0_113, %c0_114, %c0_115] : memref<2x1x64x128xf32, #tpu.memory_space<vmem>>, vector<2x1x64x128xf32>
    tpu.vector_store %arg8[%c0_112, %c0_113, %c0_114, %c0_115], %104 {strides = array<i32>} : memref<2x1x64x128xf32, #tpu.memory_space<vmem>>, vector<2x1x64x128xf32>,
    %cst_116 = arith.constant dense<0.000000e+00> : vector<128xf32>
    %106 = vector.multi_reduction <add>, %103, %cst_116 [0] : vector<128x128xf32> to vector<128xf32>
    %107 = vector.shape_cast %106 : vector<128xf32> to vector<1x128xf32>
    %108 = arith.mulf %103, %103 : vector<128x128xf32>
    %cst_117 = arith.constant dense<0.000000e+00> : vector<128xf32>
    %109 = vector.multi_reduction <add>, %108, %cst_117 [0] : vector<128x128xf32> to vector<128xf32>
    %110 = vector.shape_cast %109 : vector<128xf32> to vector<1x128xf32>
    %111 = tpu.concatenate %107, %110 in 0 : vector<1x128xf32>, vector<1x128xf32> -> vector<2x128xf32>
    %112 = vector.shape_cast %111 : vector<2x128xf32> to vector<1x1x2x128xf32>
    %c0_118 = arith.constant 0 : index
    %c0_119 = arith.constant 0 : index
    %c0_120 = arith.constant 0 : index
    %c0_121 = arith.constant 0 : index
    %113 = vector.load %arg9[%c0_118, %c0_119, %c0_120, %c0_121] : memref<1x1x2x128xf32, #tpu.memory_space<vmem>>, vector<1x1x2x128xf32>
    tpu.vector_store %arg9[%c0_118, %c0_119, %c0_120, %c0_121], %112 {strides = array<i32>} : memref<1x1x2x128xf32, #tpu.memory_space<vmem>>, vector<1x1x2x128xf32>,
    return
  }
  func.func @transform_0(%arg0: i32, %arg1: i32) -> (i32, i32, i32, i32) {
    %c0_i32 = arith.constant 0 : i32
    %c0_i32_0 = arith.constant 0 : i32
    %c0_i32_1 = arith.constant 0 : i32
    %c0_i32_2 = arith.constant 0 : i32
    return %arg0, %c0_i32, %c0_i32_0, %c0_i32_1 : i32, i32, i32, i32
  }
  func.func @transform_1(%arg0: i32, %arg1: i32) -> (i32, i32, i32) {
    %c0_i32 = arith.constant 0 : i32
    %c0_i32_0 = arith.constant 0 : i32
    %c0_i32_1 = arith.constant 0 : i32
    %c0_i32_2 = arith.constant 0 : i32
    return %c0_i32, %c0_i32_0, %c0_i32_1 : i32, i32, i32
  }
  func.func @transform_2(%arg0: i32, %arg1: i32) -> (i32, i32, i32, i32) {
    %c0_i32 = arith.constant 0 : i32
    %c0_i32_0 = arith.constant 0 : i32
    %c0_i32_1 = arith.constant 0 : i32
    return %arg0, %arg1, %c0_i32, %c0_i32_0 : i32, i32, i32, i32
  }
  func.func @transform_3(%arg0: i32, %arg1: i32) -> (i32, i32) {
    %c0_i32 = arith.constant 0 : i32
    %c0_i32_0 = arith.constant 0 : i32
    %c0_i32_1 = arith.constant 0 : i32
    return %c0_i32, %c0_i32_0 : i32, i32
  }
  func.func @transform_4(%arg0: i32, %arg1: i32) -> (i32, i32, i32, i32) {
    %c0_i32 = arith.constant 0 : i32
    %c0_i32_0 = arith.constant 0 : i32
    %c0_i32_1 = arith.constant 0 : i32
    return %arg0, %arg1, %c0_i32, %c0_i32_0 : i32, i32, i32, i32
  }
  func.func @transform_5(%arg0: i32, %arg1: i32) -> (i32, i32, i32, i32) {
    %c0_i32 = arith.constant 0 : i32
    %c0_i32_0 = arith.constant 0 : i32
    %c0_i32_1 = arith.constant 0 : i32
    return %arg0, %arg1, %c0_i32, %c0_i32_0 : i32, i32, i32, i32
  }
  func.func @transform_6(%arg0: i32, %arg1: i32) -> (i32, i32, i32, i32) {
    %c0_i32 = arith.constant 0 : i32
    %c0_i32_0 = arith.constant 0 : i32
    %c0_i32_1 = arith.constant 0 : i32
    return %arg0, %arg1, %c0_i32, %c0_i32_0 : i32, i32, i32, i32
  }
  func.func @transform_7(%arg0: i32, %arg1: i32) -> (i32, i32, i32, i32) {
    %c0_i32 = arith.constant 0 : i32
    %c0_i32_0 = arith.constant 0 : i32
    %c0_i32_1 = arith.constant 0 : i32
    return %arg0, %arg1, %c0_i32, %c0_i32_0 : i32, i32, i32, i32
  }
}

</mosaic_0001>

<llo_original>
// kernel: basic_block_forward.5
$region0: #{basic_block_forward.5}
  #allocation0 [shape = 'u32[]', space=smem, size = 0x4, offset = 0x4, fixed_abs, tag = 'smem constant byte address 0x4 - core index']
  #allocation1 [shape = 'u32[72,128]{1,0:T(1,128)}', space=vmem, size = 0x9000, scoped, tag = 'internal scratch']
  %s0 = inlined_call_operand.vmem [shape: f32[128,128], index: 0, kind: input, shape index: {}]
  %s1 = inlined_call_operand.vmem [shape: f32[1,128], index: 1, kind: input, shape index: {}]
  %s2 = inlined_call_operand.vmem [shape: f32[1,128], index: 2, kind: input, shape index: {}]
  %s3 = inlined_call_operand.vmem [shape: f32[128,128], index: 3, kind: output, shape index: {}]
  %s4 = sld [smem:[#allocation0]]
  $region22: #{basic_block_forward.5} parent=0
    _
  %s6 = ssub.s32 1, %s4
  %s7 = scalar_select 0, %s6, %s4
  // Predicated region
  $region2: #{basic_block_forward.5} parent=0 // pred_check
    _
  $region3: #{basic_block_forward.5} parent=0 // pred_check_branch
    %9 = sbr.rel (0) target = $region5
  $region4: #{basic_block_forward.5} parent=0 // pred_region
    _
  $region5: #{basic_block_forward.5} parent=0 // pred_fallthru
    _
  // Predicated region
  $region6: #{basic_block_forward.5} parent=0 // pred_check
    _
  $region7: #{basic_block_forward.5} parent=0 // pred_check_branch
    %11 = sbr.rel (0) target = $region9
  $region8: #{basic_block_forward.5} parent=0 // pred_region
    _
  $region9: #{basic_block_forward.5} parent=0 // pred_fallthru
    _
  // Predicated region
  $region10: #{basic_block_forward.5} parent=0 // pred_check
    _
  $region11: #{basic_block_forward.5} parent=0 // pred_check_branch
    %13 = sbr.rel (0) target = $region13
  $region12: #{basic_block_forward.5} parent=0 // pred_region
    _
  $region13: #{basic_block_forward.5} parent=0 // pred_fallthru
    _
  %v14 = vld [vmem:[%s0] sm:$0xff]
  %v15 = vld [vmem:[%s0 + $0x8] sm:$0xff]
  %v16 = vld [vmem:[%s0 + $0x10] sm:$0xff]
  %v17 = vld [vmem:[%s0 + $0x18] sm:$0xff]
  %v18 = vld [vmem:[%s0 + $0x20] sm:$0xff]
  %v19 = vld [vmem:[%s0 + $0x28] sm:$0xff]
  %v20 = vld [vmem:[%s0 + $0x30] sm:$0xff]
  %v21 = vld [vmem:[%s0 + $0x38] sm:$0xff]
  %v22 = vld [vmem:[%s0 + $0x40] sm:$0xff]
  %v23 = vld [vmem:[%s0 + $0x48] sm:$0xff]
  %v24 = vld [vmem:[%s0 + $0x50] sm:$0xff]
  %v25 = vld [vmem:[%s0 + $0x58] sm:$0xff]
  %v26 = vld [vmem:[%s0 + $0x60] sm:$0xff]
  %v27 = vld [vmem:[%s0 + $0x68] sm:$0xff]
  %v28 = vld [vmem:[%s0 + $0x70] sm:$0xff]
  %v29 = vld [vmem:[%s0 + $0x78] sm:$0xff]
  %v30 = vld [vmem:[%s1] sm:$0x1]
  %v32 = vperm.slane %v30, 0
  %v34 = vmul.f32 %v14, %v32
  %v35 = vmul.f32 %v15, %v32
  %v36 = vmul.f32 %v16, %v32
  %v37 = vmul.f32 %v17, %v32
  %v38 = vmul.f32 %v18, %v32
  %v39 = vmul.f32 %v19, %v32
  %v40 = vmul.f32 %v20, %v32
  %v41 = vmul.f32 %v21, %v32
  %v42 = vmul.f32 %v22, %v32
  %v43 = vmul.f32 %v23, %v32
  %v44 = vmul.f32 %v24, %v32
  %v45 = vmul.f32 %v25, %v32
  %v46 = vmul.f32 %v26, %v32
  %v47 = vmul.f32 %v27, %v32
  %v48 = vmul.f32 %v28, %v32
  %v49 = vmul.f32 %v29, %v32
  %v50 = vld [vmem:[%s2] sm:$0x1]
  %v52 = vperm.slane %v50, 0
  %v54 = vadd.f32 %v34, %v52
  %v55 = vadd.f32 %v35, %v52
  %v56 = vadd.f32 %v36, %v52
  %v57 = vadd.f32 %v37, %v52
  %v58 = vadd.f32 %v38, %v52
  %v59 = vadd.f32 %v39, %v52
  %v60 = vadd.f32 %v40, %v52
  %v61 = vadd.f32 %v41, %v52
  %v62 = vadd.f32 %v42, %v52
  %v63 = vadd.f32 %v43, %v52
  %v64 = vadd.f32 %v44, %v52
  %v65 = vadd.f32 %v45, %v52
  %v66 = vadd.f32 %v46, %v52
  %v67 = vadd.f32 %v47, %v52
  %v68 = vadd.f32 %v48, %v52
  %v69 = vadd.f32 %v49, %v52
  %v70 = vmax.f32 %v54, 0.0
  %v71 = vmax.f32 %v55, 0.0
  %v72 = vmax.f32 %v56, 0.0
  %v73 = vmax.f32 %v57, 0.0
  %v74 = vmax.f32 %v58, 0.0
  %v75 = vmax.f32 %v59, 0.0
  %v76 = vmax.f32 %v60, 0.0
  %v77 = vmax.f32 %v61, 0.0
  %v78 = vmax.f32 %v62, 0.0
  %v79 = vmax.f32 %v63, 0.0
  %v80 = vmax.f32 %v64, 0.0
  %v81 = vmax.f32 %v65, 0.0
  %v82 = vmax.f32 %v66, 0.0
  %v83 = vmax.f32 %v67, 0.0
  %v84 = vmax.f32 %v68, 0.0
  %v85 = vmax.f32 %v69, 0.0
  %86 = vst [vmem:[%s3] sm:$0xff] %v70
  %87 = vst [vmem:[%s3 + $0x8] sm:$0xff] %v71
  %88 = vst [vmem:[%s3 + $0x10] sm:$0xff] %v72
  %89 = vst [vmem:[%s3 + $0x18] sm:$0xff] %v73
  %90 = vst [vmem:[%s3 + $0x20] sm:$0xff] %v74
  %91 = vst [vmem:[%s3 + $0x28] sm:$0xff] %v75
  %92 = vst [vmem:[%s3 + $0x30] sm:$0xff] %v76
  %93 = vst [vmem:[%s3 + $0x38] sm:$0xff] %v77
  %94 = vst [vmem:[%s3 + $0x40] sm:$0xff] %v78
  %95 = vst [vmem:[%s3 + $0x48] sm:$0xff] %v79
  %96 = vst [vmem:[%s3 + $0x50] sm:$0xff] %v80
  %97 = vst [vmem:[%s3 + $0x58] sm:$0xff] %v81
  %98 = vst [vmem:[%s3 + $0x60] sm:$0xff] %v82
  %99 = vst [vmem:[%s3 + $0x68] sm:$0xff] %v83
  %100 = vst [vmem:[%s3 + $0x70] sm:$0xff] %v84
  %101 = vst [vmem:[%s3 + $0x78] sm:$0xff] %v85
  // Predicated region
  $region14: #{basic_block_forward.5} parent=0 // pred_check
    _
  $region15: #{basic_block_forward.5} parent=0 // pred_check_branch
    %103 = sbr.rel (0) target = $region17
  $region16: #{basic_block_forward.5} parent=0 // pred_region
    _
  $region17: #{basic_block_forward.5} parent=0 // pred_fallthru
    _
  // Predicated region
  $region18: #{basic_block_forward.5} parent=0 // pred_check
    _
  $region19: #{basic_block_forward.5} parent=0 // pred_check_branch
    %105 = sbr.rel (0) target = $region21
  $region20: #{basic_block_forward.5} parent=0 // pred_region
    _
  $region21: #{basic_block_forward.5} parent=0 // pred_fallthru
    _

// kernel: basic_block_forward.4
$region0: #{basic_block_forward.4}
  #allocation0 [shape = 'u32[]', space=smem, size = 0x4, offset = 0x4, fixed_abs, tag = 'smem constant byte address 0x4 - core index']
  #allocation1 [shape = 'u32[72,128]{1,0:T(1,128)}', space=vmem, size = 0x9000, scoped, tag = 'internal scratch']
  #allocation2 [shape = 'f32[128,128]{1,0:T(8,128)}', space=vmem, size = 0x10000, scoped, tag = 'scratch operand']
  %s0 = inlined_call_operand.vmem [shape: f32[2,36,9,128], index: 0, kind: input, shape index: {}]
  %s1 = inlined_call_operand.vmem [shape: f32[9,128,128], index: 1, kind: input, shape index: {}]
  %s2 = inlined_call_operand.vmem [shape: f32[2,1,64,128], index: 2, kind: output, shape index: {0}]
  %s3 = inlined_call_operand.vmem [shape: f32[1,1,2,128], index: 3, kind: output, shape index: {1}]
  %4 = xla_tuple %s2, %s3
  %s5 = sld [smem:[#allocation0]]
  $region26: #{basic_block_forward.4} parent=0
    _
  %s7 = ssub.s32 1, %s5
  %s8 = scalar_select 0, %s7, %s5
  // Predicated region
  $region2: #{basic_block_forward.4} parent=0 // pred_check
    _
  $region3: #{basic_block_forward.4} parent=0 // pred_check_branch
    %10 = sbr.rel (0) target = $region5
  $region4: #{basic_block_forward.4} parent=0 // pred_region
    _
  $region5: #{basic_block_forward.4} parent=0 // pred_fallthru
    _
  // Predicated region
  $region6: #{basic_block_forward.4} parent=0 // pred_check
    _
  $region7: #{basic_block_forward.4} parent=0 // pred_check_branch
    %12 = sbr.rel (0) target = $region9
  $region8: #{basic_block_forward.4} parent=0 // pred_region
    _
  $region9: #{basic_block_forward.4} parent=0 // pred_fallthru
    _
  %s13 = smul.u32 0, 8
  %s14 = smul.u32 %s13, 16
  %s15 = scalar_lea.vmem %s0, %s14
  %v16 = vld [vmem:[%s15] sm:$0xff]
  %v17 = vld [vmem:[%s15 + $0x10] sm:$0xff]
  %v18 = vld [vmem:[%s15 + $0x20] sm:$0xff]
  %v19 = vld [vmem:[%s15 + $0x30] sm:$0xff]
  %v20 = vld [vmem:[%s15 + $0x40] sm:$0xff]
  %v21 = vld [vmem:[%s15 + $0x50] sm:$0xff]
  %v22 = vld [vmem:[%s15 + $0x60] sm:$0xff]
  %v23 = vld [vmem:[%s15 + $0x70] sm:$0xff]
  %v24 = vld [vmem:[%s15 + $0x240] sm:$0xff]
  %v25 = vld [vmem:[%s15 + $0x250] sm:$0xff]
  %v26 = vld [vmem:[%s15 + $0x260] sm:$0xff]
  %v27 = vld [vmem:[%s15 + $0x270] sm:$0xff]
  %v28 = vld [vmem:[%s15 + $0x280] sm:$0xff]
  %v29 = vld [vmem:[%s15 + $0x290] sm:$0xff]
  %v30 = vld [vmem:[%s15 + $0x2a0] sm:$0xff]
  %v31 = vld [vmem:[%s15 + $0x2b0] sm:$0xff]
  %v32 = vld [vmem:[%s1] sm:$0xff]
  %v33 = vld [vmem:[%s1 + $0x8] sm:$0xff]
  %v34 = vld [vmem:[%s1 + $0x10] sm:$0xff]
  %v35 = vld [vmem:[%s1 + $0x18] sm:$0xff]
  %v36 = vld [vmem:[%s1 + $0x20] sm:$0xff]
  %v37 = vld [vmem:[%s1 + $0x28] sm:$0xff]
  %v38 = vld [vmem:[%s1 + $0x30] sm:$0xff]
  %v39 = vld [vmem:[%s1 + $0x38] sm:$0xff]
  %v40 = vld [vmem:[%s1 + $0x40] sm:$0xff]
  %v41 = vld [vmem:[%s1 + $0x48] sm:$0xff]
  %v42 = vld [vmem:[%s1 + $0x50] sm:$0xff]
  %v43 = vld [vmem:[%s1 + $0x58] sm:$0xff]
  %v44 = vld [vmem:[%s1 + $0x60] sm:$0xff]
  %v45 = vld [vmem:[%s1 + $0x68] sm:$0xff]
  %v46 = vld [vmem:[%s1 + $0x70] sm:$0xff]
  %v47 = vld [vmem:[%s1 + $0x78] sm:$0xff]
  %48 = vmatpush.msra.mxu0 %v47
  %49 = vmatpush.msra.mxu0 %v46
  %50 = vmatpush.msra.mxu0 %v45
  %51 = vmatpush.msra.mxu0 %v44
  %52 = vmatpush.msra.mxu0 %v43
  %53 = vmatpush.msra.mxu0 %v42
  %54 = vmatpush.msra.mxu0 %v41
  %55 = vmatpush.msra.mxu0 %v40
  %56 = vmatpush.msra.mxu0 %v39
  %57 = vmatpush.msra.mxu0 %v38
  %58 = vmatpush.msra.mxu0 %v37
  %59 = vmatpush.msra.mxu0 %v36
  %60 = vmatpush.msra.mxu0 %v35
  %61 = vmatpush.msra.mxu0 %v34
  %62 = vmatpush.msra.mxu0 %v33
  %63 = vmatpush.msra.mxu0 %v32
  %64 = vmatmul.f32.gmra.mxu0 %v16
  %v65 = vpop.f32.mrf.mxu0
  %v66 = vadd.f32 0.0, %v65
  %67 = vmatmul.f32.gmra.mxu0 %v17
  %v68 = vpop.f32.mrf.mxu0
  %v69 = vadd.f32 0.0, %v68
  %70 = vmatmul.f32.gmra.mxu0 %v18
  %v71 = vpop.f32.mrf.mxu0
  %v72 = vadd.f32 0.0, %v71
  %73 = vmatmul.f32.gmra.mxu0 %v19
  %v74 = vpop.f32.mrf.mxu0
  %v75 = vadd.f32 0.0, %v74
  %76 = vmatmul.f32.gmra.mxu0 %v20
  %v77 = vpop.f32.mrf.mxu0
  %v78 = vadd.f32 0.0, %v77
  %79 = vmatmul.f32.gmra.mxu0 %v21
  %v80 = vpop.f32.mrf.mxu0
  %v81 = vadd.f32 0.0, %v80
  %82 = vmatmul.f32.gmra.mxu0 %v22
  %v83 = vpop.f32.mrf.mxu0
  %v84 = vadd.f32 0.0, %v83
  %85 = vmatmul.f32.gmra.mxu0 %v23
  %v86 = vpop.f32.mrf.mxu0
  %v87 = vadd.f32 0.0, %v86
  %88 = vmatmul.f32.gmra.mxu0 %v24
  %v89 = vpop.f32.mrf.mxu0
  %v90 = vadd.f32 0.0, %v89
  %91 = vmatmul.f32.gmra.mxu0 %v25
  %v92 = vpop.f32.mrf.mxu0
  %v93 = vadd.f32 0.0, %v92
  %94 = vmatmul.f32.gmra.mxu0 %v26
  %v95 = vpop.f32.mrf.mxu0
  %v96 = vadd.f32 0.0, %v95
  %97 = vmatmul.f32.gmra.mxu0 %v27
  %v98 = vpop.f32.mrf.mxu0
  %v99 = vadd.f32 0.0, %v98
  %100 = vmatmul.f32.gmra.mxu0 %v28
  %v101 = vpop.f32.mrf.mxu0
  %v102 = vadd.f32 0.0, %v101
  %103 = vmatmul.f32.gmra.mxu0 %v29
  %v104 = vpop.f32.mrf.mxu0
  %v105 = vadd.f32 0.0, %v104
  %106 = vmatmul.f32.gmra.mxu0 %v30
  %v107 = vpop.f32.mrf.mxu0
  %v108 = vadd.f32 0.0, %v107
  %109 = vmatmul.f32.gmra.mxu0 %v31
  %v110 = vpop.f32.mrf.mxu0
  %v111 = vadd.f32 0.0, %v110
  %112 = vdwg.mxu0
  %113 = vst [vmem:[#allocation2] sm:$0xff] %v66
  %114 = vst [vmem:[#allocation2 + $0x8] sm:$0xff] %v69
  %115 = vst [vmem:[#allocation2 + $0x10] sm:$0xff] %v72
  %116 = vst [vmem:[#allocation2 + $0x18] sm:$0xff] %v75
  %117 = vst [vmem:[#allocation2 + $0x20] sm:$0xff] %v78
  %118 = vst [vmem:[#allocation2 + $0x28] sm:$0xff] %v81
  %119 = vst [vmem:[#allocation2 + $0x30] sm:$0xff] %v84
  %120 = vst [vmem:[#allocation2 + $0x38] sm:$0xff] %v87
  %121 = vst [vmem:[#allocation2 + $0x40] sm:$0xff] %v90
  %122 = vst [vmem:[#allocation2 + $0x48] sm:$0xff] %v93
  %123 = vst [vmem:[#allocation2 + $0x50] sm:$0xff] %v96
  %124 = vst [vmem:[#allocation2 + $0x58] sm:$0xff] %v99
  %125 = vst [vmem:[#allocation2 + $0x60] sm:$0xff] %v102
  %126 = vst [vmem:[#allocation2 + $0x68] sm:$0xff] %v105
  %127 = vst [vmem:[#allocation2 + $0x70] sm:$0xff] %v108
  %128 = vst [vmem:[#allocation2 + $0x78] sm:$0xff] %v111
  %s129 = sadd.s32 %s13, 9
  %s130 = smul.u32 %s129, 16
  %s131 = scalar_lea.vmem %s0, %s130
  %v132 = vld [vmem:[%s131] sm:$0xff]
  %v133 = vld [vmem:[%s131 + $0x10] sm:$0xff]
  %v134 = vld [vmem:[%s131 + $0x20] sm:$0xff]
  %v135 = vld [vmem:[%s131 + $0x30] sm:$0xff]
  %v136 = vld [vmem:[%s131 + $0x40] sm:$0xff]
  %v137 = vld [vmem:[%s131 + $0x50] sm:$0xff]
  %v138 = vld [vmem:[%s131 + $0x60] sm:$0xff]
  %v139 = vld [vmem:[%s131 + $0x70] sm:$0xff]
  %v140 = vld [vmem:[%s131 + $0x240] sm:$0xff]
  %v141 = vld [vmem:[%s131 + $0x250] sm:$0xff]
  %v142 = vld [vmem:[%s131 + $0x260] sm:$0xff]
  %v143 = vld [vmem:[%s131 + $0x270] sm:$0xff]
  %v144 = vld [vmem:[%s131 + $0x280] sm:$0xff]
  %v145 = vld [vmem:[%s131 + $0x290] sm:$0xff]
  %v146 = vld [vmem:[%s131 + $0x2a0] sm:$0xff]
  %v147 = vld [vmem:[%s131 + $0x2b0] sm:$0xff]
  %s148 = scalar_lea.vmem %s1, 128
  %v149 = vld [vmem:[%s148] sm:$0xff]
  %v150 = vld [vmem:[%s148 + $0x8] sm:$0xff]
  %v151 = vld [vmem:[%s148 + $0x10] sm:$0xff]
  %v152 = vld [vmem:[%s148 + $0x18] sm:$0xff]
  %v153 = vld [vmem:[%s148 + $0x20] sm:$0xff]
  %v154 = vld [vmem:[%s148 + $0x28] sm:$0xff]
  %v155 = vld [vmem:[%s148 + $0x30] sm:$0xff]
  %v156 = vld [vmem:[%s148 + $0x38] sm:$0xff]
  %v157 = vld [vmem:[%s148 + $0x40] sm:$0xff]
  %v158 = vld [vmem:[%s148 + $0x48] sm:$0xff]
  %v159 = vld [vmem:[%s148 + $0x50] sm:$0xff]
  %v160 = vld [vmem:[%s148 + $0x58] sm:$0xff]
  %v161 = vld [vmem:[%s148 + $0x60] sm:$0xff]
  %v162 = vld [vmem:[%s148 + $0x68] sm:$0xff]
  %v163 = vld [vmem:[%s148 + $0x70] sm:$0xff]
  %v164 = vld [vmem:[%s148 + $0x78] sm:$0xff]
  %165 = vmatpush.msra.mxu0 %v164
  %166 = vmatpush.msra.mxu0 %v163
  %167 = vmatpush.msra.mxu0 %v162
  %168 = vmatpush.msra.mxu0 %v161
  %169 = vmatpush.msra.mxu0 %v160
  %170 = vmatpush.msra.mxu0 %v159
  %171 = vmatpush.msra.mxu0 %v158
  %172 = vmatpush.msra.mxu0 %v157
  %173 = vmatpush.msra.mxu0 %v156
  %174 = vmatpush.msra.mxu0 %v155
  %175 = vmatpush.msra.mxu0 %v154
  %176 = vmatpush.msra.mxu0 %v153
  %177 = vmatpush.msra.mxu0 %v152
  %178 = vmatpush.msra.mxu0 %v151
  %179 = vmatpush.msra.mxu0 %v150
  %180 = vmatpush.msra.mxu0 %v149
  %181 = vmatmul.f32.gmra.mxu0 %v132
  %v182 = vpop.f32.mrf.mxu0
  %v183 = vadd.f32 0.0, %v182
  %184 = vmatmul.f32.gmra.mxu0 %v133
  %v185 = vpop.f32.mrf.mxu0
  %v186 = vadd.f32 0.0, %v185
  %187 = vmatmul.f32.gmra.mxu0 %v134
  %v188 = vpop.f32.mrf.mxu0
  %v189 = vadd.f32 0.0, %v188
  %190 = vmatmul.f32.gmra.mxu0 %v135
  %v191 = vpop.f32.mrf.mxu0
  %v192 = vadd.f32 0.0, %v191
  %193 = vmatmul.f32.gmra.mxu0 %v136
  %v194 = vpop.f32.mrf.mxu0
  %v195 = vadd.f32 0.0, %v194
  %196 = vmatmul.f32.gmra.mxu0 %v137
  %v197 = vpop.f32.mrf.mxu0
  %v198 = vadd.f32 0.0, %v197
  %199 = vmatmul.f32.gmra.mxu0 %v138
  %v200 = vpop.f32.mrf.mxu0
  %v201 = vadd.f32 0.0, %v200
  %202 = vmatmul.f32.gmra.mxu0 %v139
  %v203 = vpop.f32.mrf.mxu0
  %v204 = vadd.f32 0.0, %v203
  %205 = vmatmul.f32.gmra.mxu0 %v140
  %v206 = vpop.f32.mrf.mxu0
  %v207 = vadd.f32 0.0, %v206
  %208 = vmatmul.f32.gmra.mxu0 %v141
  %v209 = vpop.f32.mrf.mxu0
  %v210 = vadd.f32 0.0, %v209
  %211 = vmatmul.f32.gmra.mxu0 %v142
  %v212 = vpop.f32.mrf.mxu0
  %v213 = vadd.f32 0.0, %v212
  %214 = vmatmul.f32.gmra.mxu0 %v143
  %v215 = vpop.f32.mrf.mxu0
  %v216 = vadd.f32 0.0, %v215
  %217 = vmatmul.f32.gmra.mxu0 %v144
  %v218 = vpop.f32.mrf.mxu0
  %v219 = vadd.f32 0.0, %v218
  %220 = vmatmul.f32.gmra.mxu0 %v145
  %v221 = vpop.f32.mrf.mxu0
  %v222 = vadd.f32 0.0, %v221
  %223 = vmatmul.f32.gmra.mxu0 %v146
  %v224 = vpop.f32.mrf.mxu0
  %v225 = vadd.f32 0.0, %v224
  %226 = vmatmul.f32.gmra.mxu0 %v147
  %v227 = vpop.f32.mrf.mxu0
  %v228 = vadd.f32 0.0, %v227
  %229 = vdwg.mxu0
  %v230 = vld [vmem:[#allocation2] sm:$0xff]
  %v231 = vld [vmem:[#allocation2 + $0x8] sm:$0xff]
  %v232 = vld [vmem:[#allocation2 + $0x10] sm:$0xff]
  %v233 = vld [vmem:[#allocation2 + $0x18] sm:$0xff]
  %v234 = vld [vmem:[#allocation2 + $0x20] sm:$0xff]
  %v235 = vld [vmem:[#allocation2 + $0x28] sm:$0xff]
  %v236 = vld [vmem:[#allocation2 + $0x30] sm:$0xff]
  %v237 = vld [vmem:[#allocation2 + $0x38] sm:$0xff]
  %v238 = vld [vmem:[#allocation2 + $0x40] sm:$0xff]
  %v239 = vld [vmem:[#allocation2 + $0x48] sm:$0xff]
  %v240 = vld [vmem:[#allocation2 + $0x50] sm:$0xff]
  %v241 = vld [vmem:[#allocation2 + $0x58] sm:$0xff]
  %v242 = vld [vmem:[#allocation2 + $0x60] sm:$0xff]
  %v243 = vld [vmem:[#allocation2 + $0x68] sm:$0xff]
  %v244 = vld [vmem:[#allocation2 + $0x70] sm:$0xff]
  %v245 = vld [vmem:[#allocation2 + $0x78] sm:$0xff]
  %v246 = vadd.f32 %v230, %v183
  %v247 = vadd.f32 %v231, %v186
  %v248 = vadd.f32 %v232, %v189
  %v249 = vadd.f32 %v233, %v192
  %v250 = vadd.f32 %v234, %v195
  %v251 = vadd.f32 %v235, %v198
  %v252 = vadd.f32 %v236, %v201
  %v253 = vadd.f32 %v237, %v204
  %v254 = vadd.f32 %v238, %v207
  %v255 = vadd.f32 %v239, %v210
  %v256 = vadd.f32 %v240, %v213
  %v257 = vadd.f32 %v241, %v216
  %v258 = vadd.f32 %v242, %v219
  %v259 = vadd.f32 %v243, %v222
  %v260 = vadd.f32 %v244, %v225
  %v261 = vadd.f32 %v245, %v228
  %262 = vst [vmem:[#allocation2] sm:$0xff] %v246
  %263 = vst [vmem:[#allocation2 + $0x8] sm:$0xff] %v247
  %264 = vst [vmem:[#allocation2 + $0x10] sm:$0xff] %v248
  %265 = vst [vmem:[#allocation2 + $0x18] sm:$0xff] %v249
  %266 = vst [vmem:[#allocation2 + $0x20] sm:$0xff] %v250
  %267 = vst [vmem:[#allocation2 + $0x28] sm:$0xff] %v251
  %268 = vst [vmem:[#allocation2 + $0x30] sm:$0xff] %v252
  %269 = vst [vmem:[#allocation2 + $0x38] sm:$0xff] %v253
  %270 = vst [vmem:[#allocation2 + $0x40] sm:$0xff] %v254
  %271 = vst [vmem:[#allocation2 + $0x48] sm:$0xff] %v255
  %272 = vst [vmem:[#allocation2 + $0x50] sm:$0xff] %v256
  %273 = vst [vmem:[#allocation2 + $0x58] sm:$0xff] %v257
  %274 = vst [vmem:[#allocation2 + $0x60] sm:$0xff] %v258
  %275 = vst [vmem:[#allocation2 + $0x68] sm:$0xff] %v259
  %276 = vst [vmem:[#allocation2 + $0x70] sm:$0xff] %v260
  %277 = vst [vmem:[#allocation2 + $0x78] sm:$0xff] %v261
  %v278 = vld [vmem:[%s15 + $0x1] sm:$0xff]
  %v279 = vld [vmem:[%s15 + $0x11] sm:$0xff]
  %v280 = vld [vmem:[%s15 + $0x21] sm:$0xff]
  %v281 = vld [vmem:[%s15 + $0x31] sm:$0xff]
  %v282 = vld [vmem:[%s15 + $0x41] sm:$0xff]
  %v283 = vld [vmem:[%s15 + $0x51] sm:$0xff]
  %v284 = vld [vmem:[%s15 + $0x61] sm:$0xff]
  %v285 = vld [vmem:[%s15 + $0x71] sm:$0xff]
  %v286 = vld [vmem:[%s15 + $0x241] sm:$0xff]
  %v287 = vld [vmem:[%s15 + $0x251] sm:$0xff]
  %v288 = vld [vmem:[%s15 + $0x261] sm:$0xff]
  %v289 = vld [vmem:[%s15 + $0x271] sm:$0xff]
  %v290 = vld [vmem:[%s15 + $0x281] sm:$0xff]
  %v291 = vld [vmem:[%s15 + $0x291] sm:$0xff]
  %v292 = vld [vmem:[%s15 + $0x2a1] sm:$0xff]
  %v293 = vld [vmem:[%s15 + $0x2b1] sm:$0xff]
  %s294 = scalar_lea.vmem %s1, 256
  %v295 = vld [vmem:[%s294] sm:$0xff]
  %v296 = vld [vmem:[%s294 + $0x8] sm:$0xff]
  %v297 = vld [vmem:[%s294 + $0x10] sm:$0xff]
  %v298 = vld [vmem:[%s294 + $0x18] sm:$0xff]
  %v299 = vld [vmem:[%s294 + $0x20] sm:$0xff]
  %v300 = vld [vmem:[%s294 + $0x28] sm:$0xff]
  %v301 = vld [vmem:[%s294 + $0x30] sm:$0xff]
  %v302 = vld [vmem:[%s294 + $0x38] sm:$0xff]
  %v303 = vld [vmem:[%s294 + $0x40] sm:$0xff]
  %v304 = vld [vmem:[%s294 + $0x48] sm:$0xff]
  %v305 = vld [vmem:[%s294 + $0x50] sm:$0xff]
  %v306 = vld [vmem:[%s294 + $0x58] sm:$0xff]
  %v307 = vld [vmem:[%s294 + $0x60] sm:$0xff]
  %v308 = vld [vmem:[%s294 + $0x68] sm:$0xff]
  %v309 = vld [vmem:[%s294 + $0x70] sm:$0xff]
  %v310 = vld [vmem:[%s294 + $0x78] sm:$0xff]
  %311 = vmatpush.msra.mxu0 %v310
  %312 = vmatpush.msra.mxu0 %v309
  %313 = vmatpush.msra.mxu0 %v308
  %314 = vmatpush.msra.mxu0 %v307
  %315 = vmatpush.msra.mxu0 %v306
  %316 = vmatpush.msra.mxu0 %v305
  %317 = vmatpush.msra.mxu0 %v304
  %318 = vmatpush.msra.mxu0 %v303
  %319 = vmatpush.msra.mxu0 %v302
  %320 = vmatpush.msra.mxu0 %v301
  %321 = vmatpush.msra.mxu0 %v300
  %322 = vmatpush.msra.mxu0 %v299
  %323 = vmatpush.msra.mxu0 %v298
  %324 = vmatpush.msra.mxu0 %v297
  %325 = vmatpush.msra.mxu0 %v296
  %326 = vmatpush.msra.mxu0 %v295
  %327 = vmatmul.f32.gmra.mxu0 %v278
  %v328 = vpop.f32.mrf.mxu0
  %v329 = vadd.f32 0.0, %v328
  %330 = vmatmul.f32.gmra.mxu0 %v279
  %v331 = vpop.f32.mrf.mxu0
  %v332 = vadd.f32 0.0, %v331
  %333 = vmatmul.f32.gmra.mxu0 %v280
  %v334 = vpop.f32.mrf.mxu0
  %v335 = vadd.f32 0.0, %v334
  %336 = vmatmul.f32.gmra.mxu0 %v281
  %v337 = vpop.f32.mrf.mxu0
  %v338 = vadd.f32 0.0, %v337
  %339 = vmatmul.f32.gmra.mxu0 %v282
  %v340 = vpop.f32.mrf.mxu0
  %v341 = vadd.f32 0.0, %v340
  %342 = vmatmul.f32.gmra.mxu0 %v283
  %v343 = vpop.f32.mrf.mxu0
  %v344 = vadd.f32 0.0, %v343
  %345 = vmatmul.f32.gmra.mxu0 %v284
  %v346 = vpop.f32.mrf.mxu0
  %v347 = vadd.f32 0.0, %v346
  %348 = vmatmul.f32.gmra.mxu0 %v285
  %v349 = vpop.f32.mrf.mxu0
  %v350 = vadd.f32 0.0, %v349
  %351 = vmatmul.f32.gmra.mxu0 %v286
  %v352 = vpop.f32.mrf.mxu0
  %v353 = vadd.f32 0.0, %v352
  %354 = vmatmul.f32.gmra.mxu0 %v287
  %v355 = vpop.f32.mrf.mxu0
  %v356 = vadd.f32 0.0, %v355
  %357 = vmatmul.f32.gmra.mxu0 %v288
  %v358 = vpop.f32.mrf.mxu0
  %v359 = vadd.f32 0.0, %v358
  %360 = vmatmul.f32.gmra.mxu0 %v289
  %v361 = vpop.f32.mrf.mxu0
  %v362 = vadd.f32 0.0, %v361
  %363 = vmatmul.f32.gmra.mxu0 %v290
  %v364 = vpop.f32.mrf.mxu0
  %v365 = vadd.f32 0.0, %v364
  %366 = vmatmul.f32.gmra.mxu0 %v291
  %v367 = vpop.f32.mrf.mxu0
  %v368 = vadd.f32 0.0, %v367
  %369 = vmatmul.f32.gmra.mxu0 %v292
  %v370 = vpop.f32.mrf.mxu0
  %v371 = vadd.f32 0.0, %v370
  %372 = vmatmul.f32.gmra.mxu0 %v293
  %v373 = vpop.f32.mrf.mxu0
  %v374 = vadd.f32 0.0, %v373
  %375 = vdwg.mxu0
  %v376 = vld [vmem:[#allocation2] sm:$0xff]
  %v377 = vld [vmem:[#allocation2 + $0x8] sm:$0xff]
  %v378 = vld [vmem:[#allocation2 + $0x10] sm:$0xff]
  %v379 = vld [vmem:[#allocation2 + $0x18] sm:$0xff]
  %v380 = vld [vmem:[#allocation2 + $0x20] sm:$0xff]
  %v381 = vld [vmem:[#allocation2 + $0x28] sm:$0xff]
  %v382 = vld [vmem:[#allocation2 + $0x30] sm:$0xff]
  %v383 = vld [vmem:[#allocation2 + $0x38] sm:$0xff]
  %v384 = vld [vmem:[#allocation2 + $0x40] sm:$0xff]
  %v385 = vld [vmem:[#allocation2 + $0x48] sm:$0xff]
  %v386 = vld [vmem:[#allocation2 + $0x50] sm:$0xff]
  %v387 = vld [vmem:[#allocation2 + $0x58] sm:$0xff]
  %v388 = vld [vmem:[#allocation2 + $0x60] sm:$0xff]
  %v389 = vld [vmem:[#allocation2 + $0x68] sm:$0xff]
  %v390 = vld [vmem:[#allocation2 + $0x70] sm:$0xff]
  %v391 = vld [vmem:[#allocation2 + $0x78] sm:$0xff]
  %v392 = vadd.f32 %v376, %v329
  %v393 = vadd.f32 %v377, %v332
  %v394 = vadd.f32 %v378, %v335
  %v395 = vadd.f32 %v379, %v338
  %v396 = vadd.f32 %v380, %v341
  %v397 = vadd.f32 %v381, %v344
  %v398 = vadd.f32 %v382, %v347
  %v399 = vadd.f32 %v383, %v350
  %v400 = vadd.f32 %v384, %v353
  %v401 = vadd.f32 %v385, %v356
  %v402 = vadd.f32 %v386, %v359
  %v403 = vadd.f32 %v387, %v362
  %v404 = vadd.f32 %v388, %v365
  %v405 = vadd.f32 %v389, %v368
  %v406 = vadd.f32 %v390, %v371
  %v407 = vadd.f32 %v391, %v374
  %408 = vst [vmem:[#allocation2] sm:$0xff] %v392
  %409 = vst [vmem:[#allocation2 + $0x8] sm:$0xff] %v393
  %410 = vst [vmem:[#allocation2 + $0x10] sm:$0xff] %v394
  %411 = vst [vmem:[#allocation2 + $0x18] sm:$0xff] %v395
  %412 = vst [vmem:[#allocation2 + $0x20] sm:$0xff] %v396
  %413 = vst [vmem:[#allocation2 + $0x28] sm:$0xff] %v397
  %414 = vst [vmem:[#allocation2 + $0x30] sm:$0xff] %v398
  %415 = vst [vmem:[#allocation2 + $0x38] sm:$0xff] %v399
  %416 = vst [vmem:[#allocation2 + $0x40] sm:$0xff] %v400
  %417 = vst [vmem:[#allocation2 + $0x48] sm:$0xff] %v401
  %418 = vst [vmem:[#allocation2 + $0x50] sm:$0xff] %v402
  %419 = vst [vmem:[#allocation2 + $0x58] sm:$0xff] %v403
  %420 = vst [vmem:[#allocation2 + $0x60] sm:$0xff] %v404
  %421 = vst [vmem:[#allocation2 + $0x68] sm:$0xff] %v405
  %422 = vst [vmem:[#allocation2 + $0x70] sm:$0xff] %v406
  %423 = vst [vmem:[#allocation2 + $0x78] sm:$0xff] %v407
  %s424 = sadd.s32 %s13, 18
  %s425 = smul.u32 %s424, 16
  %s426 = scalar_lea.vmem %s0, %s425
  %v427 = vld [vmem:[%s426] sm:$0xff]
  %v428 = vld [vmem:[%s426 + $0x10] sm:$0xff]
  %v429 = vld [vmem:[%s426 + $0x20] sm:$0xff]
  %v430 = vld [vmem:[%s426 + $0x30] sm:$0xff]
  %v431 = vld [vmem:[%s426 + $0x40] sm:$0xff]
  %v432 = vld [vmem:[%s426 + $0x50] sm:$0xff]
  %v433 = vld [vmem:[%s426 + $0x60] sm:$0xff]
  %v434 = vld [vmem:[%s426 + $0x70] sm:$0xff]
  %v435 = vld [vmem:[%s426 + $0x240] sm:$0xff]
  %v436 = vld [vmem:[%s426 + $0x250] sm:$0xff]
  %v437 = vld [vmem:[%s426 + $0x260] sm:$0xff]
  %v438 = vld [vmem:[%s426 + $0x270] sm:$0xff]
  %v439 = vld [vmem:[%s426 + $0x280] sm:$0xff]
  %v440 = vld [vmem:[%s426 + $0x290] sm:$0xff]
  %v441 = vld [vmem:[%s426 + $0x2a0] sm:$0xff]
  %v442 = vld [vmem:[%s426 + $0x2b0] sm:$0xff]
  %s443 = scalar_lea.vmem %s1, 384
  %v444 = vld [vmem:[%s443] sm:$0xff]
  %v445 = vld [vmem:[%s443 + $0x8] sm:$0xff]
  %v446 = vld [vmem:[%s443 + $0x10] sm:$0xff]
  %v447 = vld [vmem:[%s443 + $0x18] sm:$0xff]
  %v448 = vld [vmem:[%s443 + $0x20] sm:$0xff]
  %v449 = vld [vmem:[%s443 + $0x28] sm:$0xff]
  %v450 = vld [vmem:[%s443 + $0x30] sm:$0xff]
  %v451 = vld [vmem:[%s443 + $0x38] sm:$0xff]
  %v452 = vld [vmem:[%s443 + $0x40] sm:$0xff]
  %v453 = vld [vmem:[%s443 + $0x48] sm:$0xff]
  %v454 = vld [vmem:[%s443 + $0x50] sm:$0xff]
  %v455 = vld [vmem:[%s443 + $0x58] sm:$0xff]
  %v456 = vld [vmem:[%s443 + $0x60] sm:$0xff]
  %v457 = vld [vmem:[%s443 + $0x68] sm:$0xff]
  %v458 = vld [vmem:[%s443 + $0x70] sm:$0xff]
  %v459 = vld [vmem:[%s443 + $0x78] sm:$0xff]
  %460 = vmatpush.msra.mxu0 %v459
  %461 = vmatpush.msra.mxu0 %v458
  %462 = vmatpush.msra.mxu0 %v457
  %463 = vmatpush.msra.mxu0 %v456
  %464 = vmatpush.msra.mxu0 %v455
  %465 = vmatpush.msra.mxu0 %v454
  %466 = vmatpush.msra.mxu0 %v453
  %467 = vmatpush.msra.mxu0 %v452
  %468 = vmatpush.msra.mxu0 %v451
  %469 = vmatpush.msra.mxu0 %v450
  %470 = vmatpush.msra.mxu0 %v449
  %471 = vmatpush.msra.mxu0 %v448
  %472 = vmatpush.msra.mxu0 %v447
  %473 = vmatpush.msra.mxu0 %v446
  %474 = vmatpush.msra.mxu0 %v445
  %475 = vmatpush.msra.mxu0 %v444
  %476 = vmatmul.f32.gmra.mxu0 %v427
  %v477 = vpop.f32.mrf.mxu0
  %v478 = vadd.f32 0.0, %v477
  %479 = vmatmul.f32.gmra.mxu0 %v428
  %v480 = vpop.f32.mrf.mxu0
  %v481 = vadd.f32 0.0, %v480
  %482 = vmatmul.f32.gmra.mxu0 %v429
  %v483 = vpop.f32.mrf.mxu0
  %v484 = vadd.f32 0.0, %v483
  %485 = vmatmul.f32.gmra.mxu0 %v430
  %v486 = vpop.f32.mrf.mxu0
  %v487 = vadd.f32 0.0, %v486
  %488 = vmatmul.f32.gmra.mxu0 %v431
  %v489 = vpop.f32.mrf.mxu0
  %v490 = vadd.f32 0.0, %v489
  %491 = vmatmul.f32.gmra.mxu0 %v432
  %v492 = vpop.f32.mrf.mxu0
  %v493 = vadd.f32 0.0, %v492
  %494 = vmatmul.f32.gmra.mxu0 %v433
  %v495 = vpop.f32.mrf.mxu0
  %v496 = vadd.f32 0.0, %v495
  %497 = vmatmul.f32.gmra.mxu0 %v434
  %v498 = vpop.f32.mrf.mxu0
  %v499 = vadd.f32 0.0, %v498
  %500 = vmatmul.f32.gmra.mxu0 %v435
  %v501 = vpop.f32.mrf.mxu0
  %v502 = vadd.f32 0.0, %v501
  %503 = vmatmul.f32.gmra.mxu0 %v436
  %v504 = vpop.f32.mrf.mxu0
  %v505 = vadd.f32 0.0, %v504
  %506 = vmatmul.f32.gmra.mxu0 %v437
  %v507 = vpop.f32.mrf.mxu0
  %v508 = vadd.f32 0.0, %v507
  %509 = vmatmul.f32.gmra.mxu0 %v438
  %v510 = vpop.f32.mrf.mxu0
  %v511 = vadd.f32 0.0, %v510
  %512 = vmatmul.f32.gmra.mxu0 %v439
  %v513 = vpop.f32.mrf.mxu0
  %v514 = vadd.f32 0.0, %v513
  %515 = vmatmul.f32.gmra.mxu0 %v440
  %v516 = vpop.f32.mrf.mxu0
  %v517 = vadd.f32 0.0, %v516
  %518 = vmatmul.f32.gmra.mxu0 %v441
  %v519 = vpop.f32.mrf.mxu0
  %v520 = vadd.f32 0.0, %v519
  %521 = vmatmul.f32.gmra.mxu0 %v442
  %v522 = vpop.f32.mrf.mxu0
  %v523 = vadd.f32 0.0, %v522
  %524 = vdwg.mxu0
  %v525 = vld [vmem:[#allocation2] sm:$0xff]
  %v526 = vld [vmem:[#allocation2 + $0x8] sm:$0xff]
  %v527 = vld [vmem:[#allocation2 + $0x10] sm:$0xff]
  %v528 = vld [vmem:[#allocation2 + $0x18] sm:$0xff]
  %v529 = vld [vmem:[#allocation2 + $0x20] sm:$0xff]
  %v530 = vld [vmem:[#allocation2 + $0x28] sm:$0xff]
  %v531 = vld [vmem:[#allocation2 + $0x30] sm:$0xff]
  %v532 = vld [vmem:[#allocation2 + $0x38] sm:$0xff]
  %v533 = vld [vmem:[#allocation2 + $0x40] sm:$0xff]
  %v534 = vld [vmem:[#allocation2 + $0x48] sm:$0xff]
  %v535 = vld [vmem:[#allocation2 + $0x50] sm:$0xff]
  %v536 = vld [vmem:[#allocation2 + $0x58] sm:$0xff]
  %v537 = vld [vmem:[#allocation2 + $0x60] sm:$0xff]
  %v538 = vld [vmem:[#allocation2 + $0x68] sm:$0xff]
  %v539 = vld [vmem:[#allocation2 + $0x70] sm:$0xff]
  %v540 = vld [vmem:[#allocation2 + $0x78] sm:$0xff]
  %v541 = vadd.f32 %v525, %v478
  %v542 = vadd.f32 %v526, %v481
  %v543 = vadd.f32 %v527, %v484
  %v544 = vadd.f32 %v528, %v487
  %v545 = vadd.f32 %v529, %v490
  %v546 = vadd.f32 %v530, %v493
  %v547 = vadd.f32 %v531, %v496
  %v548 = vadd.f32 %v532, %v499
  %v549 = vadd.f32 %v533, %v502
  %v550 = vadd.f32 %v534, %v505
  %v551 = vadd.f32 %v535, %v508
  %v552 = vadd.f32 %v536, %v511
  %v553 = vadd.f32 %v537, %v514
  %v554 = vadd.f32 %v538, %v517
  %v555 = vadd.f32 %v539, %v520
  %v556 = vadd.f32 %v540, %v523
  %557 = vst [vmem:[#allocation2] sm:$0xff] %v541
  %558 = vst [vmem:[#allocation2 + $0x8] sm:$0xff] %v542
  %559 = vst [vmem:[#allocation2 + $0x10] sm:$0xff] %v543
  %560 = vst [vmem:[#allocation2 + $0x18] sm:$0xff] %v544
  %561 = vst [vmem:[#allocation2 + $0x20] sm:$0xff] %v545
  %562 = vst [vmem:[#allocation2 + $0x28] sm:$0xff] %v546
  %563 = vst [vmem:[#allocation2 + $0x30] sm:$0xff] %v547
  %564 = vst [vmem:[#allocation2 + $0x38] sm:$0xff] %v548
  %565 = vst [vmem:[#allocation2 + $0x40] sm:$0xff] %v549
  %566 = vst [vmem:[#allocation2 + $0x48] sm:$0xff] %v550
  %567 = vst [vmem:[#allocation2 + $0x50] sm:$0xff] %v551
  %568 = vst [vmem:[#allocation2 + $0x58] sm:$0xff] %v552
  %569 = vst [vmem:[#allocation2 + $0x60] sm:$0xff] %v553
  %570 = vst [vmem:[#allocation2 + $0x68] sm:$0xff] %v554
  %571 = vst [vmem:[#allocation2 + $0x70] sm:$0xff] %v555
  %572 = vst [vmem:[#allocation2 + $0x78] sm:$0xff] %v556
  %s573 = sadd.s32 %s13, 27
  %s574 = smul.u32 %s573, 16
  %s575 = scalar_lea.vmem %s0, %s574
  %v576 = vld [vmem:[%s575] sm:$0xff]
  %v577 = vld [vmem:[%s575 + $0x10] sm:$0xff]
  %v578 = vld [vmem:[%s575 + $0x20] sm:$0xff]
  %v579 = vld [vmem:[%s575 + $0x30] sm:$0xff]
  %v580 = vld [vmem:[%s575 + $0x40] sm:$0xff]
  %v581 = vld [vmem:[%s575 + $0x50] sm:$0xff]
  %v582 = vld [vmem:[%s575 + $0x60] sm:$0xff]
  %v583 = vld [vmem:[%s575 + $0x70] sm:$0xff]
  %v584 = vld [vmem:[%s575 + $0x240] sm:$0xff]
  %v585 = vld [vmem:[%s575 + $0x250] sm:$0xff]
  %v586 = vld [vmem:[%s575 + $0x260] sm:$0xff]
  %v587 = vld [vmem:[%s575 + $0x270] sm:$0xff]
  %v588 = vld [vmem:[%s575 + $0x280] sm:$0xff]
  %v589 = vld [vmem:[%s575 + $0x290] sm:$0xff]
  %v590 = vld [vmem:[%s575 + $0x2a0] sm:$0xff]
  %v591 = vld [vmem:[%s575 + $0x2b0] sm:$0xff]
  %s592 = scalar_lea.vmem %s1, 512
  %v593 = vld [vmem:[%s592] sm:$0xff]
  %v594 = vld [vmem:[%s592 + $0x8] sm:$0xff]
  %v595 = vld [vmem:[%s592 + $0x10] sm:$0xff]
  %v596 = vld [vmem:[%s592 + $0x18] sm:$0xff]
  %v597 = vld [vmem:[%s592 + $0x20] sm:$0xff]
  %v598 = vld [vmem:[%s592 + $0x28] sm:$0xff]
  %v599 = vld [vmem:[%s592 + $0x30] sm:$0xff]
  %v600 = vld [vmem:[%s592 + $0x38] sm:$0xff]
  %v601 = vld [vmem:[%s592 + $0x40] sm:$0xff]
  %v602 = vld [vmem:[%s592 + $0x48] sm:$0xff]
  %v603 = vld [vmem:[%s592 + $0x50] sm:$0xff]
  %v604 = vld [vmem:[%s592 + $0x58] sm:$0xff]
  %v605 = vld [vmem:[%s592 + $0x60] sm:$0xff]
  %v606 = vld [vmem:[%s592 + $0x68] sm:$0xff]
  %v607 = vld [vmem:[%s592 + $0x70] sm:$0xff]
  %v608 = vld [vmem:[%s592 + $0x78] sm:$0xff]
  %609 = vmatpush.msra.mxu0 %v608
  %610 = vmatpush.msra.mxu0 %v607
  %611 = vmatpush.msra.mxu0 %v606
  %612 = vmatpush.msra.mxu0 %v605
  %613 = vmatpush.msra.mxu0 %v604
  %614 = vmatpush.msra.mxu0 %v603
  %615 = vmatpush.msra.mxu0 %v602
  %616 = vmatpush.msra.mxu0 %v601
  %617 = vmatpush.msra.mxu0 %v600
  %618 = vmatpush.msra.mxu0 %v599
  %619 = vmatpush.msra.mxu0 %v598
  %620 = vmatpush.msra.mxu0 %v597
  %621 = vmatpush.msra.mxu0 %v596
  %622 = vmatpush.msra.mxu0 %v595
  %623 = vmatpush.msra.mxu0 %v594
  %624 = vmatpush.msra.mxu0 %v593
  %625 = vmatmul.f32.gmra.mxu0 %v576
  %v626 = vpop.f32.mrf.mxu0
  %v627 = vadd.f32 0.0, %v626
  %628 = vmatmul.f32.gmra.mxu0 %v577
  %v629 = vpop.f32.mrf.mxu0
  %v630 = vadd.f32 0.0, %v629
  %631 = vmatmul.f32.gmra.mxu0 %v578
  %v632 = vpop.f32.mrf.mxu0
  %v633 = vadd.f32 0.0, %v632
  %634 = vmatmul.f32.gmra.mxu0 %v579
  %v635 = vpop.f32.mrf.mxu0
  %v636 = vadd.f32 0.0, %v635
  %637 = vmatmul.f32.gmra.mxu0 %v580
  %v638 = vpop.f32.mrf.mxu0
  %v639 = vadd.f32 0.0, %v638
  %640 = vmatmul.f32.gmra.mxu0 %v581
  %v641 = vpop.f32.mrf.mxu0
  %v642 = vadd.f32 0.0, %v641
  %643 = vmatmul.f32.gmra.mxu0 %v582
  %v644 = vpop.f32.mrf.mxu0
  %v645 = vadd.f32 0.0, %v644
  %646 = vmatmul.f32.gmra.mxu0 %v583
  %v647 = vpop.f32.mrf.mxu0
  %v648 = vadd.f32 0.0, %v647
  %649 = vmatmul.f32.gmra.mxu0 %v584
  %v650 = vpop.f32.mrf.mxu0
  %v651 = vadd.f32 0.0, %v650
  %652 = vmatmul.f32.gmra.mxu0 %v585
  %v653 = vpop.f32.mrf.mxu0
  %v654 = vadd.f32 0.0, %v653
  %655 = vmatmul.f32.gmra.mxu0 %v586
  %v656 = vpop.f32.mrf.mxu0
  %v657 = vadd.f32 0.0, %v656
  %658 = vmatmul.f32.gmra.mxu0 %v587
  %v659 = vpop.f32.mrf.mxu0
  %v660 = vadd.f32 0.0, %v659
  %661 = vmatmul.f32.gmra.mxu0 %v588
  %v662 = vpop.f32.mrf.mxu0
  %v663 = vadd.f32 0.0, %v662
  %664 = vmatmul.f32.gmra.mxu0 %v589
  %v665 = vpop.f32.mrf.mxu0
  %v666 = vadd.f32 0.0, %v665
  %667 = vmatmul.f32.gmra.mxu0 %v590
  %v668 = vpop.f32.mrf.mxu0
  %v669 = vadd.f32 0.0, %v668
  %670 = vmatmul.f32.gmra.mxu0 %v591
  %v671 = vpop.f32.mrf.mxu0
  %v672 = vadd.f32 0.0, %v671
  %673 = vdwg.mxu0
  %v674 = vld [vmem:[#allocation2] sm:$0xff]
  %v675 = vld [vmem:[#allocation2 + $0x8] sm:$0xff]
  %v676 = vld [vmem:[#allocation2 + $0x10] sm:$0xff]
  %v677 = vld [vmem:[#allocation2 + $0x18] sm:$0xff]
  %v678 = vld [vmem:[#allocation2 + $0x20] sm:$0xff]
  %v679 = vld [vmem:[#allocation2 + $0x28] sm:$0xff]
  %v680 = vld [vmem:[#allocation2 + $0x30] sm:$0xff]
  %v681 = vld [vmem:[#allocation2 + $0x38] sm:$0xff]
  %v682 = vld [vmem:[#allocation2 + $0x40] sm:$0xff]
  %v683 = vld [vmem:[#allocation2 + $0x48] sm:$0xff]
  %v684 = vld [vmem:[#allocation2 + $0x50] sm:$0xff]
  %v685 = vld [vmem:[#allocation2 + $0x58] sm:$0xff]
  %v686 = vld [vmem:[#allocation2 + $0x60] sm:$0xff]
  %v687 = vld [vmem:[#allocation2 + $0x68] sm:$0xff]
  %v688 = vld [vmem:[#allocation2 + $0x70] sm:$0xff]
  %v689 = vld [vmem:[#allocation2 + $0x78] sm:$0xff]
  %v690 = vadd.f32 %v674, %v627
  %v691 = vadd.f32 %v675, %v630
  %v692 = vadd.f32 %v676, %v633
  %v693 = vadd.f32 %v677, %v636
  %v694 = vadd.f32 %v678, %v639
  %v695 = vadd.f32 %v679, %v642
  %v696 = vadd.f32 %v680, %v645
  %v697 = vadd.f32 %v681, %v648
  %v698 = vadd.f32 %v682, %v651
  %v699 = vadd.f32 %v683, %v654
  %v700 = vadd.f32 %v684, %v657
  %v701 = vadd.f32 %v685, %v660
  %v702 = vadd.f32 %v686, %v663
  %v703 = vadd.f32 %v687, %v666
  %v704 = vadd.f32 %v688, %v669
  %v705 = vadd.f32 %v689, %v672
  %706 = vst [vmem:[#allocation2] sm:$0xff] %v690
  %707 = vst [vmem:[#allocation2 + $0x8] sm:$0xff] %v691
  %708 = vst [vmem:[#allocation2 + $0x10] sm:$0xff] %v692
  %709 = vst [vmem:[#allocation2 + $0x18] sm:$0xff] %v693
  %710 = vst [vmem:[#allocation2 + $0x20] sm:$0xff] %v694
  %711 = vst [vmem:[#allocation2 + $0x28] sm:$0xff] %v695
  %712 = vst [vmem:[#allocation2 + $0x30] sm:$0xff] %v696
  %713 = vst [vmem:[#allocation2 + $0x38] sm:$0xff] %v697
  %714 = vst [vmem:[#allocation2 + $0x40] sm:$0xff] %v698
  %715 = vst [vmem:[#allocation2 + $0x48] sm:$0xff] %v699
  %716 = vst [vmem:[#allocation2 + $0x50] sm:$0xff] %v700
  %717 = vst [vmem:[#allocation2 + $0x58] sm:$0xff] %v701
  %718 = vst [vmem:[#allocation2 + $0x60] sm:$0xff] %v702
  %719 = vst [vmem:[#allocation2 + $0x68] sm:$0xff] %v703
  %720 = vst [vmem:[#allocation2 + $0x70] sm:$0xff] %v704
  %721 = vst [vmem:[#allocation2 + $0x78] sm:$0xff] %v705
  %v722 = vld [vmem:[%s426 + $0x1] sm:$0xff]
  %v723 = vld [vmem:[%s426 + $0x11] sm:$0xff]
  %v724 = vld [vmem:[%s426 + $0x21] sm:$0xff]
  %v725 = vld [vmem:[%s426 + $0x31] sm:$0xff]
  %v726 = vld [vmem:[%s426 + $0x41] sm:$0xff]
  %v727 = vld [vmem:[%s426 + $0x51] sm:$0xff]
  %v728 = vld [vmem:[%s426 + $0x61] sm:$0xff]
  %v729 = vld [vmem:[%s426 + $0x71] sm:$0xff]
  %v730 = vld [vmem:[%s426 + $0x241] sm:$0xff]
  %v731 = vld [vmem:[%s426 + $0x251] sm:$0xff]
  %v732 = vld [vmem:[%s426 + $0x261] sm:$0xff]
  %v733 = vld [vmem:[%s426 + $0x271] sm:$0xff]
  %v734 = vld [vmem:[%s426 + $0x281] sm:$0xff]
  %v735 = vld [vmem:[%s426 + $0x291] sm:$0xff]
  %v736 = vld [vmem:[%s426 + $0x2a1] sm:$0xff]
  %v737 = vld [vmem:[%s426 + $0x2b1] sm:$0xff]
  %s738 = scalar_lea.vmem %s1, 640
  %v739 = vld [vmem:[%s738] sm:$0xff]
  %v740 = vld [vmem:[%s738 + $0x8] sm:$0xff]
  %v741 = vld [vmem:[%s738 + $0x10] sm:$0xff]
  %v742 = vld [vmem:[%s738 + $0x18] sm:$0xff]
  %v743 = vld [vmem:[%s738 + $0x20] sm:$0xff]
  %v744 = vld [vmem:[%s738 + $0x28] sm:$0xff]
  %v745 = vld [vmem:[%s738 + $0x30] sm:$0xff]
  %v746 = vld [vmem:[%s738 + $0x38] sm:$0xff]
  %v747 = vld [vmem:[%s738 + $0x40] sm:$0xff]
  %v748 = vld [vmem:[%s738 + $0x48] sm:$0xff]
  %v749 = vld [vmem:[%s738 + $0x50] sm:$0xff]
  %v750 = vld [vmem:[%s738 + $0x58] sm:$0xff]
  %v751 = vld [vmem:[%s738 + $0x60] sm:$0xff]
  %v752 = vld [vmem:[%s738 + $0x68] sm:$0xff]
  %v753 = vld [vmem:[%s738 + $0x70] sm:$0xff]
  %v754 = vld [vmem:[%s738 + $0x78] sm:$0xff]
  %755 = vmatpush.msra.mxu0 %v754
  %756 = vmatpush.msra.mxu0 %v753
  %757 = vmatpush.msra.mxu0 %v752
  %758 = vmatpush.msra.mxu0 %v751
  %759 = vmatpush.msra.mxu0 %v750
  %760 = vmatpush.msra.mxu0 %v749
  %761 = vmatpush.msra.mxu0 %v748
  %762 = vmatpush.msra.mxu0 %v747
  %763 = vmatpush.msra.mxu0 %v746
  %764 = vmatpush.msra.mxu0 %v745
  %765 = vmatpush.msra.mxu0 %v744
  %766 = vmatpush.msra.mxu0 %v743
  %767 = vmatpush.msra.mxu0 %v742
  %768 = vmatpush.msra.mxu0 %v741
  %769 = vmatpush.msra.mxu0 %v740
  %770 = vmatpush.msra.mxu0 %v739
  %771 = vmatmul.f32.gmra.mxu0 %v722
  %v772 = vpop.f32.mrf.mxu0
  %v773 = vadd.f32 0.0, %v772
  %774 = vmatmul.f32.gmra.mxu0 %v723
  %v775 = vpop.f32.mrf.mxu0
  %v776 = vadd.f32 0.0, %v775
  %777 = vmatmul.f32.gmra.mxu0 %v724
  %v778 = vpop.f32.mrf.mxu0
  %v779 = vadd.f32 0.0, %v778
  %780 = vmatmul.f32.gmra.mxu0 %v725
  %v781 = vpop.f32.mrf.mxu0
  %v782 = vadd.f32 0.0, %v781
  %783 = vmatmul.f32.gmra.mxu0 %v726
  %v784 = vpop.f32.mrf.mxu0
  %v785 = vadd.f32 0.0, %v784
  %786 = vmatmul.f32.gmra.mxu0 %v727
  %v787 = vpop.f32.mrf.mxu0
  %v788 = vadd.f32 0.0, %v787
  %789 = vmatmul.f32.gmra.mxu0 %v728
  %v790 = vpop.f32.mrf.mxu0
  %v791 = vadd.f32 0.0, %v790
  %792 = vmatmul.f32.gmra.mxu0 %v729
  %v793 = vpop.f32.mrf.mxu0
  %v794 = vadd.f32 0.0, %v793
  %795 = vmatmul.f32.gmra.mxu0 %v730
  %v796 = vpop.f32.mrf.mxu0
  %v797 = vadd.f32 0.0, %v796
  %798 = vmatmul.f32.gmra.mxu0 %v731
  %v799 = vpop.f32.mrf.mxu0
  %v800 = vadd.f32 0.0, %v799
  %801 = vmatmul.f32.gmra.mxu0 %v732
  %v802 = vpop.f32.mrf.mxu0
  %v803 = vadd.f32 0.0, %v802
  %804 = vmatmul.f32.gmra.mxu0 %v733
  %v805 = vpop.f32.mrf.mxu0
  %v806 = vadd.f32 0.0, %v805
  %807 = vmatmul.f32.gmra.mxu0 %v734
  %v808 = vpop.f32.mrf.mxu0
  %v809 = vadd.f32 0.0, %v808
  %810 = vmatmul.f32.gmra.mxu0 %v735
  %v811 = vpop.f32.mrf.mxu0
  %v812 = vadd.f32 0.0, %v811
  %813 = vmatmul.f32.gmra.mxu0 %v736
  %v814 = vpop.f32.mrf.mxu0
  %v815 = vadd.f32 0.0, %v814
  %816 = vmatmul.f32.gmra.mxu0 %v737
  %v817 = vpop.f32.mrf.mxu0
  %v818 = vadd.f32 0.0, %v817
  %819 = vdwg.mxu0
  %v820 = vld [vmem:[#allocation2] sm:$0xff]
  %v821 = vld [vmem:[#allocation2 + $0x8] sm:$0xff]
  %v822 = vld [vmem:[#allocation2 + $0x10] sm:$0xff]
  %v823 = vld [vmem:[#allocation2 + $0x18] sm:$0xff]
  %v824 = vld [vmem:[#allocation2 + $0x20] sm:$0xff]
  %v825 = vld [vmem:[#allocation2 + $0x28] sm:$0xff]
  %v826 = vld [vmem:[#allocation2 + $0x30] sm:$0xff]
  %v827 = vld [vmem:[#allocation2 + $0x38] sm:$0xff]
  %v828 = vld [vmem:[#allocation2 + $0x40] sm:$0xff]
  %v829 = vld [vmem:[#allocation2 + $0x48] sm:$0xff]
  %v830 = vld [vmem:[#allocation2 + $0x50] sm:$0xff]
  %v831 = vld [vmem:[#allocation2 + $0x58] sm:$0xff]
  %v832 = vld [vmem:[#allocation2 + $0x60] sm:$0xff]
  %v833 = vld [vmem:[#allocation2 + $0x68] sm:$0xff]
  %v834 = vld [vmem:[#allocation2 + $0x70] sm:$0xff]
  %v835 = vld [vmem:[#allocation2 + $0x78] sm:$0xff]
  %v836 = vadd.f32 %v820, %v773
  %v837 = vadd.f32 %v821, %v776
  %v838 = vadd.f32 %v822, %v779
  %v839 = vadd.f32 %v823, %v782
  %v840 = vadd.f32 %v824, %v785
  %v841 = vadd.f32 %v825, %v788
  %v842 = vadd.f32 %v826, %v791
  %v843 = vadd.f32 %v827, %v794
  %v844 = vadd.f32 %v828, %v797
  %v845 = vadd.f32 %v829, %v800
  %v846 = vadd.f32 %v830, %v803
  %v847 = vadd.f32 %v831, %v806
  %v848 = vadd.f32 %v832, %v809
  %v849 = vadd.f32 %v833, %v812
  %v850 = vadd.f32 %v834, %v815
  %v851 = vadd.f32 %v835, %v818
  %852 = vst [vmem:[#allocation2] sm:$0xff] %v836
  %853 = vst [vmem:[#allocation2 + $0x8] sm:$0xff] %v837
  %854 = vst [vmem:[#allocation2 + $0x10] sm:$0xff] %v838
  %855 = vst [vmem:[#allocation2 + $0x18] sm:$0xff] %v839
  %856 = vst [vmem:[#allocation2 + $0x20] sm:$0xff] %v840
  %857 = vst [vmem:[#allocation2 + $0x28] sm:$0xff] %v841
  %858 = vst [vmem:[#allocation2 + $0x30] sm:$0xff] %v842
  %859 = vst [vmem:[#allocation2 + $0x38] sm:$0xff] %v843
  %860 = vst [vmem:[#allocation2 + $0x40] sm:$0xff] %v844
  %861 = vst [vmem:[#allocation2 + $0x48] sm:$0xff] %v845
  %862 = vst [vmem:[#allocation2 + $0x50] sm:$0xff] %v846
  %863 = vst [vmem:[#allocation2 + $0x58] sm:$0xff] %v847
  %864 = vst [vmem:[#allocation2 + $0x60] sm:$0xff] %v848
  %865 = vst [vmem:[#allocation2 + $0x68] sm:$0xff] %v849
  %866 = vst [vmem:[#allocation2 + $0x70] sm:$0xff] %v850
  %867 = vst [vmem:[#allocation2 + $0x78] sm:$0xff] %v851
  %s868 = sadd.s32 %s13, 1
  %s869 = smul.u32 %s868, 16
  %s870 = scalar_lea.vmem %s0, %s869
  %v871 = vld [vmem:[%s870] sm:$0xff]
  %v872 = vld [vmem:[%s870 + $0x10] sm:$0xff]
  %v873 = vld [vmem:[%s870 + $0x20] sm:$0xff]
  %v874 = vld [vmem:[%s870 + $0x30] sm:$0xff]
  %v875 = vld [vmem:[%s870 + $0x40] sm:$0xff]
  %v876 = vld [vmem:[%s870 + $0x50] sm:$0xff]
  %v877 = vld [vmem:[%s870 + $0x60] sm:$0xff]
  %v878 = vld [vmem:[%s870 + $0x70] sm:$0xff]
  %v879 = vld [vmem:[%s870 + $0x240] sm:$0xff]
  %v880 = vld [vmem:[%s870 + $0x250] sm:$0xff]
  %v881 = vld [vmem:[%s870 + $0x260] sm:$0xff]
  %v882 = vld [vmem:[%s870 + $0x270] sm:$0xff]
  %v883 = vld [vmem:[%s870 + $0x280] sm:$0xff]
  %v884 = vld [vmem:[%s870 + $0x290] sm:$0xff]
  %v885 = vld [vmem:[%s870 + $0x2a0] sm:$0xff]
  %v886 = vld [vmem:[%s870 + $0x2b0] sm:$0xff]
  %s887 = scalar_lea.vmem %s1, 768
  %v888 = vld [vmem:[%s887] sm:$0xff]
  %v889 = vld [vmem:[%s887 + $0x8] sm:$0xff]
  %v890 = vld [vmem:[%s887 + $0x10] sm:$0xff]
  %v891 = vld [vmem:[%s887 + $0x18] sm:$0xff]
  %v892 = vld [vmem:[%s887 + $0x20] sm:$0xff]
  %v893 = vld [vmem:[%s887 + $0x28] sm:$0xff]
  %v894 = vld [vmem:[%s887 + $0x30] sm:$0xff]
  %v895 = vld [vmem:[%s887 + $0x38] sm:$0xff]
  %v896 = vld [vmem:[%s887 + $0x40] sm:$0xff]
  %v897 = vld [vmem:[%s887 + $0x48] sm:$0xff]
  %v898 = vld [vmem:[%s887 + $0x50] sm:$0xff]
  %v899 = vld [vmem:[%s887 + $0x58] sm:$0xff]
  %v900 = vld [vmem:[%s887 + $0x60] sm:$0xff]
  %v901 = vld [vmem:[%s887 + $0x68] sm:$0xff]
  %v902 = vld [vmem:[%s887 + $0x70] sm:$0xff]
  %v903 = vld [vmem:[%s887 + $0x78] sm:$0xff]
  %904 = vmatpush.msra.mxu0 %v903
  %905 = vmatpush.msra.mxu0 %v902
  %906 = vmatpush.msra.mxu0 %v901
  %907 = vmatpush.msra.mxu0 %v900
  %908 = vmatpush.msra.mxu0 %v899
  %909 = vmatpush.msra.mxu0 %v898
  %910 = vmatpush.msra.mxu0 %v897
  %911 = vmatpush.msra.mxu0 %v896
  %912 = vmatpush.msra.mxu0 %v895
  %913 = vmatpush.msra.mxu0 %v894
  %914 = vmatpush.msra.mxu0 %v893
  %915 = vmatpush.msra.mxu0 %v892
  %916 = vmatpush.msra.mxu0 %v891
  %917 = vmatpush.msra.mxu0 %v890
  %918 = vmatpush.msra.mxu0 %v889
  %919 = vmatpush.msra.mxu0 %v888
  %920 = vmatmul.f32.gmra.mxu0 %v871
  %v921 = vpop.f32.mrf.mxu0
  %v922 = vadd.f32 0.0, %v921
  %923 = vmatmul.f32.gmra.mxu0 %v872
  %v924 = vpop.f32.mrf.mxu0
  %v925 = vadd.f32 0.0, %v924
  %926 = vmatmul.f32.gmra.mxu0 %v873
  %v927 = vpop.f32.mrf.mxu0
  %v928 = vadd.f32 0.0, %v927
  %929 = vmatmul.f32.gmra.mxu0 %v874
  %v930 = vpop.f32.mrf.mxu0
  %v931 = vadd.f32 0.0, %v930
  %932 = vmatmul.f32.gmra.mxu0 %v875
  %v933 = vpop.f32.mrf.mxu0
  %v934 = vadd.f32 0.0, %v933
  %935 = vmatmul.f32.gmra.mxu0 %v876
  %v936 = vpop.f32.mrf.mxu0
  %v937 = vadd.f32 0.0, %v936
  %938 = vmatmul.f32.gmra.mxu0 %v877
  %v939 = vpop.f32.mrf.mxu0
  %v940 = vadd.f32 0.0, %v939
  %941 = vmatmul.f32.gmra.mxu0 %v878
  %v942 = vpop.f32.mrf.mxu0
  %v943 = vadd.f32 0.0, %v942
  %944 = vmatmul.f32.gmra.mxu0 %v879
  %v945 = vpop.f32.mrf.mxu0
  %v946 = vadd.f32 0.0, %v945
  %947 = vmatmul.f32.gmra.mxu0 %v880
  %v948 = vpop.f32.mrf.mxu0
  %v949 = vadd.f32 0.0, %v948
  %950 = vmatmul.f32.gmra.mxu0 %v881
  %v951 = vpop.f32.mrf.mxu0
  %v952 = vadd.f32 0.0, %v951
  %953 = vmatmul.f32.gmra.mxu0 %v882
  %v954 = vpop.f32.mrf.mxu0
  %v955 = vadd.f32 0.0, %v954
  %956 = vmatmul.f32.gmra.mxu0 %v883
  %v957 = vpop.f32.mrf.mxu0
  %v958 = vadd.f32 0.0, %v957
  %959 = vmatmul.f32.gmra.mxu0 %v884
  %v960 = vpop.f32.mrf.mxu0
  %v961 = vadd.f32 0.0, %v960
  %962 = vmatmul.f32.gmra.mxu0 %v885
  %v963 = vpop.f32.mrf.mxu0
  %v964 = vadd.f32 0.0, %v963
  %965 = vmatmul.f32.gmra.mxu0 %v886
  %v966 = vpop.f32.mrf.mxu0
  %v967 = vadd.f32 0.0, %v966
  %968 = vdwg.mxu0
  %v969 = vld [vmem:[#allocation2] sm:$0xff]
  %v970 = vld [vmem:[#allocation2 + $0x8] sm:$0xff]
  %v971 = vld [vmem:[#allocation2 + $0x10] sm:$0xff]
  %v972 = vld [vmem:[#allocation2 + $0x18] sm:$0xff]
  %v973 = vld [vmem:[#allocation2 + $0x20] sm:$0xff]
  %v974 = vld [vmem:[#allocation2 + $0x28] sm:$0xff]
  %v975 = vld [vmem:[#allocation2 + $0x30] sm:$0xff]
  %v976 = vld [vmem:[#allocation2 + $0x38] sm:$0xff]
  %v977 = vld [vmem:[#allocation2 + $0x40] sm:$0xff]
  %v978 = vld [vmem:[#allocation2 + $0x48] sm:$0xff]
  %v979 = vld [vmem:[#allocation2 + $0x50] sm:$0xff]
  %v980 = vld [vmem:[#allocation2 + $0x58] sm:$0xff]
  %v981 = vld [vmem:[#allocation2 + $0x60] sm:$0xff]
  %v982 = vld [vmem:[#allocation2 + $0x68] sm:$0xff]
  %v983 = vld [vmem:[#allocation2 + $0x70] sm:$0xff]
  %v984 = vld [vmem:[#allocation2 + $0x78] sm:$0xff]
  %v985 = vadd.f32 %v969, %v922
  %v986 = vadd.f32 %v970, %v925
  %v987 = vadd.f32 %v971, %v928
  %v988 = vadd.f32 %v972, %v931
  %v989 = vadd.f32 %v973, %v934
  %v990 = vadd.f32 %v974, %v937
  %v991 = vadd.f32 %v975, %v940
  %v992 = vadd.f32 %v976, %v943
  %v993 = vadd.f32 %v977, %v946
  %v994 = vadd.f32 %v978, %v949
  %v995 = vadd.f32 %v979, %v952
  %v996 = vadd.f32 %v980, %v955
  %v997 = vadd.f32 %v981, %v958
  %v998 = vadd.f32 %v982, %v961
  %v999 = vadd.f32 %v983, %v964
  %v1000 = vadd.f32 %v984, %v967
  %1001 = vst [vmem:[#allocation2] sm:$0xff] %v985
  %1002 = vst [vmem:[#allocation2 + $0x8] sm:$0xff] %v986
  %1003 = vst [vmem:[#allocation2 + $0x10] sm:$0xff] %v987
  %1004 = vst [vmem:[#allocation2 + $0x18] sm:$0xff] %v988
  %1005 = vst [vmem:[#allocation2 + $0x20] sm:$0xff] %v989
  %1006 = vst [vmem:[#allocation2 + $0x28] sm:$0xff] %v990
  %1007 = vst [vmem:[#allocation2 + $0x30] sm:$0xff] %v991
  %1008 = vst [vmem:[#allocation2 + $0x38] sm:$0xff] %v992
  %1009 = vst [vmem:[#allocation2 + $0x40] sm:$0xff] %v993
  %1010 = vst [vmem:[#allocation2 + $0x48] sm:$0xff] %v994
  %1011 = vst [vmem:[#allocation2 + $0x50] sm:$0xff] %v995
  %1012 = vst [vmem:[#allocation2 + $0x58] sm:$0xff] %v996
  %1013 = vst [vmem:[#allocation2 + $0x60] sm:$0xff] %v997
  %1014 = vst [vmem:[#allocation2 + $0x68] sm:$0xff] %v998
  %1015 = vst [vmem:[#allocation2 + $0x70] sm:$0xff] %v999
  %1016 = vst [vmem:[#allocation2 + $0x78] sm:$0xff] %v1000
  %s1017 = sadd.s32 %s13, 10
  %s1018 = smul.u32 %s1017, 16
  %s1019 = scalar_lea.vmem %s0, %s1018
  %v1020 = vld [vmem:[%s1019] sm:$0xff]
  %v1021 = vld [vmem:[%s1019 + $0x10] sm:$0xff]
  %v1022 = vld [vmem:[%s1019 + $0x20] sm:$0xff]
  %v1023 = vld [vmem:[%s1019 + $0x30] sm:$0xff]
  %v1024 = vld [vmem:[%s1019 + $0x40] sm:$0xff]
  %v1025 = vld [vmem:[%s1019 + $0x50] sm:$0xff]
  %v1026 = vld [vmem:[%s1019 + $0x60] sm:$0xff]
  %v1027 = vld [vmem:[%s1019 + $0x70] sm:$0xff]
  %v1028 = vld [vmem:[%s1019 + $0x240] sm:$0xff]
  %v1029 = vld [vmem:[%s1019 + $0x250] sm:$0xff]
  %v1030 = vld [vmem:[%s1019 + $0x260] sm:$0xff]
  %v1031 = vld [vmem:[%s1019 + $0x270] sm:$0xff]
  %v1032 = vld [vmem:[%s1019 + $0x280] sm:$0xff]
  %v1033 = vld [vmem:[%s1019 + $0x290] sm:$0xff]
  %v1034 = vld [vmem:[%s1019 + $0x2a0] sm:$0xff]
  %v1035 = vld [vmem:[%s1019 + $0x2b0] sm:$0xff]
  %s1036 = scalar_lea.vmem %s1, 896
  %v1037 = vld [vmem:[%s1036] sm:$0xff]
  %v1038 = vld [vmem:[%s1036 + $0x8] sm:$0xff]
  %v1039 = vld [vmem:[%s1036 + $0x10] sm:$0xff]
  %v1040 = vld [vmem:[%s1036 + $0x18] sm:$0xff]
  %v1041 = vld [vmem:[%s1036 + $0x20] sm:$0xff]
  %v1042 = vld [vmem:[%s1036 + $0x28] sm:$0xff]
  %v1043 = vld [vmem:[%s1036 + $0x30] sm:$0xff]
  %v1044 = vld [vmem:[%s1036 + $0x38] sm:$0xff]
  %v1045 = vld [vmem:[%s1036 + $0x40] sm:$0xff]
  %v1046 = vld [vmem:[%s1036 + $0x48] sm:$0xff]
  %v1047 = vld [vmem:[%s1036 + $0x50] sm:$0xff]
  %v1048 = vld [vmem:[%s1036 + $0x58] sm:$0xff]
  %v1049 = vld [vmem:[%s1036 + $0x60] sm:$0xff]
  %v1050 = vld [vmem:[%s1036 + $0x68] sm:$0xff]
  %v1051 = vld [vmem:[%s1036 + $0x70] sm:$0xff]
  %v1052 = vld [vmem:[%s1036 + $0x78] sm:$0xff]
  %1053 = vmatpush.msra.mxu0 %v1052
  %1054 = vmatpush.msra.mxu0 %v1051
  %1055 = vmatpush.msra.mxu0 %v1050
  %1056 = vmatpush.msra.mxu0 %v1049
  %1057 = vmatpush.msra.mxu0 %v1048
  %1058 = vmatpush.msra.mxu0 %v1047
  %1059 = vmatpush.msra.mxu0 %v1046
  %1060 = vmatpush.msra.mxu0 %v1045
  %1061 = vmatpush.msra.mxu0 %v1044
  %1062 = vmatpush.msra.mxu0 %v1043
  %1063 = vmatpush.msra.mxu0 %v1042
  %1064 = vmatpush.msra.mxu0 %v1041
  %1065 = vmatpush.msra.mxu0 %v1040
  %1066 = vmatpush.msra.mxu0 %v1039
  %1067 = vmatpush.msra.mxu0 %v1038
  %1068 = vmatpush.msra.mxu0 %v1037
  %1069 = vmatmul.f32.gmra.mxu0 %v1020
  %v1070 = vpop.f32.mrf.mxu0
  %v1071 = vadd.f32 0.0, %v1070
  %1072 = vmatmul.f32.gmra.mxu0 %v1021
  %v1073 = vpop.f32.mrf.mxu0
  %v1074 = vadd.f32 0.0, %v1073
  %1075 = vmatmul.f32.gmra.mxu0 %v1022
  %v1076 = vpop.f32.mrf.mxu0
  %v1077 = vadd.f32 0.0, %v1076
  %1078 = vmatmul.f32.gmra.mxu0 %v1023
  %v1079 = vpop.f32.mrf.mxu0
  %v1080 = vadd.f32 0.0, %v1079
  %1081 = vmatmul.f32.gmra.mxu0 %v1024
  %v1082 = vpop.f32.mrf.mxu0
  %v1083 = vadd.f32 0.0, %v1082
  %1084 = vmatmul.f32.gmra.mxu0 %v1025
  %v1085 = vpop.f32.mrf.mxu0
  %v1086 = vadd.f32 0.0, %v1085
  %1087 = vmatmul.f32.gmra.mxu0 %v1026
  %v1088 = vpop.f32.mrf.mxu0
  %v1089 = vadd.f32 0.0, %v1088
  %1090 = vmatmul.f32.gmra.mxu0 %v1027
  %v1091 = vpop.f32.mrf.mxu0
  %v1092 = vadd.f32 0.0, %v1091
  %1093 = vmatmul.f32.gmra.mxu0 %v1028
  %v1094 = vpop.f32.mrf.mxu0
  %v1095 = vadd.f32 0.0, %v1094
  %1096 = vmatmul.f32.gmra.mxu0 %v1029
  %v1097 = vpop.f32.mrf.mxu0
  %v1098 = vadd.f32 0.0, %v1097
  %1099 = vmatmul.f32.gmra.mxu0 %v1030
  %v1100 = vpop.f32.mrf.mxu0
  %v1101 = vadd.f32 0.0, %v1100
  %1102 = vmatmul.f32.gmra.mxu0 %v1031
  %v1103 = vpop.f32.mrf.mxu0
  %v1104 = vadd.f32 0.0, %v1103
  %1105 = vmatmul.f32.gmra.mxu0 %v1032
  %v1106 = vpop.f32.mrf.mxu0
  %v1107 = vadd.f32 0.0, %v1106
  %1108 = vmatmul.f32.gmra.mxu0 %v1033
  %v1109 = vpop.f32.mrf.mxu0
  %v1110 = vadd.f32 0.0, %v1109
  %1111 = vmatmul.f32.gmra.mxu0 %v1034
  %v1112 = vpop.f32.mrf.mxu0
  %v1113 = vadd.f32 0.0, %v1112
  %1114 = vmatmul.f32.gmra.mxu0 %v1035
  %v1115 = vpop.f32.mrf.mxu0
  %v1116 = vadd.f32 0.0, %v1115
  %1117 = vdwg.mxu0
  %v1118 = vld [vmem:[#allocation2] sm:$0xff]
  %v1119 = vld [vmem:[#allocation2 + $0x8] sm:$0xff]
  %v1120 = vld [vmem:[#allocation2 + $0x10] sm:$0xff]
  %v1121 = vld [vmem:[#allocation2 + $0x18] sm:$0xff]
  %v1122 = vld [vmem:[#allocation2 + $0x20] sm:$0xff]
  %v1123 = vld [vmem:[#allocation2 + $0x28] sm:$0xff]
  %v1124 = vld [vmem:[#allocation2 + $0x30] sm:$0xff]
  %v1125 = vld [vmem:[#allocation2 + $0x38] sm:$0xff]
  %v1126 = vld [vmem:[#allocation2 + $0x40] sm:$0xff]
  %v1127 = vld [vmem:[#allocation2 + $0x48] sm:$0xff]
  %v1128 = vld [vmem:[#allocation2 + $0x50] sm:$0xff]
  %v1129 = vld [vmem:[#allocation2 + $0x58] sm:$0xff]
  %v1130 = vld [vmem:[#allocation2 + $0x60] sm:$0xff]
  %v1131 = vld [vmem:[#allocation2 + $0x68] sm:$0xff]
  %v1132 = vld [vmem:[#allocation2 + $0x70] sm:$0xff]
  %v1133 = vld [vmem:[#allocation2 + $0x78] sm:$0xff]
  %v1134 = vadd.f32 %v1118, %v1071
  %v1135 = vadd.f32 %v1119, %v1074
  %v1136 = vadd.f32 %v1120, %v1077
  %v1137 = vadd.f32 %v1121, %v1080
  %v1138 = vadd.f32 %v1122, %v1083
  %v1139 = vadd.f32 %v1123, %v1086
  %v1140 = vadd.f32 %v1124, %v1089
  %v1141 = vadd.f32 %v1125, %v1092
  %v1142 = vadd.f32 %v1126, %v1095
  %v1143 = vadd.f32 %v1127, %v1098
  %v1144 = vadd.f32 %v1128, %v1101
  %v1145 = vadd.f32 %v1129, %v1104
  %v1146 = vadd.f32 %v1130, %v1107
  %v1147 = vadd.f32 %v1131, %v1110
  %v1148 = vadd.f32 %v1132, %v1113
  %v1149 = vadd.f32 %v1133, %v1116
  %1150 = vst [vmem:[#allocation2] sm:$0xff] %v1134
  %1151 = vst [vmem:[#allocation2 + $0x8] sm:$0xff] %v1135
  %1152 = vst [vmem:[#allocation2 + $0x10] sm:$0xff] %v1136
  %1153 = vst [vmem:[#allocation2 + $0x18] sm:$0xff] %v1137
  %1154 = vst [vmem:[#allocation2 + $0x20] sm:$0xff] %v1138
  %1155 = vst [vmem:[#allocation2 + $0x28] sm:$0xff] %v1139
  %1156 = vst [vmem:[#allocation2 + $0x30] sm:$0xff] %v1140
  %1157 = vst [vmem:[#allocation2 + $0x38] sm:$0xff] %v1141
  %1158 = vst [vmem:[#allocation2 + $0x40] sm:$0xff] %v1142
  %1159 = vst [vmem:[#allocation2 + $0x48] sm:$0xff] %v1143
  %1160 = vst [vmem:[#allocation2 + $0x50] sm:$0xff] %v1144
  %1161 = vst [vmem:[#allocation2 + $0x58] sm:$0xff] %v1145
  %1162 = vst [vmem:[#allocation2 + $0x60] sm:$0xff] %v1146
  %1163 = vst [vmem:[#allocation2 + $0x68] sm:$0xff] %v1147
  %1164 = vst [vmem:[#allocation2 + $0x70] sm:$0xff] %v1148
  %1165 = vst [vmem:[#allocation2 + $0x78] sm:$0xff] %v1149
  %v1166 = vld [vmem:[%s870 + $0x1] sm:$0xff]
  %v1167 = vld [vmem:[%s870 + $0x11] sm:$0xff]
  %v1168 = vld [vmem:[%s870 + $0x21] sm:$0xff]
  %v1169 = vld [vmem:[%s870 + $0x31] sm:$0xff]
  %v1170 = vld [vmem:[%s870 + $0x41] sm:$0xff]
  %v1171 = vld [vmem:[%s870 + $0x51] sm:$0xff]
  %v1172 = vld [vmem:[%s870 + $0x61] sm:$0xff]
  %v1173 = vld [vmem:[%s870 + $0x71] sm:$0xff]
  %v1174 = vld [vmem:[%s870 + $0x241] sm:$0xff]
  %v1175 = vld [vmem:[%s870 + $0x251] sm:$0xff]
  %v1176 = vld [vmem:[%s870 + $0x261] sm:$0xff]
  %v1177 = vld [vmem:[%s870 + $0x271] sm:$0xff]
  %v1178 = vld [vmem:[%s870 + $0x281] sm:$0xff]
  %v1179 = vld [vmem:[%s870 + $0x291] sm:$0xff]
  %v1180 = vld [vmem:[%s870 + $0x2a1] sm:$0xff]
  %v1181 = vld [vmem:[%s870 + $0x2b1] sm:$0xff]
  %s1182 = scalar_lea.vmem %s1, 1024
  %v1183 = vld [vmem:[%s1182] sm:$0xff]
  %v1184 = vld [vmem:[%s1182 + $0x8] sm:$0xff]
  %v1185 = vld [vmem:[%s1182 + $0x10] sm:$0xff]
  %v1186 = vld [vmem:[%s1182 + $0x18] sm:$0xff]
  %v1187 = vld [vmem:[%s1182 + $0x20] sm:$0xff]
  %v1188 = vld [vmem:[%s1182 + $0x28] sm:$0xff]
  %v1189 = vld [vmem:[%s1182 + $0x30] sm:$0xff]
  %v1190 = vld [vmem:[%s1182 + $0x38] sm:$0xff]
  %v1191 = vld [vmem:[%s1182 + $0x40] sm:$0xff]
  %v1192 = vld [vmem:[%s1182 + $0x48] sm:$0xff]
  %v1193 = vld [vmem:[%s1182 + $0x50] sm:$0xff]
  %v1194 = vld [vmem:[%s1182 + $0x58] sm:$0xff]
  %v1195 = vld [vmem:[%s1182 + $0x60] sm:$0xff]
  %v1196 = vld [vmem:[%s1182 + $0x68] sm:$0xff]
  %v1197 = vld [vmem:[%s1182 + $0x70] sm:$0xff]
  %v1198 = vld [vmem:[%s1182 + $0x78] sm:$0xff]
  %1199 = vmatpush.msra.mxu0 %v1198
  %1200 = vmatpush.msra.mxu0 %v1197
  %1201 = vmatpush.msra.mxu0 %v1196
  %1202 = vmatpush.msra.mxu0 %v1195
  %1203 = vmatpush.msra.mxu0 %v1194
  %1204 = vmatpush.msra.mxu0 %v1193
  %1205 = vmatpush.msra.mxu0 %v1192
  %1206 = vmatpush.msra.mxu0 %v1191
  %1207 = vmatpush.msra.mxu0 %v1190
  %1208 = vmatpush.msra.mxu0 %v1189
  %1209 = vmatpush.msra.mxu0 %v1188
  %1210 = vmatpush.msra.mxu0 %v1187
  %1211 = vmatpush.msra.mxu0 %v1186
  %1212 = vmatpush.msra.mxu0 %v1185
  %1213 = vmatpush.msra.mxu0 %v1184
  %1214 = vmatpush.msra.mxu0 %v1183
  %1215 = vmatmul.f32.gmra.mxu0 %v1166
  %v1216 = vpop.f32.mrf.mxu0
  %v1217 = vadd.f32 0.0, %v1216
  %1218 = vmatmul.f32.gmra.mxu0 %v1167
  %v1219 = vpop.f32.mrf.mxu0
  %v1220 = vadd.f32 0.0, %v1219
  %1221 = vmatmul.f32.gmra.mxu0 %v1168
  %v1222 = vpop.f32.mrf.mxu0
  %v1223 = vadd.f32 0.0, %v1222
  %1224 = vmatmul.f32.gmra.mxu0 %v1169
  %v1225 = vpop.f32.mrf.mxu0
  %v1226 = vadd.f32 0.0, %v1225
  %1227 = vmatmul.f32.gmra.mxu0 %v1170
  %v1228 = vpop.f32.mrf.mxu0
  %v1229 = vadd.f32 0.0, %v1228
  %1230 = vmatmul.f32.gmra.mxu0 %v1171
  %v1231 = vpop.f32.mrf.mxu0
  %v1232 = vadd.f32 0.0, %v1231
  %1233 = vmatmul.f32.gmra.mxu0 %v1172
  %v1234 = vpop.f32.mrf.mxu0
  %v1235 = vadd.f32 0.0, %v1234
  %1236 = vmatmul.f32.gmra.mxu0 %v1173
  %v1237 = vpop.f32.mrf.mxu0
  %v1238 = vadd.f32 0.0, %v1237
  %1239 = vmatmul.f32.gmra.mxu0 %v1174
  %v1240 = vpop.f32.mrf.mxu0
  %v1241 = vadd.f32 0.0, %v1240
  %1242 = vmatmul.f32.gmra.mxu0 %v1175
  %v1243 = vpop.f32.mrf.mxu0
  %v1244 = vadd.f32 0.0, %v1243
  %1245 = vmatmul.f32.gmra.mxu0 %v1176
  %v1246 = vpop.f32.mrf.mxu0
  %v1247 = vadd.f32 0.0, %v1246
  %1248 = vmatmul.f32.gmra.mxu0 %v1177
  %v1249 = vpop.f32.mrf.mxu0
  %v1250 = vadd.f32 0.0, %v1249
  %1251 = vmatmul.f32.gmra.mxu0 %v1178
  %v1252 = vpop.f32.mrf.mxu0
  %v1253 = vadd.f32 0.0, %v1252
  %1254 = vmatmul.f32.gmra.mxu0 %v1179
  %v1255 = vpop.f32.mrf.mxu0
  %v1256 = vadd.f32 0.0, %v1255
  %1257 = vmatmul.f32.gmra.mxu0 %v1180
  %v1258 = vpop.f32.mrf.mxu0
  %v1259 = vadd.f32 0.0, %v1258
  %1260 = vmatmul.f32.gmra.mxu0 %v1181
  %v1261 = vpop.f32.mrf.mxu0
  %v1262 = vadd.f32 0.0, %v1261
  %1263 = vdwg.mxu0
  %v1264 = vld [vmem:[#allocation2] sm:$0xff]
  %v1265 = vld [vmem:[#allocation2 + $0x8] sm:$0xff]
  %v1266 = vld [vmem:[#allocation2 + $0x10] sm:$0xff]
  %v1267 = vld [vmem:[#allocation2 + $0x18] sm:$0xff]
  %v1268 = vld [vmem:[#allocation2 + $0x20] sm:$0xff]
  %v1269 = vld [vmem:[#allocation2 + $0x28] sm:$0xff]
  %v1270 = vld [vmem:[#allocation2 + $0x30] sm:$0xff]
  %v1271 = vld [vmem:[#allocation2 + $0x38] sm:$0xff]
  %v1272 = vld [vmem:[#allocation2 + $0x40] sm:$0xff]
  %v1273 = vld [vmem:[#allocation2 + $0x48] sm:$0xff]
  %v1274 = vld [vmem:[#allocation2 + $0x50] sm:$0xff]
  %v1275 = vld [vmem:[#allocation2 + $0x58] sm:$0xff]
  %v1276 = vld [vmem:[#allocation2 + $0x60] sm:$0xff]
  %v1277 = vld [vmem:[#allocation2 + $0x68] sm:$0xff]
  %v1278 = vld [vmem:[#allocation2 + $0x70] sm:$0xff]
  %v1279 = vld [vmem:[#allocation2 + $0x78] sm:$0xff]
  %v1280 = vadd.f32 %v1264, %v1217
  %v1281 = vadd.f32 %v1265, %v1220
  %v1282 = vadd.f32 %v1266, %v1223
  %v1283 = vadd.f32 %v1267, %v1226
  %v1284 = vadd.f32 %v1268, %v1229
  %v1285 = vadd.f32 %v1269, %v1232
  %v1286 = vadd.f32 %v1270, %v1235
  %v1287 = vadd.f32 %v1271, %v1238
  %v1288 = vadd.f32 %v1272, %v1241
  %v1289 = vadd.f32 %v1273, %v1244
  %v1290 = vadd.f32 %v1274, %v1247
  %v1291 = vadd.f32 %v1275, %v1250
  %v1292 = vadd.f32 %v1276, %v1253
  %v1293 = vadd.f32 %v1277, %v1256
  %v1294 = vadd.f32 %v1278, %v1259
  %v1295 = vadd.f32 %v1279, %v1262
  %1296 = vst [vmem:[#allocation2] sm:$0xff] %v1280
  %1297 = vst [vmem:[#allocation2 + $0x8] sm:$0xff] %v1281
  %1298 = vst [vmem:[#allocation2 + $0x10] sm:$0xff] %v1282
  %1299 = vst [vmem:[#allocation2 + $0x18] sm:$0xff] %v1283
  %1300 = vst [vmem:[#allocation2 + $0x20] sm:$0xff] %v1284
  %1301 = vst [vmem:[#allocation2 + $0x28] sm:$0xff] %v1285
  %1302 = vst [vmem:[#allocation2 + $0x30] sm:$0xff] %v1286
  %1303 = vst [vmem:[#allocation2 + $0x38] sm:$0xff] %v1287
  %1304 = vst [vmem:[#allocation2 + $0x40] sm:$0xff] %v1288
  %1305 = vst [vmem:[#allocation2 + $0x48] sm:$0xff] %v1289
  %1306 = vst [vmem:[#allocation2 + $0x50] sm:$0xff] %v1290
  %1307 = vst [vmem:[#allocation2 + $0x58] sm:$0xff] %v1291
  %1308 = vst [vmem:[#allocation2 + $0x60] sm:$0xff] %v1292
  %1309 = vst [vmem:[#allocation2 + $0x68] sm:$0xff] %v1293
  %1310 = vst [vmem:[#allocation2 + $0x70] sm:$0xff] %v1294
  %1311 = vst [vmem:[#allocation2 + $0x78] sm:$0xff] %v1295
  %v1312 = vld [vmem:[#allocation2] sm:$0xff]
  %v1313 = vld [vmem:[#allocation2 + $0x8] sm:$0xff]
  %v1314 = vld [vmem:[#allocation2 + $0x10] sm:$0xff]
  %v1315 = vld [vmem:[#allocation2 + $0x18] sm:$0xff]
  %v1316 = vld [vmem:[#allocation2 + $0x20] sm:$0xff]
  %v1317 = vld [vmem:[#allocation2 + $0x28] sm:$0xff]
  %v1318 = vld [vmem:[#allocation2 + $0x30] sm:$0xff]
  %v1319 = vld [vmem:[#allocation2 + $0x38] sm:$0xff]
  %v1320 = vld [vmem:[#allocation2 + $0x40] sm:$0xff]
  %v1321 = vld [vmem:[#allocation2 + $0x48] sm:$0xff]
  %v1322 = vld [vmem:[#allocation2 + $0x50] sm:$0xff]
  %v1323 = vld [vmem:[#allocation2 + $0x58] sm:$0xff]
  %v1324 = vld [vmem:[#allocation2 + $0x60] sm:$0xff]
  %v1325 = vld [vmem:[#allocation2 + $0x68] sm:$0xff]
  %v1326 = vld [vmem:[#allocation2 + $0x70] sm:$0xff]
  %v1327 = vld [vmem:[#allocation2 + $0x78] sm:$0xff]
  %1328 = vst [vmem:[%s2] sm:$0xff] %v1312
  %1329 = vst [vmem:[%s2 + $0x8] sm:$0xff] %v1313
  %1330 = vst [vmem:[%s2 + $0x10] sm:$0xff] %v1314
  %1331 = vst [vmem:[%s2 + $0x18] sm:$0xff] %v1315
  %1332 = vst [vmem:[%s2 + $0x20] sm:$0xff] %v1316
  %1333 = vst [vmem:[%s2 + $0x28] sm:$0xff] %v1317
  %1334 = vst [vmem:[%s2 + $0x30] sm:$0xff] %v1318
  %1335 = vst [vmem:[%s2 + $0x38] sm:$0xff] %v1319
  %1336 = vst [vmem:[%s2 + $0x40] sm:$0xff] %v1320
  %1337 = vst [vmem:[%s2 + $0x48] sm:$0xff] %v1321
  %1338 = vst [vmem:[%s2 + $0x50] sm:$0xff] %v1322
  %1339 = vst [vmem:[%s2 + $0x58] sm:$0xff] %v1323
  %1340 = vst [vmem:[%s2 + $0x60] sm:$0xff] %v1324
  %1341 = vst [vmem:[%s2 + $0x68] sm:$0xff] %v1325
  %1342 = vst [vmem:[%s2 + $0x70] sm:$0xff] %v1326
  %1343 = vst [vmem:[%s2 + $0x78] sm:$0xff] %v1327
  %v1344 = vadd.f32 %v1312, %v1313
  %v1345 = vadd.f32 %v1344, %v1314
  %v1346 = vadd.f32 %v1345, %v1315
  %v1347 = vadd.f32 %v1346, %v1316
  %v1348 = vadd.f32 %v1347, %v1317
  %v1349 = vadd.f32 %v1348, %v1318
  %v1350 = vadd.f32 %v1349, %v1319
  %v1351 = vadd.f32 %v1350, %v1320
  %v1352 = vadd.f32 %v1351, %v1321
  %v1353 = vadd.f32 %v1352, %v1322
  %v1354 = vadd.f32 %v1353, %v1323
  %v1355 = vadd.f32 %v1354, %v1324
  %v1356 = vadd.f32 %v1355, %v1325
  %v1357 = vadd.f32 %v1356, %v1326
  %v1358 = vadd.f32 %v1357, %v1327
  %v1359 = vrot.slane %v1358, 4
  %v1360 = vadd.f32 %v1358, %v1359
  %v1361 = vrot.slane %v1360, 2
  %v1362 = vadd.f32 %v1360, %v1361
  %v1363 = vrot.slane %v1362, 1
  %v1364 = vadd.f32 %v1362, %v1363
  %v1365 = vmul.f32 %v1312, %v1312
  %v1366 = vmul.f32 %v1313, %v1313
  %v1367 = vmul.f32 %v1314, %v1314
  %v1368 = vmul.f32 %v1315, %v1315
  %v1369 = vmul.f32 %v1316, %v1316
  %v1370 = vmul.f32 %v1317, %v1317
  %v1371 = vmul.f32 %v1318, %v1318
  %v1372 = vmul.f32 %v1319, %v1319
  %v1373 = vmul.f32 %v1320, %v1320
  %v1374 = vmul.f32 %v1321, %v1321
  %v1375 = vmul.f32 %v1322, %v1322
  %v1376 = vmul.f32 %v1323, %v1323
  %v1377 = vmul.f32 %v1324, %v1324
  %v1378 = vmul.f32 %v1325, %v1325
  %v1379 = vmul.f32 %v1326, %v1326
  %v1380 = vmul.f32 %v1327, %v1327
  %v1381 = vadd.f32 %v1365, %v1366
  %v1382 = vadd.f32 %v1381, %v1367
  %v1383 = vadd.f32 %v1382, %v1368
  %v1384 = vadd.f32 %v1383, %v1369
  %v1385 = vadd.f32 %v1384, %v1370
  %v1386 = vadd.f32 %v1385, %v1371
  %v1387 = vadd.f32 %v1386, %v1372
  %v1388 = vadd.f32 %v1387, %v1373
  %v1389 = vadd.f32 %v1388, %v1374
  %v1390 = vadd.f32 %v1389, %v1375
  %v1391 = vadd.f32 %v1390, %v1376
  %v1392 = vadd.f32 %v1391, %v1377
  %v1393 = vadd.f32 %v1392, %v1378
  %v1394 = vadd.f32 %v1393, %v1379
  %v1395 = vadd.f32 %v1394, %v1380
  %v1396 = vrot.slane %v1395, 4
  %v1397 = vadd.f32 %v1395, %v1396
  %v1398 = vrot.slane %v1397, 2
  %v1399 = vadd.f32 %v1397, %v1398
  %v1400 = vrot.slane %v1399, 1
  %v1401 = vadd.f32 %v1399, %v1400
  %vm1402 = vcmask 1040384
  %v1403 = vsel %vm1402, %v1364, %v1401
  %1404 = vst [vmem:[%s3] sm:$0x3] %v1403
  // Predicated region
  $region10: #{basic_block_forward.4} parent=0 // pred_check
    _
  $region11: #{basic_block_forward.4} parent=0 // pred_check_branch
    %1406 = sbr.rel (0) target = $region13
  $region12: #{basic_block_forward.4} parent=0 // pred_region
    _
  $region13: #{basic_block_forward.4} parent=0 // pred_fallthru
    _
  // Predicated region
  $region14: #{basic_block_forward.4} parent=0 // pred_check
    _
  $region15: #{basic_block_forward.4} parent=0 // pred_check_branch
    %1408 = sbr.rel (0) target = $region17
  $region16: #{basic_block_forward.4} parent=0 // pred_region
    _
  $region17: #{basic_block_forward.4} parent=0 // pred_fallthru
    _
  // Predicated region
  $region18: #{basic_block_forward.4} parent=0 // pred_check
    _
  $region19: #{basic_block_forward.4} parent=0 // pred_check_branch
    %1410 = sbr.rel (0) target = $region21
  $region20: #{basic_block_forward.4} parent=0 // pred_region
    _
  $region21: #{basic_block_forward.4} parent=0 // pred_fallthru
    _
  // Predicated region
  $region22: #{basic_block_forward.4} parent=0 // pred_check
    _
  $region23: #{basic_block_forward.4} parent=0 // pred_check_branch
    %1412 = sbr.rel (0) target = $region25
  $region24: #{basic_block_forward.4} parent=0 // pred_region
    _
  $region25: #{basic_block_forward.4} parent=0 // pred_fallthru
    _

// kernel: basic_block_forward.7
$region0: #{basic_block_forward.7}
  #allocation0 [shape = 'u32[]', space=smem, size = 0x4, offset = 0x4, fixed_abs, tag = 'smem constant byte address 0x4 - core index']
  #allocation1 [shape = 'u32[72,128]{1,0:T(1,128)}', space=vmem, size = 0x9000, scoped, tag = 'internal scratch']
  %s0 = inlined_call_operand.vmem [shape: f32[128,128], index: 0, kind: input, shape index: {}]
  %s1 = inlined_call_operand.vmem [shape: f32[1,128], index: 1, kind: input, shape index: {}]
  %s2 = inlined_call_operand.vmem [shape: f32[1,128], index: 2, kind: input, shape index: {}]
  %s3 = inlined_call_operand.vmem [shape: f32[128,128], index: 3, kind: input, shape index: {}]
  %s4 = inlined_call_operand.vmem [shape: f32[1,128], index: 4, kind: input, shape index: {}]
  %s5 = inlined_call_operand.vmem [shape: f32[1,128], index: 5, kind: input, shape index: {}]
  %s6 = inlined_call_operand.vmem [shape: f32[128,128], index: 6, kind: output, shape index: {}]
  %s7 = sld [smem:[#allocation0]]
  $region34: #{basic_block_forward.7} parent=0
    _
  %s9 = ssub.s32 1, %s7
  %s10 = scalar_select 0, %s9, %s7
  // Predicated region
  $region2: #{basic_block_forward.7} parent=0 // pred_check
    _
  $region3: #{basic_block_forward.7} parent=0 // pred_check_branch
    %12 = sbr.rel (0) target = $region5
  $region4: #{basic_block_forward.7} parent=0 // pred_region
    _
  $region5: #{basic_block_forward.7} parent=0 // pred_fallthru
    _
  // Predicated region
  $region6: #{basic_block_forward.7} parent=0 // pred_check
    _
  $region7: #{basic_block_forward.7} parent=0 // pred_check_branch
    %14 = sbr.rel (0) target = $region9
  $region8: #{basic_block_forward.7} parent=0 // pred_region
    _
  $region9: #{basic_block_forward.7} parent=0 // pred_fallthru
    _
  // Predicated region
  $region10: #{basic_block_forward.7} parent=0 // pred_check
    _
  $region11: #{basic_block_forward.7} parent=0 // pred_check_branch
    %16 = sbr.rel (0) target = $region13
  $region12: #{basic_block_forward.7} parent=0 // pred_region
    _
  $region13: #{basic_block_forward.7} parent=0 // pred_fallthru
    _
  // Predicated region
  $region14: #{basic_block_forward.7} parent=0 // pred_check
    _
  $region15: #{basic_block_forward.7} parent=0 // pred_check_branch
    %18 = sbr.rel (0) target = $region17
  $region16: #{basic_block_forward.7} parent=0 // pred_region
    _
  $region17: #{basic_block_forward.7} parent=0 // pred_fallthru
    _
  // Predicated region
  $region18: #{basic_block_forward.7} parent=0 // pred_check
    _
  $region19: #{basic_block_forward.7} parent=0 // pred_check_branch
    %20 = sbr.rel (0) target = $region21
  $region20: #{basic_block_forward.7} parent=0 // pred_region
    _
  $region21: #{basic_block_forward.7} parent=0 // pred_fallthru
    _
  // Predicated region
  $region22: #{basic_block_forward.7} parent=0 // pred_check
    _
  $region23: #{basic_block_forward.7} parent=0 // pred_check_branch
    %22 = sbr.rel (0) target = $region25
  $region24: #{basic_block_forward.7} parent=0 // pred_region
    _
  $region25: #{basic_block_forward.7} parent=0 // pred_fallthru
    _
  %v23 = vld [vmem:[%s0] sm:$0xff]
  %v24 = vld [vmem:[%s0 + $0x8] sm:$0xff]
  %v25 = vld [vmem:[%s0 + $0x10] sm:$0xff]
  %v26 = vld [vmem:[%s0 + $0x18] sm:$0xff]
  %v27 = vld [vmem:[%s0 + $0x20] sm:$0xff]
  %v28 = vld [vmem:[%s0 + $0x28] sm:$0xff]
  %v29 = vld [vmem:[%s0 + $0x30] sm:$0xff]
  %v30 = vld [vmem:[%s0 + $0x38] sm:$0xff]
  %v31 = vld [vmem:[%s0 + $0x40] sm:$0xff]
  %v32 = vld [vmem:[%s0 + $0x48] sm:$0xff]
  %v33 = vld [vmem:[%s0 + $0x50] sm:$0xff]
  %v34 = vld [vmem:[%s0 + $0x58] sm:$0xff]
  %v35 = vld [vmem:[%s0 + $0x60] sm:$0xff]
  %v36 = vld [vmem:[%s0 + $0x68] sm:$0xff]
  %v37 = vld [vmem:[%s0 + $0x70] sm:$0xff]
  %v38 = vld [vmem:[%s0 + $0x78] sm:$0xff]
  %v39 = vld [vmem:[%s1] sm:$0x1]
  %v41 = vperm.slane %v39, 0
  %v43 = vmul.f32 %v23, %v41
  %v44 = vmul.f32 %v24, %v41
  %v45 = vmul.f32 %v25, %v41
  %v46 = vmul.f32 %v26, %v41
  %v47 = vmul.f32 %v27, %v41
  %v48 = vmul.f32 %v28, %v41
  %v49 = vmul.f32 %v29, %v41
  %v50 = vmul.f32 %v30, %v41
  %v51 = vmul.f32 %v31, %v41
  %v52 = vmul.f32 %v32, %v41
  %v53 = vmul.f32 %v33, %v41
  %v54 = vmul.f32 %v34, %v41
  %v55 = vmul.f32 %v35, %v41
  %v56 = vmul.f32 %v36, %v41
  %v57 = vmul.f32 %v37, %v41
  %v58 = vmul.f32 %v38, %v41
  %v59 = vld [vmem:[%s2] sm:$0x1]
  %v61 = vperm.slane %v59, 0
  %v63 = vadd.f32 %v43, %v61
  %v64 = vadd.f32 %v44, %v61
  %v65 = vadd.f32 %v45, %v61
  %v66 = vadd.f32 %v46, %v61
  %v67 = vadd.f32 %v47, %v61
  %v68 = vadd.f32 %v48, %v61
  %v69 = vadd.f32 %v49, %v61
  %v70 = vadd.f32 %v50, %v61
  %v71 = vadd.f32 %v51, %v61
  %v72 = vadd.f32 %v52, %v61
  %v73 = vadd.f32 %v53, %v61
  %v74 = vadd.f32 %v54, %v61
  %v75 = vadd.f32 %v55, %v61
  %v76 = vadd.f32 %v56, %v61
  %v77 = vadd.f32 %v57, %v61
  %v78 = vadd.f32 %v58, %v61
  %v79 = vld [vmem:[%s3] sm:$0xff]
  %v80 = vld [vmem:[%s3 + $0x8] sm:$0xff]
  %v81 = vld [vmem:[%s3 + $0x10] sm:$0xff]
  %v82 = vld [vmem:[%s3 + $0x18] sm:$0xff]
  %v83 = vld [vmem:[%s3 + $0x20] sm:$0xff]
  %v84 = vld [vmem:[%s3 + $0x28] sm:$0xff]
  %v85 = vld [vmem:[%s3 + $0x30] sm:$0xff]
  %v86 = vld [vmem:[%s3 + $0x38] sm:$0xff]
  %v87 = vld [vmem:[%s3 + $0x40] sm:$0xff]
  %v88 = vld [vmem:[%s3 + $0x48] sm:$0xff]
  %v89 = vld [vmem:[%s3 + $0x50] sm:$0xff]
  %v90 = vld [vmem:[%s3 + $0x58] sm:$0xff]
  %v91 = vld [vmem:[%s3 + $0x60] sm:$0xff]
  %v92 = vld [vmem:[%s3 + $0x68] sm:$0xff]
  %v93 = vld [vmem:[%s3 + $0x70] sm:$0xff]
  %v94 = vld [vmem:[%s3 + $0x78] sm:$0xff]
  %v95 = vld [vmem:[%s4] sm:$0x1]
  %v97 = vperm.slane %v95, 0
  %v99 = vmul.f32 %v79, %v97
  %v100 = vmul.f32 %v80, %v97
  %v101 = vmul.f32 %v81, %v97
  %v102 = vmul.f32 %v82, %v97
  %v103 = vmul.f32 %v83, %v97
  %v104 = vmul.f32 %v84, %v97
  %v105 = vmul.f32 %v85, %v97
  %v106 = vmul.f32 %v86, %v97
  %v107 = vmul.f32 %v87, %v97
  %v108 = vmul.f32 %v88, %v97
  %v109 = vmul.f32 %v89, %v97
  %v110 = vmul.f32 %v90, %v97
  %v111 = vmul.f32 %v91, %v97
  %v112 = vmul.f32 %v92, %v97
  %v113 = vmul.f32 %v93, %v97
  %v114 = vmul.f32 %v94, %v97
  %v115 = vld [vmem:[%s5] sm:$0x1]
  %v117 = vperm.slane %v115, 0
  %v119 = vadd.f32 %v99, %v117
  %v120 = vadd.f32 %v100, %v117
  %v121 = vadd.f32 %v101, %v117
  %v122 = vadd.f32 %v102, %v117
  %v123 = vadd.f32 %v103, %v117
  %v124 = vadd.f32 %v104, %v117
  %v125 = vadd.f32 %v105, %v117
  %v126 = vadd.f32 %v106, %v117
  %v127 = vadd.f32 %v107, %v117
  %v128 = vadd.f32 %v108, %v117
  %v129 = vadd.f32 %v109, %v117
  %v130 = vadd.f32 %v110, %v117
  %v131 = vadd.f32 %v111, %v117
  %v132 = vadd.f32 %v112, %v117
  %v133 = vadd.f32 %v113, %v117
  %v134 = vadd.f32 %v114, %v117
  %v135 = vadd.f32 %v63, %v119
  %v136 = vadd.f32 %v64, %v120
  %v137 = vadd.f32 %v65, %v121
  %v138 = vadd.f32 %v66, %v122
  %v139 = vadd.f32 %v67, %v123
  %v140 = vadd.f32 %v68, %v124
  %v141 = vadd.f32 %v69, %v125
  %v142 = vadd.f32 %v70, %v126
  %v143 = vadd.f32 %v71, %v127
  %v144 = vadd.f32 %v72, %v128
  %v145 = vadd.f32 %v73, %v129
  %v146 = vadd.f32 %v74, %v130
  %v147 = vadd.f32 %v75, %v131
  %v148 = vadd.f32 %v76, %v132
  %v149 = vadd.f32 %v77, %v133
  %v150 = vadd.f32 %v78, %v134
  %v151 = vmax.f32 %v135, 0.0
  %v152 = vmax.f32 %v136, 0.0
  %v153 = vmax.f32 %v137, 0.0
  %v154 = vmax.f32 %v138, 0.0
  %v155 = vmax.f32 %v139, 0.0
  %v156 = vmax.f32 %v140, 0.0
  %v157 = vmax.f32 %v141, 0.0
  %v158 = vmax.f32 %v142, 0.0
  %v159 = vmax.f32 %v143, 0.0
  %v160 = vmax.f32 %v144, 0.0
  %v161 = vmax.f32 %v145, 0.0
  %v162 = vmax.f32 %v146, 0.0
  %v163 = vmax.f32 %v147, 0.0
  %v164 = vmax.f32 %v148, 0.0
  %v165 = vmax.f32 %v149, 0.0
  %v166 = vmax.f32 %v150, 0.0
  %167 = vst [vmem:[%s6] sm:$0xff] %v151
  %168 = vst [vmem:[%s6 + $0x8] sm:$0xff] %v152
  %169 = vst [vmem:[%s6 + $0x10] sm:$0xff] %v153
  %170 = vst [vmem:[%s6 + $0x18] sm:$0xff] %v154
  %171 = vst [vmem:[%s6 + $0x20] sm:$0xff] %v155
  %172 = vst [vmem:[%s6 + $0x28] sm:$0xff] %v156
  %173 = vst [vmem:[%s6 + $0x30] sm:$0xff] %v157
  %174 = vst [vmem:[%s6 + $0x38] sm:$0xff] %v158
  %175 = vst [vmem:[%s6 + $0x40] sm:$0xff] %v159
  %176 = vst [vmem:[%s6 + $0x48] sm:$0xff] %v160
  %177 = vst [vmem:[%s6 + $0x50] sm:$0xff] %v161
  %178 = vst [vmem:[%s6 + $0x58] sm:$0xff] %v162
  %179 = vst [vmem:[%s6 + $0x60] sm:$0xff] %v163
  %180 = vst [vmem:[%s6 + $0x68] sm:$0xff] %v164
  %181 = vst [vmem:[%s6 + $0x70] sm:$0xff] %v165
  %182 = vst [vmem:[%s6 + $0x78] sm:$0xff] %v166
  // Predicated region
  $region26: #{basic_block_forward.7} parent=0 // pred_check
    _
  $region27: #{basic_block_forward.7} parent=0 // pred_check_branch
    %184 = sbr.rel (0) target = $region29
  $region28: #{basic_block_forward.7} parent=0 // pred_region
    _
  $region29: #{basic_block_forward.7} parent=0 // pred_fallthru
    _
  // Predicated region
  $region30: #{basic_block_forward.7} parent=0 // pred_check
    _
  $region31: #{basic_block_forward.7} parent=0 // pred_check_branch
    %186 = sbr.rel (0) target = $region33
  $region32: #{basic_block_forward.7} parent=0 // pred_region
    _
  $region33: #{basic_block_forward.7} parent=0 // pred_fallthru
    _

// kernel: basic_block_forward.6
$region0: #{basic_block_forward.6}
  #allocation0 [shape = 'u32[]', space=smem, size = 0x4, offset = 0x4, fixed_abs, tag = 'smem constant byte address 0x4 - core index']
  #allocation1 [shape = 'u32[72,128]{1,0:T(1,128)}', space=vmem, size = 0x9000, scoped, tag = 'internal scratch']
  #allocation2 [shape = 'f32[128,128]{1,0:T(8,128)}', space=vmem, size = 0x10000, scoped, tag = 'scratch operand']
  %s0 = inlined_call_operand.vmem [shape: f32[2,10,10,128], index: 0, kind: input, shape index: {}]
  %s1 = inlined_call_operand.vmem [shape: f32[9,128,128], index: 1, kind: input, shape index: {}]
  %s2 = inlined_call_operand.vmem [shape: f32[2,1,64,128], index: 2, kind: input, shape index: {}]
  %s3 = inlined_call_operand.vmem [shape: f32[128,128], index: 3, kind: input, shape index: {}]
  %s4 = inlined_call_operand.vmem [shape: f32[2,1,64,128], index: 4, kind: output, shape index: {0}]
  %s5 = inlined_call_operand.vmem [shape: f32[1,1,2,128], index: 5, kind: output, shape index: {1}]
  %s6 = inlined_call_operand.vmem [shape: f32[2,1,64,128], index: 6, kind: output, shape index: {2}]
  %s7 = inlined_call_operand.vmem [shape: f32[1,1,2,128], index: 7, kind: output, shape index: {3}]
  %8 = xla_tuple %s4, %s5, %s6, %s7
  %s9 = sld [smem:[#allocation0]]
  $region50: #{basic_block_forward.6} parent=0
    _
  %s11 = ssub.s32 1, %s9
  %s12 = scalar_select 0, %s11, %s9
  // Predicated region
  $region2: #{basic_block_forward.6} parent=0 // pred_check
    _
  $region3: #{basic_block_forward.6} parent=0 // pred_check_branch
    %14 = sbr.rel (0) target = $region5
  $region4: #{basic_block_forward.6} parent=0 // pred_region
    _
  $region5: #{basic_block_forward.6} parent=0 // pred_fallthru
    _
  // Predicated region
  $region6: #{basic_block_forward.6} parent=0 // pred_check
    _
  $region7: #{basic_block_forward.6} parent=0 // pred_check_branch
    %16 = sbr.rel (0) target = $region9
  $region8: #{basic_block_forward.6} parent=0 // pred_region
    _
  $region9: #{basic_block_forward.6} parent=0 // pred_fallthru
    _
  // Predicated region
  $region10: #{basic_block_forward.6} parent=0 // pred_check
    _
  $region11: #{basic_block_forward.6} parent=0 // pred_check_branch
    %18 = sbr.rel (0) target = $region13
  $region12: #{basic_block_forward.6} parent=0 // pred_region
    _
  $region13: #{basic_block_forward.6} parent=0 // pred_fallthru
    _
  // Predicated region
  $region14: #{basic_block_forward.6} parent=0 // pred_check
    _
  $region15: #{basic_block_forward.6} parent=0 // pred_check_branch
    %20 = sbr.rel (0) target = $region17
  $region16: #{basic_block_forward.6} parent=0 // pred_region
    _
  $region17: #{basic_block_forward.6} parent=0 // pred_fallthru
    _
  %s21 = smul.u32 0, 8
  %s22 = smul.u32 %s21, 16
  %s23 = scalar_lea.vmem %s0, %s22
  %v24 = vld [vmem:[%s23] sm:$0xff]
  %v25 = vld [vmem:[%s23 + $0x10] sm:$0xff]
  %v26 = vld [vmem:[%s23 + $0x20] sm:$0xff]
  %v27 = vld [vmem:[%s23 + $0x30] sm:$0xff]
  %v28 = vld [vmem:[%s23 + $0x40] sm:$0xff]
  %v29 = vld [vmem:[%s23 + $0x50] sm:$0xff]
  %v30 = vld [vmem:[%s23 + $0x60] sm:$0xff]
  %v31 = vld [vmem:[%s23 + $0x70] sm:$0xff]
  %v32 = vld [vmem:[%s23 + $0xa0] sm:$0xff]
  %v33 = vld [vmem:[%s23 + $0xb0] sm:$0xff]
  %v34 = vld [vmem:[%s23 + $0xc0] sm:$0xff]
  %v35 = vld [vmem:[%s23 + $0xd0] sm:$0xff]
  %v36 = vld [vmem:[%s23 + $0xe0] sm:$0xff]
  %v37 = vld [vmem:[%s23 + $0xf0] sm:$0xff]
  %v38 = vld [vmem:[%s23 + $0x100] sm:$0xff]
  %v39 = vld [vmem:[%s23 + $0x110] sm:$0xff]
  %v40 = vld [vmem:[%s1] sm:$0xff]
  %v41 = vld [vmem:[%s1 + $0x8] sm:$0xff]
  %v42 = vld [vmem:[%s1 + $0x10] sm:$0xff]
  %v43 = vld [vmem:[%s1 + $0x18] sm:$0xff]
  %v44 = vld [vmem:[%s1 + $0x20] sm:$0xff]
  %v45 = vld [vmem:[%s1 + $0x28] sm:$0xff]
  %v46 = vld [vmem:[%s1 + $0x30] sm:$0xff]
  %v47 = vld [vmem:[%s1 + $0x38] sm:$0xff]
  %v48 = vld [vmem:[%s1 + $0x40] sm:$0xff]
  %v49 = vld [vmem:[%s1 + $0x48] sm:$0xff]
  %v50 = vld [vmem:[%s1 + $0x50] sm:$0xff]
  %v51 = vld [vmem:[%s1 + $0x58] sm:$0xff]
  %v52 = vld [vmem:[%s1 + $0x60] sm:$0xff]
  %v53 = vld [vmem:[%s1 + $0x68] sm:$0xff]
  %v54 = vld [vmem:[%s1 + $0x70] sm:$0xff]
  %v55 = vld [vmem:[%s1 + $0x78] sm:$0xff]
  %56 = vmatpush.msra.mxu0 %v55
  %57 = vmatpush.msra.mxu0 %v54
  %58 = vmatpush.msra.mxu0 %v53
  %59 = vmatpush.msra.mxu0 %v52
  %60 = vmatpush.msra.mxu0 %v51
  %61 = vmatpush.msra.mxu0 %v50
  %62 = vmatpush.msra.mxu0 %v49
  %63 = vmatpush.msra.mxu0 %v48
  %64 = vmatpush.msra.mxu0 %v47
  %65 = vmatpush.msra.mxu0 %v46
  %66 = vmatpush.msra.mxu0 %v45
  %67 = vmatpush.msra.mxu0 %v44
  %68 = vmatpush.msra.mxu0 %v43
  %69 = vmatpush.msra.mxu0 %v42
  %70 = vmatpush.msra.mxu0 %v41
  %71 = vmatpush.msra.mxu0 %v40
  %72 = vmatmul.f32.gmra.mxu0 %v24
  %v73 = vpop.f32.mrf.mxu0
  %v74 = vadd.f32 0.0, %v73
  %75 = vmatmul.f32.gmra.mxu0 %v25
  %v76 = vpop.f32.mrf.mxu0
  %v77 = vadd.f32 0.0, %v76
  %78 = vmatmul.f32.gmra.mxu0 %v26
  %v79 = vpop.f32.mrf.mxu0
  %v80 = vadd.f32 0.0, %v79
  %81 = vmatmul.f32.gmra.mxu0 %v27
  %v82 = vpop.f32.mrf.mxu0
  %v83 = vadd.f32 0.0, %v82
  %84 = vmatmul.f32.gmra.mxu0 %v28
  %v85 = vpop.f32.mrf.mxu0
  %v86 = vadd.f32 0.0, %v85
  %87 = vmatmul.f32.gmra.mxu0 %v29
  %v88 = vpop.f32.mrf.mxu0
  %v89 = vadd.f32 0.0, %v88
  %90 = vmatmul.f32.gmra.mxu0 %v30
  %v91 = vpop.f32.mrf.mxu0
  %v92 = vadd.f32 0.0, %v91
  %93 = vmatmul.f32.gmra.mxu0 %v31
  %v94 = vpop.f32.mrf.mxu0
  %v95 = vadd.f32 0.0, %v94
  %96 = vmatmul.f32.gmra.mxu0 %v32
  %v97 = vpop.f32.mrf.mxu0
  %v98 = vadd.f32 0.0, %v97
  %99 = vmatmul.f32.gmra.mxu0 %v33
  %v100 = vpop.f32.mrf.mxu0
  %v101 = vadd.f32 0.0, %v100
  %102 = vmatmul.f32.gmra.mxu0 %v34
  %v103 = vpop.f32.mrf.mxu0
  %v104 = vadd.f32 0.0, %v103
  %105 = vmatmul.f32.gmra.mxu0 %v35
  %v106 = vpop.f32.mrf.mxu0
  %v107 = vadd.f32 0.0, %v106
  %108 = vmatmul.f32.gmra.mxu0 %v36
  %v109 = vpop.f32.mrf.mxu0
  %v110 = vadd.f32 0.0, %v109
  %111 = vmatmul.f32.gmra.mxu0 %v37
  %v112 = vpop.f32.mrf.mxu0
  %v113 = vadd.f32 0.0, %v112
  %114 = vmatmul.f32.gmra.mxu0 %v38
  %v115 = vpop.f32.mrf.mxu0
  %v116 = vadd.f32 0.0, %v115
  %117 = vmatmul.f32.gmra.mxu0 %v39
  %v118 = vpop.f32.mrf.mxu0
  %v119 = vadd.f32 0.0, %v118
  %120 = vdwg.mxu0
  %121 = vst [vmem:[#allocation2] sm:$0xff] %v74
  %122 = vst [vmem:[#allocation2 + $0x8] sm:$0xff] %v77
  %123 = vst [vmem:[#allocation2 + $0x10] sm:$0xff] %v80
  %124 = vst [vmem:[#allocation2 + $0x18] sm:$0xff] %v83
  %125 = vst [vmem:[#allocation2 + $0x20] sm:$0xff] %v86
  %126 = vst [vmem:[#allocation2 + $0x28] sm:$0xff] %v89
  %127 = vst [vmem:[#allocation2 + $0x30] sm:$0xff] %v92
  %128 = vst [vmem:[#allocation2 + $0x38] sm:$0xff] %v95
  %129 = vst [vmem:[#allocation2 + $0x40] sm:$0xff] %v98
  %130 = vst [vmem:[#allocation2 + $0x48] sm:$0xff] %v101
  %131 = vst [vmem:[#allocation2 + $0x50] sm:$0xff] %v104
  %132 = vst [vmem:[#allocation2 + $0x58] sm:$0xff] %v107
  %133 = vst [vmem:[#allocation2 + $0x60] sm:$0xff] %v110
  %134 = vst [vmem:[#allocation2 + $0x68] sm:$0xff] %v113
  %135 = vst [vmem:[#allocation2 + $0x70] sm:$0xff] %v116
  %136 = vst [vmem:[#allocation2 + $0x78] sm:$0xff] %v119
  %v137 = vld [vmem:[%s23 + $0x1] sm:$0xff]
  %v138 = vld [vmem:[%s23 + $0x11] sm:$0xff]
  %v139 = vld [vmem:[%s23 + $0x21] sm:$0xff]
  %v140 = vld [vmem:[%s23 + $0x31] sm:$0xff]
  %v141 = vld [vmem:[%s23 + $0x41] sm:$0xff]
  %v142 = vld [vmem:[%s23 + $0x51] sm:$0xff]
  %v143 = vld [vmem:[%s23 + $0x61] sm:$0xff]
  %v144 = vld [vmem:[%s23 + $0x71] sm:$0xff]
  %v145 = vld [vmem:[%s23 + $0xa1] sm:$0xff]
  %v146 = vld [vmem:[%s23 + $0xb1] sm:$0xff]
  %v147 = vld [vmem:[%s23 + $0xc1] sm:$0xff]
  %v148 = vld [vmem:[%s23 + $0xd1] sm:$0xff]
  %v149 = vld [vmem:[%s23 + $0xe1] sm:$0xff]
  %v150 = vld [vmem:[%s23 + $0xf1] sm:$0xff]
  %v151 = vld [vmem:[%s23 + $0x101] sm:$0xff]
  %v152 = vld [vmem:[%s23 + $0x111] sm:$0xff]
  %s153 = scalar_lea.vmem %s1, 128
  %v154 = vld [vmem:[%s153] sm:$0xff]
  %v155 = vld [vmem:[%s153 + $0x8] sm:$0xff]
  %v156 = vld [vmem:[%s153 + $0x10] sm:$0xff]
  %v157 = vld [vmem:[%s153 + $0x18] sm:$0xff]
  %v158 = vld [vmem:[%s153 + $0x20] sm:$0xff]
  %v159 = vld [vmem:[%s153 + $0x28] sm:$0xff]
  %v160 = vld [vmem:[%s153 + $0x30] sm:$0xff]
  %v161 = vld [vmem:[%s153 + $0x38] sm:$0xff]
  %v162 = vld [vmem:[%s153 + $0x40] sm:$0xff]
  %v163 = vld [vmem:[%s153 + $0x48] sm:$0xff]
  %v164 = vld [vmem:[%s153 + $0x50] sm:$0xff]
  %v165 = vld [vmem:[%s153 + $0x58] sm:$0xff]
  %v166 = vld [vmem:[%s153 + $0x60] sm:$0xff]
  %v167 = vld [vmem:[%s153 + $0x68] sm:$0xff]
  %v168 = vld [vmem:[%s153 + $0x70] sm:$0xff]
  %v169 = vld [vmem:[%s153 + $0x78] sm:$0xff]
  %170 = vmatpush.msra.mxu0 %v169
  %171 = vmatpush.msra.mxu0 %v168
  %172 = vmatpush.msra.mxu0 %v167
  %173 = vmatpush.msra.mxu0 %v166
  %174 = vmatpush.msra.mxu0 %v165
  %175 = vmatpush.msra.mxu0 %v164
  %176 = vmatpush.msra.mxu0 %v163
  %177 = vmatpush.msra.mxu0 %v162
  %178 = vmatpush.msra.mxu0 %v161
  %179 = vmatpush.msra.mxu0 %v160
  %180 = vmatpush.msra.mxu0 %v159
  %181 = vmatpush.msra.mxu0 %v158
  %182 = vmatpush.msra.mxu0 %v157
  %183 = vmatpush.msra.mxu0 %v156
  %184 = vmatpush.msra.mxu0 %v155
  %185 = vmatpush.msra.mxu0 %v154
  %186 = vmatmul.f32.gmra.mxu0 %v137
  %v187 = vpop.f32.mrf.mxu0
  %v188 = vadd.f32 0.0, %v187
  %189 = vmatmul.f32.gmra.mxu0 %v138
  %v190 = vpop.f32.mrf.mxu0
  %v191 = vadd.f32 0.0, %v190
  %192 = vmatmul.f32.gmra.mxu0 %v139
  %v193 = vpop.f32.mrf.mxu0
  %v194 = vadd.f32 0.0, %v193
  %195 = vmatmul.f32.gmra.mxu0 %v140
  %v196 = vpop.f32.mrf.mxu0
  %v197 = vadd.f32 0.0, %v196
  %198 = vmatmul.f32.gmra.mxu0 %v141
  %v199 = vpop.f32.mrf.mxu0
  %v200 = vadd.f32 0.0, %v199
  %201 = vmatmul.f32.gmra.mxu0 %v142
  %v202 = vpop.f32.mrf.mxu0
  %v203 = vadd.f32 0.0, %v202
  %204 = vmatmul.f32.gmra.mxu0 %v143
  %v205 = vpop.f32.mrf.mxu0
  %v206 = vadd.f32 0.0, %v205
  %207 = vmatmul.f32.gmra.mxu0 %v144
  %v208 = vpop.f32.mrf.mxu0
  %v209 = vadd.f32 0.0, %v208
  %210 = vmatmul.f32.gmra.mxu0 %v145
  %v211 = vpop.f32.mrf.mxu0
  %v212 = vadd.f32 0.0, %v211
  %213 = vmatmul.f32.gmra.mxu0 %v146
  %v214 = vpop.f32.mrf.mxu0
  %v215 = vadd.f32 0.0, %v214
  %216 = vmatmul.f32.gmra.mxu0 %v147
  %v217 = vpop.f32.mrf.mxu0
  %v218 = vadd.f32 0.0, %v217
  %219 = vmatmul.f32.gmra.mxu0 %v148
  %v220 = vpop.f32.mrf.mxu0
  %v221 = vadd.f32 0.0, %v220
  %222 = vmatmul.f32.gmra.mxu0 %v149
  %v223 = vpop.f32.mrf.mxu0
  %v224 = vadd.f32 0.0, %v223
  %225 = vmatmul.f32.gmra.mxu0 %v150
  %v226 = vpop.f32.mrf.mxu0
  %v227 = vadd.f32 0.0, %v226
  %228 = vmatmul.f32.gmra.mxu0 %v151
  %v229 = vpop.f32.mrf.mxu0
  %v230 = vadd.f32 0.0, %v229
  %231 = vmatmul.f32.gmra.mxu0 %v152
  %v232 = vpop.f32.mrf.mxu0
  %v233 = vadd.f32 0.0, %v232
  %234 = vdwg.mxu0
  %v235 = vld [vmem:[#allocation2] sm:$0xff]
  %v236 = vld [vmem:[#allocation2 + $0x8] sm:$0xff]
  %v237 = vld [vmem:[#allocation2 + $0x10] sm:$0xff]
  %v238 = vld [vmem:[#allocation2 + $0x18] sm:$0xff]
  %v239 = vld [vmem:[#allocation2 + $0x20] sm:$0xff]
  %v240 = vld [vmem:[#allocation2 + $0x28] sm:$0xff]
  %v241 = vld [vmem:[#allocation2 + $0x30] sm:$0xff]
  %v242 = vld [vmem:[#allocation2 + $0x38] sm:$0xff]
  %v243 = vld [vmem:[#allocation2 + $0x40] sm:$0xff]
  %v244 = vld [vmem:[#allocation2 + $0x48] sm:$0xff]
  %v245 = vld [vmem:[#allocation2 + $0x50] sm:$0xff]
  %v246 = vld [vmem:[#allocation2 + $0x58] sm:$0xff]
  %v247 = vld [vmem:[#allocation2 + $0x60] sm:$0xff]
  %v248 = vld [vmem:[#allocation2 + $0x68] sm:$0xff]
  %v249 = vld [vmem:[#allocation2 + $0x70] sm:$0xff]
  %v250 = vld [vmem:[#allocation2 + $0x78] sm:$0xff]
  %v251 = vadd.f32 %v235, %v188
  %v252 = vadd.f32 %v236, %v191
  %v253 = vadd.f32 %v237, %v194
  %v254 = vadd.f32 %v238, %v197
  %v255 = vadd.f32 %v239, %v200
  %v256 = vadd.f32 %v240, %v203
  %v257 = vadd.f32 %v241, %v206
  %v258 = vadd.f32 %v242, %v209
  %v259 = vadd.f32 %v243, %v212
  %v260 = vadd.f32 %v244, %v215
  %v261 = vadd.f32 %v245, %v218
  %v262 = vadd.f32 %v246, %v221
  %v263 = vadd.f32 %v247, %v224
  %v264 = vadd.f32 %v248, %v227
  %v265 = vadd.f32 %v249, %v230
  %v266 = vadd.f32 %v250, %v233
  %267 = vst [vmem:[#allocation2] sm:$0xff] %v251
  %268 = vst [vmem:[#allocation2 + $0x8] sm:$0xff] %v252
  %269 = vst [vmem:[#allocation2 + $0x10] sm:$0xff] %v253
  %270 = vst [vmem:[#allocation2 + $0x18] sm:$0xff] %v254
  %271 = vst [vmem:[#allocation2 + $0x20] sm:$0xff] %v255
  %272 = vst [vmem:[#allocation2 + $0x28] sm:$0xff] %v256
  %273 = vst [vmem:[#allocation2 + $0x30] sm:$0xff] %v257
  %274 = vst [vmem:[#allocation2 + $0x38] sm:$0xff] %v258
  %275 = vst [vmem:[#allocation2 + $0x40] sm:$0xff] %v259
  %276 = vst [vmem:[#allocation2 + $0x48] sm:$0xff] %v260
  %277 = vst [vmem:[#allocation2 + $0x50] sm:$0xff] %v261
  %278 = vst [vmem:[#allocation2 + $0x58] sm:$0xff] %v262
  %279 = vst [vmem:[#allocation2 + $0x60] sm:$0xff] %v263
  %280 = vst [vmem:[#allocation2 + $0x68] sm:$0xff] %v264
  %281 = vst [vmem:[#allocation2 + $0x70] sm:$0xff] %v265
  %282 = vst [vmem:[#allocation2 + $0x78] sm:$0xff] %v266
  %v283 = vld [vmem:[%s23 + $0x2] sm:$0xff]
  %v284 = vld [vmem:[%s23 + $0x12] sm:$0xff]
  %v285 = vld [vmem:[%s23 + $0x22] sm:$0xff]
  %v286 = vld [vmem:[%s23 + $0x32] sm:$0xff]
  %v287 = vld [vmem:[%s23 + $0x42] sm:$0xff]
  %v288 = vld [vmem:[%s23 + $0x52] sm:$0xff]
  %v289 = vld [vmem:[%s23 + $0x62] sm:$0xff]
  %v290 = vld [vmem:[%s23 + $0x72] sm:$0xff]
  %v291 = vld [vmem:[%s23 + $0xa2] sm:$0xff]
  %v292 = vld [vmem:[%s23 + $0xb2] sm:$0xff]
  %v293 = vld [vmem:[%s23 + $0xc2] sm:$0xff]
  %v294 = vld [vmem:[%s23 + $0xd2] sm:$0xff]
  %v295 = vld [vmem:[%s23 + $0xe2] sm:$0xff]
  %v296 = vld [vmem:[%s23 + $0xf2] sm:$0xff]
  %v297 = vld [vmem:[%s23 + $0x102] sm:$0xff]
  %v298 = vld [vmem:[%s23 + $0x112] sm:$0xff]
  %s299 = scalar_lea.vmem %s1, 256
  %v300 = vld [vmem:[%s299] sm:$0xff]
  %v301 = vld [vmem:[%s299 + $0x8] sm:$0xff]
  %v302 = vld [vmem:[%s299 + $0x10] sm:$0xff]
  %v303 = vld [vmem:[%s299 + $0x18] sm:$0xff]
  %v304 = vld [vmem:[%s299 + $0x20] sm:$0xff]
  %v305 = vld [vmem:[%s299 + $0x28] sm:$0xff]
  %v306 = vld [vmem:[%s299 + $0x30] sm:$0xff]
  %v307 = vld [vmem:[%s299 + $0x38] sm:$0xff]
  %v308 = vld [vmem:[%s299 + $0x40] sm:$0xff]
  %v309 = vld [vmem:[%s299 + $0x48] sm:$0xff]
  %v310 = vld [vmem:[%s299 + $0x50] sm:$0xff]
  %v311 = vld [vmem:[%s299 + $0x58] sm:$0xff]
  %v312 = vld [vmem:[%s299 + $0x60] sm:$0xff]
  %v313 = vld [vmem:[%s299 + $0x68] sm:$0xff]
  %v314 = vld [vmem:[%s299 + $0x70] sm:$0xff]
  %v315 = vld [vmem:[%s299 + $0x78] sm:$0xff]
  %316 = vmatpush.msra.mxu0 %v315
  %317 = vmatpush.msra.mxu0 %v314
  %318 = vmatpush.msra.mxu0 %v313
  %319 = vmatpush.msra.mxu0 %v312
  %320 = vmatpush.msra.mxu0 %v311
  %321 = vmatpush.msra.mxu0 %v310
  %322 = vmatpush.msra.mxu0 %v309
  %323 = vmatpush.msra.mxu0 %v308
  %324 = vmatpush.msra.mxu0 %v307
  %325 = vmatpush.msra.mxu0 %v306
  %326 = vmatpush.msra.mxu0 %v305
  %327 = vmatpush.msra.mxu0 %v304
  %328 = vmatpush.msra.mxu0 %v303
  %329 = vmatpush.msra.mxu0 %v302
  %330 = vmatpush.msra.mxu0 %v301
  %331 = vmatpush.msra.mxu0 %v300
  %332 = vmatmul.f32.gmra.mxu0 %v283
  %v333 = vpop.f32.mrf.mxu0
  %v334 = vadd.f32 0.0, %v333
  %335 = vmatmul.f32.gmra.mxu0 %v284
  %v336 = vpop.f32.mrf.mxu0
  %v337 = vadd.f32 0.0, %v336
  %338 = vmatmul.f32.gmra.mxu0 %v285
  %v339 = vpop.f32.mrf.mxu0
  %v340 = vadd.f32 0.0, %v339
  %341 = vmatmul.f32.gmra.mxu0 %v286
  %v342 = vpop.f32.mrf.mxu0
  %v343 = vadd.f32 0.0, %v342
  %344 = vmatmul.f32.gmra.mxu0 %v287
  %v345 = vpop.f32.mrf.mxu0
  %v346 = vadd.f32 0.0, %v345
  %347 = vmatmul.f32.gmra.mxu0 %v288
  %v348 = vpop.f32.mrf.mxu0
  %v349 = vadd.f32 0.0, %v348
  %350 = vmatmul.f32.gmra.mxu0 %v289
  %v351 = vpop.f32.mrf.mxu0
  %v352 = vadd.f32 0.0, %v351
  %353 = vmatmul.f32.gmra.mxu0 %v290
  %v354 = vpop.f32.mrf.mxu0
  %v355 = vadd.f32 0.0, %v354
  %356 = vmatmul.f32.gmra.mxu0 %v291
  %v357 = vpop.f32.mrf.mxu0
  %v358 = vadd.f32 0.0, %v357
  %359 = vmatmul.f32.gmra.mxu0 %v292
  %v360 = vpop.f32.mrf.mxu0
  %v361 = vadd.f32 0.0, %v360
  %362 = vmatmul.f32.gmra.mxu0 %v293
  %v363 = vpop.f32.mrf.mxu0
  %v364 = vadd.f32 0.0, %v363
  %365 = vmatmul.f32.gmra.mxu0 %v294
  %v366 = vpop.f32.mrf.mxu0
  %v367 = vadd.f32 0.0, %v366
  %368 = vmatmul.f32.gmra.mxu0 %v295
  %v369 = vpop.f32.mrf.mxu0
  %v370 = vadd.f32 0.0, %v369
  %371 = vmatmul.f32.gmra.mxu0 %v296
  %v372 = vpop.f32.mrf.mxu0
  %v373 = vadd.f32 0.0, %v372
  %374 = vmatmul.f32.gmra.mxu0 %v297
  %v375 = vpop.f32.mrf.mxu0
  %v376 = vadd.f32 0.0, %v375
  %377 = vmatmul.f32.gmra.mxu0 %v298
  %v378 = vpop.f32.mrf.mxu0
  %v379 = vadd.f32 0.0, %v378
  %380 = vdwg.mxu0
  %v381 = vld [vmem:[#allocation2] sm:$0xff]
  %v382 = vld [vmem:[#allocation2 + $0x8] sm:$0xff]
  %v383 = vld [vmem:[#allocation2 + $0x10] sm:$0xff]
  %v384 = vld [vmem:[#allocation2 + $0x18] sm:$0xff]
  %v385 = vld [vmem:[#allocation2 + $0x20] sm:$0xff]
  %v386 = vld [vmem:[#allocation2 + $0x28] sm:$0xff]
  %v387 = vld [vmem:[#allocation2 + $0x30] sm:$0xff]
  %v388 = vld [vmem:[#allocation2 + $0x38] sm:$0xff]
  %v389 = vld [vmem:[#allocation2 + $0x40] sm:$0xff]
  %v390 = vld [vmem:[#allocation2 + $0x48] sm:$0xff]
  %v391 = vld [vmem:[#allocation2 + $0x50] sm:$0xff]
  %v392 = vld [vmem:[#allocation2 + $0x58] sm:$0xff]
  %v393 = vld [vmem:[#allocation2 + $0x60] sm:$0xff]
  %v394 = vld [vmem:[#allocation2 + $0x68] sm:$0xff]
  %v395 = vld [vmem:[#allocation2 + $0x70] sm:$0xff]
  %v396 = vld [vmem:[#allocation2 + $0x78] sm:$0xff]
  %v397 = vadd.f32 %v381, %v334
  %v398 = vadd.f32 %v382, %v337
  %v399 = vadd.f32 %v383, %v340
  %v400 = vadd.f32 %v384, %v343
  %v401 = vadd.f32 %v385, %v346
  %v402 = vadd.f32 %v386, %v349
  %v403 = vadd.f32 %v387, %v352
  %v404 = vadd.f32 %v388, %v355
  %v405 = vadd.f32 %v389, %v358
  %v406 = vadd.f32 %v390, %v361
  %v407 = vadd.f32 %v391, %v364
  %v408 = vadd.f32 %v392, %v367
  %v409 = vadd.f32 %v393, %v370
  %v410 = vadd.f32 %v394, %v373
  %v411 = vadd.f32 %v395, %v376
  %v412 = vadd.f32 %v396, %v379
  %413 = vst [vmem:[#allocation2] sm:$0xff] %v397
  %414 = vst [vmem:[#allocation2 + $0x8] sm:$0xff] %v398
  %415 = vst [vmem:[#allocation2 + $0x10] sm:$0xff] %v399
  %416 = vst [vmem:[#allocation2 + $0x18] sm:$0xff] %v400
  %417 = vst [vmem:[#allocation2 + $0x20] sm:$0xff] %v401
  %418 = vst [vmem:[#allocation2 + $0x28] sm:$0xff] %v402
  %419 = vst [vmem:[#allocation2 + $0x30] sm:$0xff] %v403
  %420 = vst [vmem:[#allocation2 + $0x38] sm:$0xff] %v404
  %421 = vst [vmem:[#allocation2 + $0x40] sm:$0xff] %v405
  %422 = vst [vmem:[#allocation2 + $0x48] sm:$0xff] %v406
  %423 = vst [vmem:[#allocation2 + $0x50] sm:$0xff] %v407
  %424 = vst [vmem:[#allocation2 + $0x58] sm:$0xff] %v408
  %425 = vst [vmem:[#allocation2 + $0x60] sm:$0xff] %v409
  %426 = vst [vmem:[#allocation2 + $0x68] sm:$0xff] %v410
  %427 = vst [vmem:[#allocation2 + $0x70] sm:$0xff] %v411
  %428 = vst [vmem:[#allocation2 + $0x78] sm:$0xff] %v412
  %s429 = sadd.s32 %s21, 1
  %s430 = smul.u32 %s429, 16
  %s431 = scalar_lea.vmem %s0, %s430
  %v432 = vld [vmem:[%s431] sm:$0xff]
  %v433 = vld [vmem:[%s431 + $0x10] sm:$0xff]
  %v434 = vld [vmem:[%s431 + $0x20] sm:$0xff]
  %v435 = vld [vmem:[%s431 + $0x30] sm:$0xff]
  %v436 = vld [vmem:[%s431 + $0x40] sm:$0xff]
  %v437 = vld [vmem:[%s431 + $0x50] sm:$0xff]
  %v438 = vld [vmem:[%s431 + $0x60] sm:$0xff]
  %v439 = vld [vmem:[%s431 + $0x70] sm:$0xff]
  %v440 = vld [vmem:[%s431 + $0xa0] sm:$0xff]
  %v441 = vld [vmem:[%s431 + $0xb0] sm:$0xff]
  %v442 = vld [vmem:[%s431 + $0xc0] sm:$0xff]
  %v443 = vld [vmem:[%s431 + $0xd0] sm:$0xff]
  %v444 = vld [vmem:[%s431 + $0xe0] sm:$0xff]
  %v445 = vld [vmem:[%s431 + $0xf0] sm:$0xff]
  %v446 = vld [vmem:[%s431 + $0x100] sm:$0xff]
  %v447 = vld [vmem:[%s431 + $0x110] sm:$0xff]
  %s448 = scalar_lea.vmem %s1, 384
  %v449 = vld [vmem:[%s448] sm:$0xff]
  %v450 = vld [vmem:[%s448 + $0x8] sm:$0xff]
  %v451 = vld [vmem:[%s448 + $0x10] sm:$0xff]
  %v452 = vld [vmem:[%s448 + $0x18] sm:$0xff]
  %v453 = vld [vmem:[%s448 + $0x20] sm:$0xff]
  %v454 = vld [vmem:[%s448 + $0x28] sm:$0xff]
  %v455 = vld [vmem:[%s448 + $0x30] sm:$0xff]
  %v456 = vld [vmem:[%s448 + $0x38] sm:$0xff]
  %v457 = vld [vmem:[%s448 + $0x40] sm:$0xff]
  %v458 = vld [vmem:[%s448 + $0x48] sm:$0xff]
  %v459 = vld [vmem:[%s448 + $0x50] sm:$0xff]
  %v460 = vld [vmem:[%s448 + $0x58] sm:$0xff]
  %v461 = vld [vmem:[%s448 + $0x60] sm:$0xff]
  %v462 = vld [vmem:[%s448 + $0x68] sm:$0xff]
  %v463 = vld [vmem:[%s448 + $0x70] sm:$0xff]
  %v464 = vld [vmem:[%s448 + $0x78] sm:$0xff]
  %465 = vmatpush.msra.mxu0 %v464
  %466 = vmatpush.msra.mxu0 %v463
  %467 = vmatpush.msra.mxu0 %v462
  %468 = vmatpush.msra.mxu0 %v461
  %469 = vmatpush.msra.mxu0 %v460
  %470 = vmatpush.msra.mxu0 %v459
  %471 = vmatpush.msra.mxu0 %v458
  %472 = vmatpush.msra.mxu0 %v457
  %473 = vmatpush.msra.mxu0 %v456
  %474 = vmatpush.msra.mxu0 %v455
  %475 = vmatpush.msra.mxu0 %v454
  %476 = vmatpush.msra.mxu0 %v453
  %477 = vmatpush.msra.mxu0 %v452
  %478 = vmatpush.msra.mxu0 %v451
  %479 = vmatpush.msra.mxu0 %v450
  %480 = vmatpush.msra.mxu0 %v449
  %481 = vmatmul.f32.gmra.mxu0 %v432
  %v482 = vpop.f32.mrf.mxu0
  %v483 = vadd.f32 0.0, %v482
  %484 = vmatmul.f32.gmra.mxu0 %v433
  %v485 = vpop.f32.mrf.mxu0
  %v486 = vadd.f32 0.0, %v485
  %487 = vmatmul.f32.gmra.mxu0 %v434
  %v488 = vpop.f32.mrf.mxu0
  %v489 = vadd.f32 0.0, %v488
  %490 = vmatmul.f32.gmra.mxu0 %v435
  %v491 = vpop.f32.mrf.mxu0
  %v492 = vadd.f32 0.0, %v491
  %493 = vmatmul.f32.gmra.mxu0 %v436
  %v494 = vpop.f32.mrf.mxu0
  %v495 = vadd.f32 0.0, %v494
  %496 = vmatmul.f32.gmra.mxu0 %v437
  %v497 = vpop.f32.mrf.mxu0
  %v498 = vadd.f32 0.0, %v497
  %499 = vmatmul.f32.gmra.mxu0 %v438
  %v500 = vpop.f32.mrf.mxu0
  %v501 = vadd.f32 0.0, %v500
  %502 = vmatmul.f32.gmra.mxu0 %v439
  %v503 = vpop.f32.mrf.mxu0
  %v504 = vadd.f32 0.0, %v503
  %505 = vmatmul.f32.gmra.mxu0 %v440
  %v506 = vpop.f32.mrf.mxu0
  %v507 = vadd.f32 0.0, %v506
  %508 = vmatmul.f32.gmra.mxu0 %v441
  %v509 = vpop.f32.mrf.mxu0
  %v510 = vadd.f32 0.0, %v509
  %511 = vmatmul.f32.gmra.mxu0 %v442
  %v512 = vpop.f32.mrf.mxu0
  %v513 = vadd.f32 0.0, %v512
  %514 = vmatmul.f32.gmra.mxu0 %v443
  %v515 = vpop.f32.mrf.mxu0
  %v516 = vadd.f32 0.0, %v515
  %517 = vmatmul.f32.gmra.mxu0 %v444
  %v518 = vpop.f32.mrf.mxu0
  %v519 = vadd.f32 0.0, %v518
  %520 = vmatmul.f32.gmra.mxu0 %v445
  %v521 = vpop.f32.mrf.mxu0
  %v522 = vadd.f32 0.0, %v521
  %523 = vmatmul.f32.gmra.mxu0 %v446
  %v524 = vpop.f32.mrf.mxu0
  %v525 = vadd.f32 0.0, %v524
  %526 = vmatmul.f32.gmra.mxu0 %v447
  %v527 = vpop.f32.mrf.mxu0
  %v528 = vadd.f32 0.0, %v527
  %529 = vdwg.mxu0
  %v530 = vld [vmem:[#allocation2] sm:$0xff]
  %v531 = vld [vmem:[#allocation2 + $0x8] sm:$0xff]
  %v532 = vld [vmem:[#allocation2 + $0x10] sm:$0xff]
  %v533 = vld [vmem:[#allocation2 + $0x18] sm:$0xff]
  %v534 = vld [vmem:[#allocation2 + $0x20] sm:$0xff]
  %v535 = vld [vmem:[#allocation2 + $0x28] sm:$0xff]
  %v536 = vld [vmem:[#allocation2 + $0x30] sm:$0xff]
  %v537 = vld [vmem:[#allocation2 + $0x38] sm:$0xff]
  %v538 = vld [vmem:[#allocation2 + $0x40] sm:$0xff]
  %v539 = vld [vmem:[#allocation2 + $0x48] sm:$0xff]
  %v540 = vld [vmem:[#allocation2 + $0x50] sm:$0xff]
  %v541 = vld [vmem:[#allocation2 + $0x58] sm:$0xff]
  %v542 = vld [vmem:[#allocation2 + $0x60] sm:$0xff]
  %v543 = vld [vmem:[#allocation2 + $0x68] sm:$0xff]
  %v544 = vld [vmem:[#allocation2 + $0x70] sm:$0xff]
  %v545 = vld [vmem:[#allocation2 + $0x78] sm:$0xff]
  %v546 = vadd.f32 %v530, %v483
  %v547 = vadd.f32 %v531, %v486
  %v548 = vadd.f32 %v532, %v489
  %v549 = vadd.f32 %v533, %v492
  %v550 = vadd.f32 %v534, %v495
  %v551 = vadd.f32 %v535, %v498
  %v552 = vadd.f32 %v536, %v501
  %v553 = vadd.f32 %v537, %v504
  %v554 = vadd.f32 %v538, %v507
  %v555 = vadd.f32 %v539, %v510
  %v556 = vadd.f32 %v540, %v513
  %v557 = vadd.f32 %v541, %v516
  %v558 = vadd.f32 %v542, %v519
  %v559 = vadd.f32 %v543, %v522
  %v560 = vadd.f32 %v544, %v525
  %v561 = vadd.f32 %v545, %v528
  %562 = vst [vmem:[#allocation2] sm:$0xff] %v546
  %563 = vst [vmem:[#allocation2 + $0x8] sm:$0xff] %v547
  %564 = vst [vmem:[#allocation2 + $0x10] sm:$0xff] %v548
  %565 = vst [vmem:[#allocation2 + $0x18] sm:$0xff] %v549
  %566 = vst [vmem:[#allocation2 + $0x20] sm:$0xff] %v550
  %567 = vst [vmem:[#allocation2 + $0x28] sm:$0xff] %v551
  %568 = vst [vmem:[#allocation2 + $0x30] sm:$0xff] %v552
  %569 = vst [vmem:[#allocation2 + $0x38] sm:$0xff] %v553
  %570 = vst [vmem:[#allocation2 + $0x40] sm:$0xff] %v554
  %571 = vst [vmem:[#allocation2 + $0x48] sm:$0xff] %v555
  %572 = vst [vmem:[#allocation2 + $0x50] sm:$0xff] %v556
  %573 = vst [vmem:[#allocation2 + $0x58] sm:$0xff] %v557
  %574 = vst [vmem:[#allocation2 + $0x60] sm:$0xff] %v558
  %575 = vst [vmem:[#allocation2 + $0x68] sm:$0xff] %v559
  %576 = vst [vmem:[#allocation2 + $0x70] sm:$0xff] %v560
  %577 = vst [vmem:[#allocation2 + $0x78] sm:$0xff] %v561
  %v578 = vld [vmem:[%s431 + $0x1] sm:$0xff]
  %v579 = vld [vmem:[%s431 + $0x11] sm:$0xff]
  %v580 = vld [vmem:[%s431 + $0x21] sm:$0xff]
  %v581 = vld [vmem:[%s431 + $0x31] sm:$0xff]
  %v582 = vld [vmem:[%s431 + $0x41] sm:$0xff]
  %v583 = vld [vmem:[%s431 + $0x51] sm:$0xff]
  %v584 = vld [vmem:[%s431 + $0x61] sm:$0xff]
  %v585 = vld [vmem:[%s431 + $0x71] sm:$0xff]
  %v586 = vld [vmem:[%s431 + $0xa1] sm:$0xff]
  %v587 = vld [vmem:[%s431 + $0xb1] sm:$0xff]
  %v588 = vld [vmem:[%s431 + $0xc1] sm:$0xff]
  %v589 = vld [vmem:[%s431 + $0xd1] sm:$0xff]
  %v590 = vld [vmem:[%s431 + $0xe1] sm:$0xff]
  %v591 = vld [vmem:[%s431 + $0xf1] sm:$0xff]
  %v592 = vld [vmem:[%s431 + $0x101] sm:$0xff]
  %v593 = vld [vmem:[%s431 + $0x111] sm:$0xff]
  %s594 = scalar_lea.vmem %s1, 512
  %v595 = vld [vmem:[%s594] sm:$0xff]
  %v596 = vld [vmem:[%s594 + $0x8] sm:$0xff]
  %v597 = vld [vmem:[%s594 + $0x10] sm:$0xff]
  %v598 = vld [vmem:[%s594 + $0x18] sm:$0xff]
  %v599 = vld [vmem:[%s594 + $0x20] sm:$0xff]
  %v600 = vld [vmem:[%s594 + $0x28] sm:$0xff]
  %v601 = vld [vmem:[%s594 + $0x30] sm:$0xff]
  %v602 = vld [vmem:[%s594 + $0x38] sm:$0xff]
  %v603 = vld [vmem:[%s594 + $0x40] sm:$0xff]
  %v604 = vld [vmem:[%s594 + $0x48] sm:$0xff]
  %v605 = vld [vmem:[%s594 + $0x50] sm:$0xff]
  %v606 = vld [vmem:[%s594 + $0x58] sm:$0xff]
  %v607 = vld [vmem:[%s594 + $0x60] sm:$0xff]
  %v608 = vld [vmem:[%s594 + $0x68] sm:$0xff]
  %v609 = vld [vmem:[%s594 + $0x70] sm:$0xff]
  %v610 = vld [vmem:[%s594 + $0x78] sm:$0xff]
  %611 = vmatpush.msra.mxu0 %v610
  %612 = vmatpush.msra.mxu0 %v609
  %613 = vmatpush.msra.mxu0 %v608
  %614 = vmatpush.msra.mxu0 %v607
  %615 = vmatpush.msra.mxu0 %v606
  %616 = vmatpush.msra.mxu0 %v605
  %617 = vmatpush.msra.mxu0 %v604
  %618 = vmatpush.msra.mxu0 %v603
  %619 = vmatpush.msra.mxu0 %v602
  %620 = vmatpush.msra.mxu0 %v601
  %621 = vmatpush.msra.mxu0 %v600
  %622 = vmatpush.msra.mxu0 %v599
  %623 = vmatpush.msra.mxu0 %v598
  %624 = vmatpush.msra.mxu0 %v597
  %625 = vmatpush.msra.mxu0 %v596
  %626 = vmatpush.msra.mxu0 %v595
  %627 = vmatmul.f32.gmra.mxu0 %v578
  %v628 = vpop.f32.mrf.mxu0
  %v629 = vadd.f32 0.0, %v628
  %630 = vmatmul.f32.gmra.mxu0 %v579
  %v631 = vpop.f32.mrf.mxu0
  %v632 = vadd.f32 0.0, %v631
  %633 = vmatmul.f32.gmra.mxu0 %v580
  %v634 = vpop.f32.mrf.mxu0
  %v635 = vadd.f32 0.0, %v634
  %636 = vmatmul.f32.gmra.mxu0 %v581
  %v637 = vpop.f32.mrf.mxu0
  %v638 = vadd.f32 0.0, %v637
  %639 = vmatmul.f32.gmra.mxu0 %v582
  %v640 = vpop.f32.mrf.mxu0
  %v641 = vadd.f32 0.0, %v640
  %642 = vmatmul.f32.gmra.mxu0 %v583
  %v643 = vpop.f32.mrf.mxu0
  %v644 = vadd.f32 0.0, %v643
  %645 = vmatmul.f32.gmra.mxu0 %v584
  %v646 = vpop.f32.mrf.mxu0
  %v647 = vadd.f32 0.0, %v646
  %648 = vmatmul.f32.gmra.mxu0 %v585
  %v649 = vpop.f32.mrf.mxu0
  %v650 = vadd.f32 0.0, %v649
  %651 = vmatmul.f32.gmra.mxu0 %v586
  %v652 = vpop.f32.mrf.mxu0
  %v653 = vadd.f32 0.0, %v652
  %654 = vmatmul.f32.gmra.mxu0 %v587
  %v655 = vpop.f32.mrf.mxu0
  %v656 = vadd.f32 0.0, %v655
  %657 = vmatmul.f32.gmra.mxu0 %v588
  %v658 = vpop.f32.mrf.mxu0
  %v659 = vadd.f32 0.0, %v658
  %660 = vmatmul.f32.gmra.mxu0 %v589
  %v661 = vpop.f32.mrf.mxu0
  %v662 = vadd.f32 0.0, %v661
  %663 = vmatmul.f32.gmra.mxu0 %v590
  %v664 = vpop.f32.mrf.mxu0
  %v665 = vadd.f32 0.0, %v664
  %666 = vmatmul.f32.gmra.mxu0 %v591
  %v667 = vpop.f32.mrf.mxu0
  %v668 = vadd.f32 0.0, %v667
  %669 = vmatmul.f32.gmra.mxu0 %v592
  %v670 = vpop.f32.mrf.mxu0
  %v671 = vadd.f32 0.0, %v670
  %672 = vmatmul.f32.gmra.mxu0 %v593
  %v673 = vpop.f32.mrf.mxu0
  %v674 = vadd.f32 0.0, %v673
  %675 = vdwg.mxu0
  %v676 = vld [vmem:[#allocation2] sm:$0xff]
  %v677 = vld [vmem:[#allocation2 + $0x8] sm:$0xff]
  %v678 = vld [vmem:[#allocation2 + $0x10] sm:$0xff]
  %v679 = vld [vmem:[#allocation2 + $0x18] sm:$0xff]
  %v680 = vld [vmem:[#allocation2 + $0x20] sm:$0xff]
  %v681 = vld [vmem:[#allocation2 + $0x28] sm:$0xff]
  %v682 = vld [vmem:[#allocation2 + $0x30] sm:$0xff]
  %v683 = vld [vmem:[#allocation2 + $0x38] sm:$0xff]
  %v684 = vld [vmem:[#allocation2 + $0x40] sm:$0xff]
  %v685 = vld [vmem:[#allocation2 + $0x48] sm:$0xff]
  %v686 = vld [vmem:[#allocation2 + $0x50] sm:$0xff]
  %v687 = vld [vmem:[#allocation2 + $0x58] sm:$0xff]
  %v688 = vld [vmem:[#allocation2 + $0x60] sm:$0xff]
  %v689 = vld [vmem:[#allocation2 + $0x68] sm:$0xff]
  %v690 = vld [vmem:[#allocation2 + $0x70] sm:$0xff]
  %v691 = vld [vmem:[#allocation2 + $0x78] sm:$0xff]
  %v692 = vadd.f32 %v676, %v629
  %v693 = vadd.f32 %v677, %v632
  %v694 = vadd.f32 %v678, %v635
  %v695 = vadd.f32 %v679, %v638
  %v696 = vadd.f32 %v680, %v641
  %v697 = vadd.f32 %v681, %v644
  %v698 = vadd.f32 %v682, %v647
  %v699 = vadd.f32 %v683, %v650
  %v700 = vadd.f32 %v684, %v653
  %v701 = vadd.f32 %v685, %v656
  %v702 = vadd.f32 %v686, %v659
  %v703 = vadd.f32 %v687, %v662
  %v704 = vadd.f32 %v688, %v665
  %v705 = vadd.f32 %v689, %v668
  %v706 = vadd.f32 %v690, %v671
  %v707 = vadd.f32 %v691, %v674
  %708 = vst [vmem:[#allocation2] sm:$0xff] %v692
  %709 = vst [vmem:[#allocation2 + $0x8] sm:$0xff] %v693
  %710 = vst [vmem:[#allocation2 + $0x10] sm:$0xff] %v694
  %711 = vst [vmem:[#allocation2 + $0x18] sm:$0xff] %v695
  %712 = vst [vmem:[#allocation2 + $0x20] sm:$0xff] %v696
  %713 = vst [vmem:[#allocation2 + $0x28] sm:$0xff] %v697
  %714 = vst [vmem:[#allocation2 + $0x30] sm:$0xff] %v698
  %715 = vst [vmem:[#allocation2 + $0x38] sm:$0xff] %v699
  %716 = vst [vmem:[#allocation2 + $0x40] sm:$0xff] %v700
  %717 = vst [vmem:[#allocation2 + $0x48] sm:$0xff] %v701
  %718 = vst [vmem:[#allocation2 + $0x50] sm:$0xff] %v702
  %719 = vst [vmem:[#allocation2 + $0x58] sm:$0xff] %v703
  %720 = vst [vmem:[#allocation2 + $0x60] sm:$0xff] %v704
  %721 = vst [vmem:[#allocation2 + $0x68] sm:$0xff] %v705
  %722 = vst [vmem:[#allocation2 + $0x70] sm:$0xff] %v706
  %723 = vst [vmem:[#allocation2 + $0x78] sm:$0xff] %v707
  %v724 = vld [vmem:[%s431 + $0x2] sm:$0xff]
  %v725 = vld [vmem:[%s431 + $0x12] sm:$0xff]
  %v726 = vld [vmem:[%s431 + $0x22] sm:$0xff]
  %v727 = vld [vmem:[%s431 + $0x32] sm:$0xff]
  %v728 = vld [vmem:[%s431 + $0x42] sm:$0xff]
  %v729 = vld [vmem:[%s431 + $0x52] sm:$0xff]
  %v730 = vld [vmem:[%s431 + $0x62] sm:$0xff]
  %v731 = vld [vmem:[%s431 + $0x72] sm:$0xff]
  %v732 = vld [vmem:[%s431 + $0xa2] sm:$0xff]
  %v733 = vld [vmem:[%s431 + $0xb2] sm:$0xff]
  %v734 = vld [vmem:[%s431 + $0xc2] sm:$0xff]
  %v735 = vld [vmem:[%s431 + $0xd2] sm:$0xff]
  %v736 = vld [vmem:[%s431 + $0xe2] sm:$0xff]
  %v737 = vld [vmem:[%s431 + $0xf2] sm:$0xff]
  %v738 = vld [vmem:[%s431 + $0x102] sm:$0xff]
  %v739 = vld [vmem:[%s431 + $0x112] sm:$0xff]
  %s740 = scalar_lea.vmem %s1, 640
  %v741 = vld [vmem:[%s740] sm:$0xff]
  %v742 = vld [vmem:[%s740 + $0x8] sm:$0xff]
  %v743 = vld [vmem:[%s740 + $0x10] sm:$0xff]
  %v744 = vld [vmem:[%s740 + $0x18] sm:$0xff]
  %v745 = vld [vmem:[%s740 + $0x20] sm:$0xff]
  %v746 = vld [vmem:[%s740 + $0x28] sm:$0xff]
  %v747 = vld [vmem:[%s740 + $0x30] sm:$0xff]
  %v748 = vld [vmem:[%s740 + $0x38] sm:$0xff]
  %v749 = vld [vmem:[%s740 + $0x40] sm:$0xff]
  %v750 = vld [vmem:[%s740 + $0x48] sm:$0xff]
  %v751 = vld [vmem:[%s740 + $0x50] sm:$0xff]
  %v752 = vld [vmem:[%s740 + $0x58] sm:$0xff]
  %v753 = vld [vmem:[%s740 + $0x60] sm:$0xff]
  %v754 = vld [vmem:[%s740 + $0x68] sm:$0xff]
  %v755 = vld [vmem:[%s740 + $0x70] sm:$0xff]
  %v756 = vld [vmem:[%s740 + $0x78] sm:$0xff]
  %757 = vmatpush.msra.mxu0 %v756
  %758 = vmatpush.msra.mxu0 %v755
  %759 = vmatpush.msra.mxu0 %v754
  %760 = vmatpush.msra.mxu0 %v753
  %761 = vmatpush.msra.mxu0 %v752
  %762 = vmatpush.msra.mxu0 %v751
  %763 = vmatpush.msra.mxu0 %v750
  %764 = vmatpush.msra.mxu0 %v749
  %765 = vmatpush.msra.mxu0 %v748
  %766 = vmatpush.msra.mxu0 %v747
  %767 = vmatpush.msra.mxu0 %v746
  %768 = vmatpush.msra.mxu0 %v745
  %769 = vmatpush.msra.mxu0 %v744
  %770 = vmatpush.msra.mxu0 %v743
  %771 = vmatpush.msra.mxu0 %v742
  %772 = vmatpush.msra.mxu0 %v741
  %773 = vmatmul.f32.gmra.mxu0 %v724
  %v774 = vpop.f32.mrf.mxu0
  %v775 = vadd.f32 0.0, %v774
  %776 = vmatmul.f32.gmra.mxu0 %v725
  %v777 = vpop.f32.mrf.mxu0
  %v778 = vadd.f32 0.0, %v777
  %779 = vmatmul.f32.gmra.mxu0 %v726
  %v780 = vpop.f32.mrf.mxu0
  %v781 = vadd.f32 0.0, %v780
  %782 = vmatmul.f32.gmra.mxu0 %v727
  %v783 = vpop.f32.mrf.mxu0
  %v784 = vadd.f32 0.0, %v783
  %785 = vmatmul.f32.gmra.mxu0 %v728
  %v786 = vpop.f32.mrf.mxu0
  %v787 = vadd.f32 0.0, %v786
  %788 = vmatmul.f32.gmra.mxu0 %v729
  %v789 = vpop.f32.mrf.mxu0
  %v790 = vadd.f32 0.0, %v789
  %791 = vmatmul.f32.gmra.mxu0 %v730
  %v792 = vpop.f32.mrf.mxu0
  %v793 = vadd.f32 0.0, %v792
  %794 = vmatmul.f32.gmra.mxu0 %v731
  %v795 = vpop.f32.mrf.mxu0
  %v796 = vadd.f32 0.0, %v795
  %797 = vmatmul.f32.gmra.mxu0 %v732
  %v798 = vpop.f32.mrf.mxu0
  %v799 = vadd.f32 0.0, %v798
  %800 = vmatmul.f32.gmra.mxu0 %v733
  %v801 = vpop.f32.mrf.mxu0
  %v802 = vadd.f32 0.0, %v801
  %803 = vmatmul.f32.gmra.mxu0 %v734
  %v804 = vpop.f32.mrf.mxu0
  %v805 = vadd.f32 0.0, %v804
  %806 = vmatmul.f32.gmra.mxu0 %v735
  %v807 = vpop.f32.mrf.mxu0
  %v808 = vadd.f32 0.0, %v807
  %809 = vmatmul.f32.gmra.mxu0 %v736
  %v810 = vpop.f32.mrf.mxu0
  %v811 = vadd.f32 0.0, %v810
  %812 = vmatmul.f32.gmra.mxu0 %v737
  %v813 = vpop.f32.mrf.mxu0
  %v814 = vadd.f32 0.0, %v813
  %815 = vmatmul.f32.gmra.mxu0 %v738
  %v816 = vpop.f32.mrf.mxu0
  %v817 = vadd.f32 0.0, %v816
  %818 = vmatmul.f32.gmra.mxu0 %v739
  %v819 = vpop.f32.mrf.mxu0
  %v820 = vadd.f32 0.0, %v819
  %821 = vdwg.mxu0
  %v822 = vld [vmem:[#allocation2] sm:$0xff]
  %v823 = vld [vmem:[#allocation2 + $0x8] sm:$0xff]
  %v824 = vld [vmem:[#allocation2 + $0x10] sm:$0xff]
  %v825 = vld [vmem:[#allocation2 + $0x18] sm:$0xff]
  %v826 = vld [vmem:[#allocation2 + $0x20] sm:$0xff]
  %v827 = vld [vmem:[#allocation2 + $0x28] sm:$0xff]
  %v828 = vld [vmem:[#allocation2 + $0x30] sm:$0xff]
  %v829 = vld [vmem:[#allocation2 + $0x38] sm:$0xff]
  %v830 = vld [vmem:[#allocation2 + $0x40] sm:$0xff]
  %v831 = vld [vmem:[#allocation2 + $0x48] sm:$0xff]
  %v832 = vld [vmem:[#allocation2 + $0x50] sm:$0xff]
  %v833 = vld [vmem:[#allocation2 + $0x58] sm:$0xff]
  %v834 = vld [vmem:[#allocation2 + $0x60] sm:$0xff]
  %v835 = vld [vmem:[#allocation2 + $0x68] sm:$0xff]
  %v836 = vld [vmem:[#allocation2 + $0x70] sm:$0xff]
  %v837 = vld [vmem:[#allocation2 + $0x78] sm:$0xff]
  %v838 = vadd.f32 %v822, %v775
  %v839 = vadd.f32 %v823, %v778
  %v840 = vadd.f32 %v824, %v781
  %v841 = vadd.f32 %v825, %v784
  %v842 = vadd.f32 %v826, %v787
  %v843 = vadd.f32 %v827, %v790
  %v844 = vadd.f32 %v828, %v793
  %v845 = vadd.f32 %v829, %v796
  %v846 = vadd.f32 %v830, %v799
  %v847 = vadd.f32 %v831, %v802
  %v848 = vadd.f32 %v832, %v805
  %v849 = vadd.f32 %v833, %v808
  %v850 = vadd.f32 %v834, %v811
  %v851 = vadd.f32 %v835, %v814
  %v852 = vadd.f32 %v836, %v817
  %v853 = vadd.f32 %v837, %v820
  %854 = vst [vmem:[#allocation2] sm:$0xff] %v838
  %855 = vst [vmem:[#allocation2 + $0x8] sm:$0xff] %v839
  %856 = vst [vmem:[#allocation2 + $0x10] sm:$0xff] %v840
  %857 = vst [vmem:[#allocation2 + $0x18] sm:$0xff] %v841
  %858 = vst [vmem:[#allocation2 + $0x20] sm:$0xff] %v842
  %859 = vst [vmem:[#allocation2 + $0x28] sm:$0xff] %v843
  %860 = vst [vmem:[#allocation2 + $0x30] sm:$0xff] %v844
  %861 = vst [vmem:[#allocation2 + $0x38] sm:$0xff] %v845
  %862 = vst [vmem:[#allocation2 + $0x40] sm:$0xff] %v846
  %863 = vst [vmem:[#allocation2 + $0x48] sm:$0xff] %v847
  %864 = vst [vmem:[#allocation2 + $0x50] sm:$0xff] %v848
  %865 = vst [vmem:[#allocation2 + $0x58] sm:$0xff] %v849
  %866 = vst [vmem:[#allocation2 + $0x60] sm:$0xff] %v850
  %867 = vst [vmem:[#allocation2 + $0x68] sm:$0xff] %v851
  %868 = vst [vmem:[#allocation2 + $0x70] sm:$0xff] %v852
  %869 = vst [vmem:[#allocation2 + $0x78] sm:$0xff] %v853
  %s870 = sadd.s32 %s21, 2
  %s871 = smul.u32 %s870, 16
  %s872 = scalar_lea.vmem %s0, %s871
  %v873 = vld [vmem:[%s872] sm:$0xff]
  %v874 = vld [vmem:[%s872 + $0x10] sm:$0xff]
  %v875 = vld [vmem:[%s872 + $0x20] sm:$0xff]
  %v876 = vld [vmem:[%s872 + $0x30] sm:$0xff]
  %v877 = vld [vmem:[%s872 + $0x40] sm:$0xff]
  %v878 = vld [vmem:[%s872 + $0x50] sm:$0xff]
  %v879 = vld [vmem:[%s872 + $0x60] sm:$0xff]
  %v880 = vld [vmem:[%s872 + $0x70] sm:$0xff]
  %v881 = vld [vmem:[%s872 + $0xa0] sm:$0xff]
  %v882 = vld [vmem:[%s872 + $0xb0] sm:$0xff]
  %v883 = vld [vmem:[%s872 + $0xc0] sm:$0xff]
  %v884 = vld [vmem:[%s872 + $0xd0] sm:$0xff]
  %v885 = vld [vmem:[%s872 + $0xe0] sm:$0xff]
  %v886 = vld [vmem:[%s872 + $0xf0] sm:$0xff]
  %v887 = vld [vmem:[%s872 + $0x100] sm:$0xff]
  %v888 = vld [vmem:[%s872 + $0x110] sm:$0xff]
  %s889 = scalar_lea.vmem %s1, 768
  %v890 = vld [vmem:[%s889] sm:$0xff]
  %v891 = vld [vmem:[%s889 + $0x8] sm:$0xff]
  %v892 = vld [vmem:[%s889 + $0x10] sm:$0xff]
  %v893 = vld [vmem:[%s889 + $0x18] sm:$0xff]
  %v894 = vld [vmem:[%s889 + $0x20] sm:$0xff]
  %v895 = vld [vmem:[%s889 + $0x28] sm:$0xff]
  %v896 = vld [vmem:[%s889 + $0x30] sm:$0xff]
  %v897 = vld [vmem:[%s889 + $0x38] sm:$0xff]
  %v898 = vld [vmem:[%s889 + $0x40] sm:$0xff]
  %v899 = vld [vmem:[%s889 + $0x48] sm:$0xff]
  %v900 = vld [vmem:[%s889 + $0x50] sm:$0xff]
  %v901 = vld [vmem:[%s889 + $0x58] sm:$0xff]
  %v902 = vld [vmem:[%s889 + $0x60] sm:$0xff]
  %v903 = vld [vmem:[%s889 + $0x68] sm:$0xff]
  %v904 = vld [vmem:[%s889 + $0x70] sm:$0xff]
  %v905 = vld [vmem:[%s889 + $0x78] sm:$0xff]
  %906 = vmatpush.msra.mxu0 %v905
  %907 = vmatpush.msra.mxu0 %v904
  %908 = vmatpush.msra.mxu0 %v903
  %909 = vmatpush.msra.mxu0 %v902
  %910 = vmatpush.msra.mxu0 %v901
  %911 = vmatpush.msra.mxu0 %v900
  %912 = vmatpush.msra.mxu0 %v899
  %913 = vmatpush.msra.mxu0 %v898
  %914 = vmatpush.msra.mxu0 %v897
  %915 = vmatpush.msra.mxu0 %v896
  %916 = vmatpush.msra.mxu0 %v895
  %917 = vmatpush.msra.mxu0 %v894
  %918 = vmatpush.msra.mxu0 %v893
  %919 = vmatpush.msra.mxu0 %v892
  %920 = vmatpush.msra.mxu0 %v891
  %921 = vmatpush.msra.mxu0 %v890
  %922 = vmatmul.f32.gmra.mxu0 %v873
  %v923 = vpop.f32.mrf.mxu0
  %v924 = vadd.f32 0.0, %v923
  %925 = vmatmul.f32.gmra.mxu0 %v874
  %v926 = vpop.f32.mrf.mxu0
  %v927 = vadd.f32 0.0, %v926
  %928 = vmatmul.f32.gmra.mxu0 %v875
  %v929 = vpop.f32.mrf.mxu0
  %v930 = vadd.f32 0.0, %v929
  %931 = vmatmul.f32.gmra.mxu0 %v876
  %v932 = vpop.f32.mrf.mxu0
  %v933 = vadd.f32 0.0, %v932
  %934 = vmatmul.f32.gmra.mxu0 %v877
  %v935 = vpop.f32.mrf.mxu0
  %v936 = vadd.f32 0.0, %v935
  %937 = vmatmul.f32.gmra.mxu0 %v878
  %v938 = vpop.f32.mrf.mxu0
  %v939 = vadd.f32 0.0, %v938
  %940 = vmatmul.f32.gmra.mxu0 %v879
  %v941 = vpop.f32.mrf.mxu0
  %v942 = vadd.f32 0.0, %v941
  %943 = vmatmul.f32.gmra.mxu0 %v880
  %v944 = vpop.f32.mrf.mxu0
  %v945 = vadd.f32 0.0, %v944
  %946 = vmatmul.f32.gmra.mxu0 %v881
  %v947 = vpop.f32.mrf.mxu0
  %v948 = vadd.f32 0.0, %v947
  %949 = vmatmul.f32.gmra.mxu0 %v882
  %v950 = vpop.f32.mrf.mxu0
  %v951 = vadd.f32 0.0, %v950
  %952 = vmatmul.f32.gmra.mxu0 %v883
  %v953 = vpop.f32.mrf.mxu0
  %v954 = vadd.f32 0.0, %v953
  %955 = vmatmul.f32.gmra.mxu0 %v884
  %v956 = vpop.f32.mrf.mxu0
  %v957 = vadd.f32 0.0, %v956
  %958 = vmatmul.f32.gmra.mxu0 %v885
  %v959 = vpop.f32.mrf.mxu0
  %v960 = vadd.f32 0.0, %v959
  %961 = vmatmul.f32.gmra.mxu0 %v886
  %v962 = vpop.f32.mrf.mxu0
  %v963 = vadd.f32 0.0, %v962
  %964 = vmatmul.f32.gmra.mxu0 %v887
  %v965 = vpop.f32.mrf.mxu0
  %v966 = vadd.f32 0.0, %v965
  %967 = vmatmul.f32.gmra.mxu0 %v888
  %v968 = vpop.f32.mrf.mxu0
  %v969 = vadd.f32 0.0, %v968
  %970 = vdwg.mxu0
  %v971 = vld [vmem:[#allocation2] sm:$0xff]
  %v972 = vld [vmem:[#allocation2 + $0x8] sm:$0xff]
  %v973 = vld [vmem:[#allocation2 + $0x10] sm:$0xff]
  %v974 = vld [vmem:[#allocation2 + $0x18] sm:$0xff]
  %v975 = vld [vmem:[#allocation2 + $0x20] sm:$0xff]
  %v976 = vld [vmem:[#allocation2 + $0x28] sm:$0xff]
  %v977 = vld [vmem:[#allocation2 + $0x30] sm:$0xff]
  %v978 = vld [vmem:[#allocation2 + $0x38] sm:$0xff]
  %v979 = vld [vmem:[#allocation2 + $0x40] sm:$0xff]
  %v980 = vld [vmem:[#allocation2 + $0x48] sm:$0xff]
  %v981 = vld [vmem:[#allocation2 + $0x50] sm:$0xff]
  %v982 = vld [vmem:[#allocation2 + $0x58] sm:$0xff]
  %v983 = vld [vmem:[#allocation2 + $0x60] sm:$0xff]
  %v984 = vld [vmem:[#allocation2 + $0x68] sm:$0xff]
  %v985 = vld [vmem:[#allocation2 + $0x70] sm:$0xff]
  %v986 = vld [vmem:[#allocation2 + $0x78] sm:$0xff]
  %v987 = vadd.f32 %v971, %v924
  %v988 = vadd.f32 %v972, %v927
  %v989 = vadd.f32 %v973, %v930
  %v990 = vadd.f32 %v974, %v933
  %v991 = vadd.f32 %v975, %v936
  %v992 = vadd.f32 %v976, %v939
  %v993 = vadd.f32 %v977, %v942
  %v994 = vadd.f32 %v978, %v945
  %v995 = vadd.f32 %v979, %v948
  %v996 = vadd.f32 %v980, %v951
  %v997 = vadd.f32 %v981, %v954
  %v998 = vadd.f32 %v982, %v957
  %v999 = vadd.f32 %v983, %v960
  %v1000 = vadd.f32 %v984, %v963
  %v1001 = vadd.f32 %v985, %v966
  %v1002 = vadd.f32 %v986, %v969
  %1003 = vst [vmem:[#allocation2] sm:$0xff] %v987
  %1004 = vst [vmem:[#allocation2 + $0x8] sm:$0xff] %v988
  %1005 = vst [vmem:[#allocation2 + $0x10] sm:$0xff] %v989
  %1006 = vst [vmem:[#allocation2 + $0x18] sm:$0xff] %v990
  %1007 = vst [vmem:[#allocation2 + $0x20] sm:$0xff] %v991
  %1008 = vst [vmem:[#allocation2 + $0x28] sm:$0xff] %v992
  %1009 = vst [vmem:[#allocation2 + $0x30] sm:$0xff] %v993
  %1010 = vst [vmem:[#allocation2 + $0x38] sm:$0xff] %v994
  %1011 = vst [vmem:[#allocation2 + $0x40] sm:$0xff] %v995
  %1012 = vst [vmem:[#allocation2 + $0x48] sm:$0xff] %v996
  %1013 = vst [vmem:[#allocation2 + $0x50] sm:$0xff] %v997
  %1014 = vst [vmem:[#allocation2 + $0x58] sm:$0xff] %v998
  %1015 = vst [vmem:[#allocation2 + $0x60] sm:$0xff] %v999
  %1016 = vst [vmem:[#allocation2 + $0x68] sm:$0xff] %v1000
  %1017 = vst [vmem:[#allocation2 + $0x70] sm:$0xff] %v1001
  %1018 = vst [vmem:[#allocation2 + $0x78] sm:$0xff] %v1002
  %v1019 = vld [vmem:[%s872 + $0x1] sm:$0xff]
  %v1020 = vld [vmem:[%s872 + $0x11] sm:$0xff]
  %v1021 = vld [vmem:[%s872 + $0x21] sm:$0xff]
  %v1022 = vld [vmem:[%s872 + $0x31] sm:$0xff]
  %v1023 = vld [vmem:[%s872 + $0x41] sm:$0xff]
  %v1024 = vld [vmem:[%s872 + $0x51] sm:$0xff]
  %v1025 = vld [vmem:[%s872 + $0x61] sm:$0xff]
  %v1026 = vld [vmem:[%s872 + $0x71] sm:$0xff]
  %v1027 = vld [vmem:[%s872 + $0xa1] sm:$0xff]
  %v1028 = vld [vmem:[%s872 + $0xb1] sm:$0xff]
  %v1029 = vld [vmem:[%s872 + $0xc1] sm:$0xff]
  %v1030 = vld [vmem:[%s872 + $0xd1] sm:$0xff]
  %v1031 = vld [vmem:[%s872 + $0xe1] sm:$0xff]
  %v1032 = vld [vmem:[%s872 + $0xf1] sm:$0xff]
  %v1033 = vld [vmem:[%s872 + $0x101] sm:$0xff]
  %v1034 = vld [vmem:[%s872 + $0x111] sm:$0xff]
  %s1035 = scalar_lea.vmem %s1, 896
  %v1036 = vld [vmem:[%s1035] sm:$0xff]
  %v1037 = vld [vmem:[%s1035 + $0x8] sm:$0xff]
  %v1038 = vld [vmem:[%s1035 + $0x10] sm:$0xff]
  %v1039 = vld [vmem:[%s1035 + $0x18] sm:$0xff]
  %v1040 = vld [vmem:[%s1035 + $0x20] sm:$0xff]
  %v1041 = vld [vmem:[%s1035 + $0x28] sm:$0xff]
  %v1042 = vld [vmem:[%s1035 + $0x30] sm:$0xff]
  %v1043 = vld [vmem:[%s1035 + $0x38] sm:$0xff]
  %v1044 = vld [vmem:[%s1035 + $0x40] sm:$0xff]
  %v1045 = vld [vmem:[%s1035 + $0x48] sm:$0xff]
  %v1046 = vld [vmem:[%s1035 + $0x50] sm:$0xff]
  %v1047 = vld [vmem:[%s1035 + $0x58] sm:$0xff]
  %v1048 = vld [vmem:[%s1035 + $0x60] sm:$0xff]
  %v1049 = vld [vmem:[%s1035 + $0x68] sm:$0xff]
  %v1050 = vld [vmem:[%s1035 + $0x70] sm:$0xff]
  %v1051 = vld [vmem:[%s1035 + $0x78] sm:$0xff]
  %1052 = vmatpush.msra.mxu0 %v1051
  %1053 = vmatpush.msra.mxu0 %v1050
  %1054 = vmatpush.msra.mxu0 %v1049
  %1055 = vmatpush.msra.mxu0 %v1048
  %1056 = vmatpush.msra.mxu0 %v1047
  %1057 = vmatpush.msra.mxu0 %v1046
  %1058 = vmatpush.msra.mxu0 %v1045
  %1059 = vmatpush.msra.mxu0 %v1044
  %1060 = vmatpush.msra.mxu0 %v1043
  %1061 = vmatpush.msra.mxu0 %v1042
  %1062 = vmatpush.msra.mxu0 %v1041
  %1063 = vmatpush.msra.mxu0 %v1040
  %1064 = vmatpush.msra.mxu0 %v1039
  %1065 = vmatpush.msra.mxu0 %v1038
  %1066 = vmatpush.msra.mxu0 %v1037
  %1067 = vmatpush.msra.mxu0 %v1036
  %1068 = vmatmul.f32.gmra.mxu0 %v1019
  %v1069 = vpop.f32.mrf.mxu0
  %v1070 = vadd.f32 0.0, %v1069
  %1071 = vmatmul.f32.gmra.mxu0 %v1020
  %v1072 = vpop.f32.mrf.mxu0
  %v1073 = vadd.f32 0.0, %v1072
  %1074 = vmatmul.f32.gmra.mxu0 %v1021
  %v1075 = vpop.f32.mrf.mxu0
  %v1076 = vadd.f32 0.0, %v1075
  %1077 = vmatmul.f32.gmra.mxu0 %v1022
  %v1078 = vpop.f32.mrf.mxu0
  %v1079 = vadd.f32 0.0, %v1078
  %1080 = vmatmul.f32.gmra.mxu0 %v1023
  %v1081 = vpop.f32.mrf.mxu0
  %v1082 = vadd.f32 0.0, %v1081
  %1083 = vmatmul.f32.gmra.mxu0 %v1024
  %v1084 = vpop.f32.mrf.mxu0
  %v1085 = vadd.f32 0.0, %v1084
  %1086 = vmatmul.f32.gmra.mxu0 %v1025
  %v1087 = vpop.f32.mrf.mxu0
  %v1088 = vadd.f32 0.0, %v1087
  %1089 = vmatmul.f32.gmra.mxu0 %v1026
  %v1090 = vpop.f32.mrf.mxu0
  %v1091 = vadd.f32 0.0, %v1090
  %1092 = vmatmul.f32.gmra.mxu0 %v1027
  %v1093 = vpop.f32.mrf.mxu0
  %v1094 = vadd.f32 0.0, %v1093
  %1095 = vmatmul.f32.gmra.mxu0 %v1028
  %v1096 = vpop.f32.mrf.mxu0
  %v1097 = vadd.f32 0.0, %v1096
  %1098 = vmatmul.f32.gmra.mxu0 %v1029
  %v1099 = vpop.f32.mrf.mxu0
  %v1100 = vadd.f32 0.0, %v1099
  %1101 = vmatmul.f32.gmra.mxu0 %v1030
  %v1102 = vpop.f32.mrf.mxu0
  %v1103 = vadd.f32 0.0, %v1102
  %1104 = vmatmul.f32.gmra.mxu0 %v1031
  %v1105 = vpop.f32.mrf.mxu0
  %v1106 = vadd.f32 0.0, %v1105
  %1107 = vmatmul.f32.gmra.mxu0 %v1032
  %v1108 = vpop.f32.mrf.mxu0
  %v1109 = vadd.f32 0.0, %v1108
  %1110 = vmatmul.f32.gmra.mxu0 %v1033
  %v1111 = vpop.f32.mrf.mxu0
  %v1112 = vadd.f32 0.0, %v1111
  %1113 = vmatmul.f32.gmra.mxu0 %v1034
  %v1114 = vpop.f32.mrf.mxu0
  %v1115 = vadd.f32 0.0, %v1114
  %1116 = vdwg.mxu0
  %v1117 = vld [vmem:[#allocation2] sm:$0xff]
  %v1118 = vld [vmem:[#allocation2 + $0x8] sm:$0xff]
  %v1119 = vld [vmem:[#allocation2 + $0x10] sm:$0xff]
  %v1120 = vld [vmem:[#allocation2 + $0x18] sm:$0xff]
  %v1121 = vld [vmem:[#allocation2 + $0x20] sm:$0xff]
  %v1122 = vld [vmem:[#allocation2 + $0x28] sm:$0xff]
  %v1123 = vld [vmem:[#allocation2 + $0x30] sm:$0xff]
  %v1124 = vld [vmem:[#allocation2 + $0x38] sm:$0xff]
  %v1125 = vld [vmem:[#allocation2 + $0x40] sm:$0xff]
  %v1126 = vld [vmem:[#allocation2 + $0x48] sm:$0xff]
  %v1127 = vld [vmem:[#allocation2 + $0x50] sm:$0xff]
  %v1128 = vld [vmem:[#allocation2 + $0x58] sm:$0xff]
  %v1129 = vld [vmem:[#allocation2 + $0x60] sm:$0xff]
  %v1130 = vld [vmem:[#allocation2 + $0x68] sm:$0xff]
  %v1131 = vld [vmem:[#allocation2 + $0x70] sm:$0xff]
  %v1132 = vld [vmem:[#allocation2 + $0x78] sm:$0xff]
  %v1133 = vadd.f32 %v1117, %v1070
  %v1134 = vadd.f32 %v1118, %v1073
  %v1135 = vadd.f32 %v1119, %v1076
  %v1136 = vadd.f32 %v1120, %v1079
  %v1137 = vadd.f32 %v1121, %v1082
  %v1138 = vadd.f32 %v1122, %v1085
  %v1139 = vadd.f32 %v1123, %v1088
  %v1140 = vadd.f32 %v1124, %v1091
  %v1141 = vadd.f32 %v1125, %v1094
  %v1142 = vadd.f32 %v1126, %v1097
  %v1143 = vadd.f32 %v1127, %v1100
  %v1144 = vadd.f32 %v1128, %v1103
  %v1145 = vadd.f32 %v1129, %v1106
  %v1146 = vadd.f32 %v1130, %v1109
  %v1147 = vadd.f32 %v1131, %v1112
  %v1148 = vadd.f32 %v1132, %v1115
  %1149 = vst [vmem:[#allocation2] sm:$0xff] %v1133
  %1150 = vst [vmem:[#allocation2 + $0x8] sm:$0xff] %v1134
  %1151 = vst [vmem:[#allocation2 + $0x10] sm:$0xff] %v1135
  %1152 = vst [vmem:[#allocation2 + $0x18] sm:$0xff] %v1136
  %1153 = vst [vmem:[#allocation2 + $0x20] sm:$0xff] %v1137
  %1154 = vst [vmem:[#allocation2 + $0x28] sm:$0xff] %v1138
  %1155 = vst [vmem:[#allocation2 + $0x30] sm:$0xff] %v1139
  %1156 = vst [vmem:[#allocation2 + $0x38] sm:$0xff] %v1140
  %1157 = vst [vmem:[#allocation2 + $0x40] sm:$0xff] %v1141
  %1158 = vst [vmem:[#allocation2 + $0x48] sm:$0xff] %v1142
  %1159 = vst [vmem:[#allocation2 + $0x50] sm:$0xff] %v1143
  %1160 = vst [vmem:[#allocation2 + $0x58] sm:$0xff] %v1144
  %1161 = vst [vmem:[#allocation2 + $0x60] sm:$0xff] %v1145
  %1162 = vst [vmem:[#allocation2 + $0x68] sm:$0xff] %v1146
  %1163 = vst [vmem:[#allocation2 + $0x70] sm:$0xff] %v1147
  %1164 = vst [vmem:[#allocation2 + $0x78] sm:$0xff] %v1148
  %v1165 = vld [vmem:[%s872 + $0x2] sm:$0xff]
  %v1166 = vld [vmem:[%s872 + $0x12] sm:$0xff]
  %v1167 = vld [vmem:[%s872 + $0x22] sm:$0xff]
  %v1168 = vld [vmem:[%s872 + $0x32] sm:$0xff]
  %v1169 = vld [vmem:[%s872 + $0x42] sm:$0xff]
  %v1170 = vld [vmem:[%s872 + $0x52] sm:$0xff]
  %v1171 = vld [vmem:[%s872 + $0x62] sm:$0xff]
  %v1172 = vld [vmem:[%s872 + $0x72] sm:$0xff]
  %v1173 = vld [vmem:[%s872 + $0xa2] sm:$0xff]
  %v1174 = vld [vmem:[%s872 + $0xb2] sm:$0xff]
  %v1175 = vld [vmem:[%s872 + $0xc2] sm:$0xff]
  %v1176 = vld [vmem:[%s872 + $0xd2] sm:$0xff]
  %v1177 = vld [vmem:[%s872 + $0xe2] sm:$0xff]
  %v1178 = vld [vmem:[%s872 + $0xf2] sm:$0xff]
  %v1179 = vld [vmem:[%s872 + $0x102] sm:$0xff]
  %v1180 = vld [vmem:[%s872 + $0x112] sm:$0xff]
  %s1181 = scalar_lea.vmem %s1, 1024
  %v1182 = vld [vmem:[%s1181] sm:$0xff]
  %v1183 = vld [vmem:[%s1181 + $0x8] sm:$0xff]
  %v1184 = vld [vmem:[%s1181 + $0x10] sm:$0xff]
  %v1185 = vld [vmem:[%s1181 + $0x18] sm:$0xff]
  %v1186 = vld [vmem:[%s1181 + $0x20] sm:$0xff]
  %v1187 = vld [vmem:[%s1181 + $0x28] sm:$0xff]
  %v1188 = vld [vmem:[%s1181 + $0x30] sm:$0xff]
  %v1189 = vld [vmem:[%s1181 + $0x38] sm:$0xff]
  %v1190 = vld [vmem:[%s1181 + $0x40] sm:$0xff]
  %v1191 = vld [vmem:[%s1181 + $0x48] sm:$0xff]
  %v1192 = vld [vmem:[%s1181 + $0x50] sm:$0xff]
  %v1193 = vld [vmem:[%s1181 + $0x58] sm:$0xff]
  %v1194 = vld [vmem:[%s1181 + $0x60] sm:$0xff]
  %v1195 = vld [vmem:[%s1181 + $0x68] sm:$0xff]
  %v1196 = vld [vmem:[%s1181 + $0x70] sm:$0xff]
  %v1197 = vld [vmem:[%s1181 + $0x78] sm:$0xff]
  %1198 = vmatpush.msra.mxu0 %v1197
  %1199 = vmatpush.msra.mxu0 %v1196
  %1200 = vmatpush.msra.mxu0 %v1195
  %1201 = vmatpush.msra.mxu0 %v1194
  %1202 = vmatpush.msra.mxu0 %v1193
  %1203 = vmatpush.msra.mxu0 %v1192
  %1204 = vmatpush.msra.mxu0 %v1191
  %1205 = vmatpush.msra.mxu0 %v1190
  %1206 = vmatpush.msra.mxu0 %v1189
  %1207 = vmatpush.msra.mxu0 %v1188
  %1208 = vmatpush.msra.mxu0 %v1187
  %1209 = vmatpush.msra.mxu0 %v1186
  %1210 = vmatpush.msra.mxu0 %v1185
  %1211 = vmatpush.msra.mxu0 %v1184
  %1212 = vmatpush.msra.mxu0 %v1183
  %1213 = vmatpush.msra.mxu0 %v1182
  %1214 = vmatmul.f32.gmra.mxu0 %v1165
  %v1215 = vpop.f32.mrf.mxu0
  %v1216 = vadd.f32 0.0, %v1215
  %1217 = vmatmul.f32.gmra.mxu0 %v1166
  %v1218 = vpop.f32.mrf.mxu0
  %v1219 = vadd.f32 0.0, %v1218
  %1220 = vmatmul.f32.gmra.mxu0 %v1167
  %v1221 = vpop.f32.mrf.mxu0
  %v1222 = vadd.f32 0.0, %v1221
  %1223 = vmatmul.f32.gmra.mxu0 %v1168
  %v1224 = vpop.f32.mrf.mxu0
  %v1225 = vadd.f32 0.0, %v1224
  %1226 = vmatmul.f32.gmra.mxu0 %v1169
  %v1227 = vpop.f32.mrf.mxu0
  %v1228 = vadd.f32 0.0, %v1227
  %1229 = vmatmul.f32.gmra.mxu0 %v1170
  %v1230 = vpop.f32.mrf.mxu0
  %v1231 = vadd.f32 0.0, %v1230
  %1232 = vmatmul.f32.gmra.mxu0 %v1171
  %v1233 = vpop.f32.mrf.mxu0
  %v1234 = vadd.f32 0.0, %v1233
  %1235 = vmatmul.f32.gmra.mxu0 %v1172
  %v1236 = vpop.f32.mrf.mxu0
  %v1237 = vadd.f32 0.0, %v1236
  %1238 = vmatmul.f32.gmra.mxu0 %v1173
  %v1239 = vpop.f32.mrf.mxu0
  %v1240 = vadd.f32 0.0, %v1239
  %1241 = vmatmul.f32.gmra.mxu0 %v1174
  %v1242 = vpop.f32.mrf.mxu0
  %v1243 = vadd.f32 0.0, %v1242
  %1244 = vmatmul.f32.gmra.mxu0 %v1175
  %v1245 = vpop.f32.mrf.mxu0
  %v1246 = vadd.f32 0.0, %v1245
  %1247 = vmatmul.f32.gmra.mxu0 %v1176
  %v1248 = vpop.f32.mrf.mxu0
  %v1249 = vadd.f32 0.0, %v1248
  %1250 = vmatmul.f32.gmra.mxu0 %v1177
  %v1251 = vpop.f32.mrf.mxu0
  %v1252 = vadd.f32 0.0, %v1251
  %1253 = vmatmul.f32.gmra.mxu0 %v1178
  %v1254 = vpop.f32.mrf.mxu0
  %v1255 = vadd.f32 0.0, %v1254
  %1256 = vmatmul.f32.gmra.mxu0 %v1179
  %v1257 = vpop.f32.mrf.mxu0
  %v1258 = vadd.f32 0.0, %v1257
  %1259 = vmatmul.f32.gmra.mxu0 %v1180
  %v1260 = vpop.f32.mrf.mxu0
  %v1261 = vadd.f32 0.0, %v1260
  %1262 = vdwg.mxu0
  %v1263 = vld [vmem:[#allocation2] sm:$0xff]
  %v1264 = vld [vmem:[#allocation2 + $0x8] sm:$0xff]
  %v1265 = vld [vmem:[#allocation2 + $0x10] sm:$0xff]
  %v1266 = vld [vmem:[#allocation2 + $0x18] sm:$0xff]
  %v1267 = vld [vmem:[#allocation2 + $0x20] sm:$0xff]
  %v1268 = vld [vmem:[#allocation2 + $0x28] sm:$0xff]
  %v1269 = vld [vmem:[#allocation2 + $0x30] sm:$0xff]
  %v1270 = vld [vmem:[#allocation2 + $0x38] sm:$0xff]
  %v1271 = vld [vmem:[#allocation2 + $0x40] sm:$0xff]
  %v1272 = vld [vmem:[#allocation2 + $0x48] sm:$0xff]
  %v1273 = vld [vmem:[#allocation2 + $0x50] sm:$0xff]
  %v1274 = vld [vmem:[#allocation2 + $0x58] sm:$0xff]
  %v1275 = vld [vmem:[#allocation2 + $0x60] sm:$0xff]
  %v1276 = vld [vmem:[#allocation2 + $0x68] sm:$0xff]
  %v1277 = vld [vmem:[#allocation2 + $0x70] sm:$0xff]
  %v1278 = vld [vmem:[#allocation2 + $0x78] sm:$0xff]
  %v1279 = vadd.f32 %v1263, %v1216
  %v1280 = vadd.f32 %v1264, %v1219
  %v1281 = vadd.f32 %v1265, %v1222
  %v1282 = vadd.f32 %v1266, %v1225
  %v1283 = vadd.f32 %v1267, %v1228
  %v1284 = vadd.f32 %v1268, %v1231
  %v1285 = vadd.f32 %v1269, %v1234
  %v1286 = vadd.f32 %v1270, %v1237
  %v1287 = vadd.f32 %v1271, %v1240
  %v1288 = vadd.f32 %v1272, %v1243
  %v1289 = vadd.f32 %v1273, %v1246
  %v1290 = vadd.f32 %v1274, %v1249
  %v1291 = vadd.f32 %v1275, %v1252
  %v1292 = vadd.f32 %v1276, %v1255
  %v1293 = vadd.f32 %v1277, %v1258
  %v1294 = vadd.f32 %v1278, %v1261
  %1295 = vst [vmem:[#allocation2] sm:$0xff] %v1279
  %1296 = vst [vmem:[#allocation2 + $0x8] sm:$0xff] %v1280
  %1297 = vst [vmem:[#allocation2 + $0x10] sm:$0xff] %v1281
  %1298 = vst [vmem:[#allocation2 + $0x18] sm:$0xff] %v1282
  %1299 = vst [vmem:[#allocation2 + $0x20] sm:$0xff] %v1283
  %1300 = vst [vmem:[#allocation2 + $0x28] sm:$0xff] %v1284
  %1301 = vst [vmem:[#allocation2 + $0x30] sm:$0xff] %v1285
  %1302 = vst [vmem:[#allocation2 + $0x38] sm:$0xff] %v1286
  %1303 = vst [vmem:[#allocation2 + $0x40] sm:$0xff] %v1287
  %1304 = vst [vmem:[#allocation2 + $0x48] sm:$0xff] %v1288
  %1305 = vst [vmem:[#allocation2 + $0x50] sm:$0xff] %v1289
  %1306 = vst [vmem:[#allocation2 + $0x58] sm:$0xff] %v1290
  %1307 = vst [vmem:[#allocation2 + $0x60] sm:$0xff] %v1291
  %1308 = vst [vmem:[#allocation2 + $0x68] sm:$0xff] %v1292
  %1309 = vst [vmem:[#allocation2 + $0x70] sm:$0xff] %v1293
  %1310 = vst [vmem:[#allocation2 + $0x78] sm:$0xff] %v1294
  %v1311 = vld [vmem:[#allocation2] sm:$0xff]
  %v1312 = vld [vmem:[#allocation2 + $0x8] sm:$0xff]
  %v1313 = vld [vmem:[#allocation2 + $0x10] sm:$0xff]
  %v1314 = vld [vmem:[#allocation2 + $0x18] sm:$0xff]
  %v1315 = vld [vmem:[#allocation2 + $0x20] sm:$0xff]
  %v1316 = vld [vmem:[#allocation2 + $0x28] sm:$0xff]
  %v1317 = vld [vmem:[#allocation2 + $0x30] sm:$0xff]
  %v1318 = vld [vmem:[#allocation2 + $0x38] sm:$0xff]
  %v1319 = vld [vmem:[#allocation2 + $0x40] sm:$0xff]
  %v1320 = vld [vmem:[#allocation2 + $0x48] sm:$0xff]
  %v1321 = vld [vmem:[#allocation2 + $0x50] sm:$0xff]
  %v1322 = vld [vmem:[#allocation2 + $0x58] sm:$0xff]
  %v1323 = vld [vmem:[#allocation2 + $0x60] sm:$0xff]
  %v1324 = vld [vmem:[#allocation2 + $0x68] sm:$0xff]
  %v1325 = vld [vmem:[#allocation2 + $0x70] sm:$0xff]
  %v1326 = vld [vmem:[#allocation2 + $0x78] sm:$0xff]
  %1327 = vst [vmem:[%s4] sm:$0xff] %v1311
  %1328 = vst [vmem:[%s4 + $0x8] sm:$0xff] %v1312
  %1329 = vst [vmem:[%s4 + $0x10] sm:$0xff] %v1313
  %1330 = vst [vmem:[%s4 + $0x18] sm:$0xff] %v1314
  %1331 = vst [vmem:[%s4 + $0x20] sm:$0xff] %v1315
  %1332 = vst [vmem:[%s4 + $0x28] sm:$0xff] %v1316
  %1333 = vst [vmem:[%s4 + $0x30] sm:$0xff] %v1317
  %1334 = vst [vmem:[%s4 + $0x38] sm:$0xff] %v1318
  %1335 = vst [vmem:[%s4 + $0x40] sm:$0xff] %v1319
  %1336 = vst [vmem:[%s4 + $0x48] sm:$0xff] %v1320
  %1337 = vst [vmem:[%s4 + $0x50] sm:$0xff] %v1321
  %1338 = vst [vmem:[%s4 + $0x58] sm:$0xff] %v1322
  %1339 = vst [vmem:[%s4 + $0x60] sm:$0xff] %v1323
  %1340 = vst [vmem:[%s4 + $0x68] sm:$0xff] %v1324
  %1341 = vst [vmem:[%s4 + $0x70] sm:$0xff] %v1325
  %1342 = vst [vmem:[%s4 + $0x78] sm:$0xff] %v1326
  %v1343 = vadd.f32 %v1311, %v1312
  %v1344 = vadd.f32 %v1343, %v1313
  %v1345 = vadd.f32 %v1344, %v1314
  %v1346 = vadd.f32 %v1345, %v1315
  %v1347 = vadd.f32 %v1346, %v1316
  %v1348 = vadd.f32 %v1347, %v1317
  %v1349 = vadd.f32 %v1348, %v1318
  %v1350 = vadd.f32 %v1349, %v1319
  %v1351 = vadd.f32 %v1350, %v1320
  %v1352 = vadd.f32 %v1351, %v1321
  %v1353 = vadd.f32 %v1352, %v1322
  %v1354 = vadd.f32 %v1353, %v1323
  %v1355 = vadd.f32 %v1354, %v1324
  %v1356 = vadd.f32 %v1355, %v1325
  %v1357 = vadd.f32 %v1356, %v1326
  %v1358 = vrot.slane %v1357, 4
  %v1359 = vadd.f32 %v1357, %v1358
  %v1360 = vrot.slane %v1359, 2
  %v1361 = vadd.f32 %v1359, %v1360
  %v1362 = vrot.slane %v1361, 1
  %v1363 = vadd.f32 %v1361, %v1362
  %v1364 = vmul.f32 %v1311, %v1311
  %v1365 = vmul.f32 %v1312, %v1312
  %v1366 = vmul.f32 %v1313, %v1313
  %v1367 = vmul.f32 %v1314, %v1314
  %v1368 = vmul.f32 %v1315, %v1315
  %v1369 = vmul.f32 %v1316, %v1316
  %v1370 = vmul.f32 %v1317, %v1317
  %v1371 = vmul.f32 %v1318, %v1318
  %v1372 = vmul.f32 %v1319, %v1319
  %v1373 = vmul.f32 %v1320, %v1320
  %v1374 = vmul.f32 %v1321, %v1321
  %v1375 = vmul.f32 %v1322, %v1322
  %v1376 = vmul.f32 %v1323, %v1323
  %v1377 = vmul.f32 %v1324, %v1324
  %v1378 = vmul.f32 %v1325, %v1325
  %v1379 = vmul.f32 %v1326, %v1326
  %v1380 = vadd.f32 %v1364, %v1365
  %v1381 = vadd.f32 %v1380, %v1366
  %v1382 = vadd.f32 %v1381, %v1367
  %v1383 = vadd.f32 %v1382, %v1368
  %v1384 = vadd.f32 %v1383, %v1369
  %v1385 = vadd.f32 %v1384, %v1370
  %v1386 = vadd.f32 %v1385, %v1371
  %v1387 = vadd.f32 %v1386, %v1372
  %v1388 = vadd.f32 %v1387, %v1373
  %v1389 = vadd.f32 %v1388, %v1374
  %v1390 = vadd.f32 %v1389, %v1375
  %v1391 = vadd.f32 %v1390, %v1376
  %v1392 = vadd.f32 %v1391, %v1377
  %v1393 = vadd.f32 %v1392, %v1378
  %v1394 = vadd.f32 %v1393, %v1379
  %v1395 = vrot.slane %v1394, 4
  %v1396 = vadd.f32 %v1394, %v1395
  %v1397 = vrot.slane %v1396, 2
  %v1398 = vadd.f32 %v1396, %v1397
  %v1399 = vrot.slane %v1398, 1
  %v1400 = vadd.f32 %v1398, %v1399
  %vm1401 = vcmask 1040384
  %v1402 = vsel %vm1401, %v1363, %v1400
  %1403 = vst [vmem:[%s5] sm:$0x3] %v1402
  %v1404 = vld [vmem:[%s2] sm:$0xff]
  %v1405 = vld [vmem:[%s2 + $0x8] sm:$0xff]
  %v1406 = vld [vmem:[%s2 + $0x10] sm:$0xff]
  %v1407 = vld [vmem:[%s2 + $0x18] sm:$0xff]
  %v1408 = vld [vmem:[%s2 + $0x20] sm:$0xff]
  %v1409 = vld [vmem:[%s2 + $0x28] sm:$0xff]
  %v1410 = vld [vmem:[%s2 + $0x30] sm:$0xff]
  %v1411 = vld [vmem:[%s2 + $0x38] sm:$0xff]
  %v1412 = vld [vmem:[%s2 + $0x40] sm:$0xff]
  %v1413 = vld [vmem:[%s2 + $0x48] sm:$0xff]
  %v1414 = vld [vmem:[%s2 + $0x50] sm:$0xff]
  %v1415 = vld [vmem:[%s2 + $0x58] sm:$0xff]
  %v1416 = vld [vmem:[%s2 + $0x60] sm:$0xff]
  %v1417 = vld [vmem:[%s2 + $0x68] sm:$0xff]
  %v1418 = vld [vmem:[%s2 + $0x70] sm:$0xff]
  %v1419 = vld [vmem:[%s2 + $0x78] sm:$0xff]
  %v1420 = vld [vmem:[%s3] sm:$0xff]
  %v1421 = vld [vmem:[%s3 + $0x8] sm:$0xff]
  %v1422 = vld [vmem:[%s3 + $0x10] sm:$0xff]
  %v1423 = vld [vmem:[%s3 + $0x18] sm:$0xff]
  %v1424 = vld [vmem:[%s3 + $0x20] sm:$0xff]
  %v1425 = vld [vmem:[%s3 + $0x28] sm:$0xff]
  %v1426 = vld [vmem:[%s3 + $0x30] sm:$0xff]
  %v1427 = vld [vmem:[%s3 + $0x38] sm:$0xff]
  %v1428 = vld [vmem:[%s3 + $0x40] sm:$0xff]
  %v1429 = vld [vmem:[%s3 + $0x48] sm:$0xff]
  %v1430 = vld [vmem:[%s3 + $0x50] sm:$0xff]
  %v1431 = vld [vmem:[%s3 + $0x58] sm:$0xff]
  %v1432 = vld [vmem:[%s3 + $0x60] sm:$0xff]
  %v1433 = vld [vmem:[%s3 + $0x68] sm:$0xff]
  %v1434 = vld [vmem:[%s3 + $0x70] sm:$0xff]
  %v1435 = vld [vmem:[%s3 + $0x78] sm:$0xff]
  %1436 = vmatpush.msra.mxu0 %v1435
  %1437 = vmatpush.msra.mxu0 %v1434
  %1438 = vmatpush.msra.mxu0 %v1433
  %1439 = vmatpush.msra.mxu0 %v1432
  %1440 = vmatpush.msra.mxu0 %v1431
  %1441 = vmatpush.msra.mxu0 %v1430
  %1442 = vmatpush.msra.mxu0 %v1429
  %1443 = vmatpush.msra.mxu0 %v1428
  %1444 = vmatpush.msra.mxu0 %v1427
  %1445 = vmatpush.msra.mxu0 %v1426
  %1446 = vmatpush.msra.mxu0 %v1425
  %1447 = vmatpush.msra.mxu0 %v1424
  %1448 = vmatpush.msra.mxu0 %v1423
  %1449 = vmatpush.msra.mxu0 %v1422
  %1450 = vmatpush.msra.mxu0 %v1421
  %1451 = vmatpush.msra.mxu0 %v1420
  %1452 = vmatmul.f32.gmra.mxu0 %v1404
  %v1453 = vpop.f32.mrf.mxu0
  %v1454 = vadd.f32 0.0, %v1453
  %1455 = vmatmul.f32.gmra.mxu0 %v1405
  %v1456 = vpop.f32.mrf.mxu0
  %v1457 = vadd.f32 0.0, %v1456
  %1458 = vmatmul.f32.gmra.mxu0 %v1406
  %v1459 = vpop.f32.mrf.mxu0
  %v1460 = vadd.f32 0.0, %v1459
  %1461 = vmatmul.f32.gmra.mxu0 %v1407
  %v1462 = vpop.f32.mrf.mxu0
  %v1463 = vadd.f32 0.0, %v1462
  %1464 = vmatmul.f32.gmra.mxu0 %v1408
  %v1465 = vpop.f32.mrf.mxu0
  %v1466 = vadd.f32 0.0, %v1465
  %1467 = vmatmul.f32.gmra.mxu0 %v1409
  %v1468 = vpop.f32.mrf.mxu0
  %v1469 = vadd.f32 0.0, %v1468
  %1470 = vmatmul.f32.gmra.mxu0 %v1410
  %v1471 = vpop.f32.mrf.mxu0
  %v1472 = vadd.f32 0.0, %v1471
  %1473 = vmatmul.f32.gmra.mxu0 %v1411
  %v1474 = vpop.f32.mrf.mxu0
  %v1475 = vadd.f32 0.0, %v1474
  %1476 = vmatmul.f32.gmra.mxu0 %v1412
  %v1477 = vpop.f32.mrf.mxu0
  %v1478 = vadd.f32 0.0, %v1477
  %1479 = vmatmul.f32.gmra.mxu0 %v1413
  %v1480 = vpop.f32.mrf.mxu0
  %v1481 = vadd.f32 0.0, %v1480
  %1482 = vmatmul.f32.gmra.mxu0 %v1414
  %v1483 = vpop.f32.mrf.mxu0
  %v1484 = vadd.f32 0.0, %v1483
  %1485 = vmatmul.f32.gmra.mxu0 %v1415
  %v1486 = vpop.f32.mrf.mxu0
  %v1487 = vadd.f32 0.0, %v1486
  %1488 = vmatmul.f32.gmra.mxu0 %v1416
  %v1489 = vpop.f32.mrf.mxu0
  %v1490 = vadd.f32 0.0, %v1489
  %1491 = vmatmul.f32.gmra.mxu0 %v1417
  %v1492 = vpop.f32.mrf.mxu0
  %v1493 = vadd.f32 0.0, %v1492
  %1494 = vmatmul.f32.gmra.mxu0 %v1418
  %v1495 = vpop.f32.mrf.mxu0
  %v1496 = vadd.f32 0.0, %v1495
  %1497 = vmatmul.f32.gmra.mxu0 %v1419
  %v1498 = vpop.f32.mrf.mxu0
  %v1499 = vadd.f32 0.0, %v1498
  %1500 = vdwg.mxu0
  %1501 = vst [vmem:[%s6] sm:$0xff] %v1454
  %1502 = vst [vmem:[%s6 + $0x8] sm:$0xff] %v1457
  %1503 = vst [vmem:[%s6 + $0x10] sm:$0xff] %v1460
  %1504 = vst [vmem:[%s6 + $0x18] sm:$0xff] %v1463
  %1505 = vst [vmem:[%s6 + $0x20] sm:$0xff] %v1466
  %1506 = vst [vmem:[%s6 + $0x28] sm:$0xff] %v1469
  %1507 = vst [vmem:[%s6 + $0x30] sm:$0xff] %v1472
  %1508 = vst [vmem:[%s6 + $0x38] sm:$0xff] %v1475
  %1509 = vst [vmem:[%s6 + $0x40] sm:$0xff] %v1478
  %1510 = vst [vmem:[%s6 + $0x48] sm:$0xff] %v1481
  %1511 = vst [vmem:[%s6 + $0x50] sm:$0xff] %v1484
  %1512 = vst [vmem:[%s6 + $0x58] sm:$0xff] %v1487
  %1513 = vst [vmem:[%s6 + $0x60] sm:$0xff] %v1490
  %1514 = vst [vmem:[%s6 + $0x68] sm:$0xff] %v1493
  %1515 = vst [vmem:[%s6 + $0x70] sm:$0xff] %v1496
  %1516 = vst [vmem:[%s6 + $0x78] sm:$0xff] %v1499
  %v1517 = vadd.f32 %v1454, %v1457
  %v1518 = vadd.f32 %v1517, %v1460
  %v1519 = vadd.f32 %v1518, %v1463
  %v1520 = vadd.f32 %v1519, %v1466
  %v1521 = vadd.f32 %v1520, %v1469
  %v1522 = vadd.f32 %v1521, %v1472
  %v1523 = vadd.f32 %v1522, %v1475
  %v1524 = vadd.f32 %v1523, %v1478
  %v1525 = vadd.f32 %v1524, %v1481
  %v1526 = vadd.f32 %v1525, %v1484
  %v1527 = vadd.f32 %v1526, %v1487
  %v1528 = vadd.f32 %v1527, %v1490
  %v1529 = vadd.f32 %v1528, %v1493
  %v1530 = vadd.f32 %v1529, %v1496
  %v1531 = vadd.f32 %v1530, %v1499
  %v1532 = vrot.slane %v1531, 4
  %v1533 = vadd.f32 %v1531, %v1532
  %v1534 = vrot.slane %v1533, 2
  %v1535 = vadd.f32 %v1533, %v1534
  %v1536 = vrot.slane %v1535, 1
  %v1537 = vadd.f32 %v1535, %v1536
  %v1538 = vmul.f32 %v1454, %v1454
  %v1539 = vmul.f32 %v1457, %v1457
  %v1540 = vmul.f32 %v1460, %v1460
  %v1541 = vmul.f32 %v1463, %v1463
  %v1542 = vmul.f32 %v1466, %v1466
  %v1543 = vmul.f32 %v1469, %v1469
  %v1544 = vmul.f32 %v1472, %v1472
  %v1545 = vmul.f32 %v1475, %v1475
  %v1546 = vmul.f32 %v1478, %v1478
  %v1547 = vmul.f32 %v1481, %v1481
  %v1548 = vmul.f32 %v1484, %v1484
  %v1549 = vmul.f32 %v1487, %v1487
  %v1550 = vmul.f32 %v1490, %v1490
  %v1551 = vmul.f32 %v1493, %v1493
  %v1552 = vmul.f32 %v1496, %v1496
  %v1553 = vmul.f32 %v1499, %v1499
  %v1554 = vadd.f32 %v1538, %v1539
  %v1555 = vadd.f32 %v1554, %v1540
  %v1556 = vadd.f32 %v1555, %v1541
  %v1557 = vadd.f32 %v1556, %v1542
  %v1558 = vadd.f32 %v1557, %v1543
  %v1559 = vadd.f32 %v1558, %v1544
  %v1560 = vadd.f32 %v1559, %v1545
  %v1561 = vadd.f32 %v1560, %v1546
  %v1562 = vadd.f32 %v1561, %v1547
  %v1563 = vadd.f32 %v1562, %v1548
  %v1564 = vadd.f32 %v1563, %v1549
  %v1565 = vadd.f32 %v1564, %v1550
  %v1566 = vadd.f32 %v1565, %v1551
  %v1567 = vadd.f32 %v1566, %v1552
  %v1568 = vadd.f32 %v1567, %v1553
  %v1569 = vrot.slane %v1568, 4
  %v1570 = vadd.f32 %v1568, %v1569
  %v1571 = vrot.slane %v1570, 2
  %v1572 = vadd.f32 %v1570, %v1571
  %v1573 = vrot.slane %v1572, 1
  %v1574 = vadd.f32 %v1572, %v1573
  %v1575 = vsel %vm1401, %v1537, %v1574
  %1576 = vst [vmem:[%s7] sm:$0x3] %v1575
  // Predicated region
  $region18: #{basic_block_forward.6} parent=0 // pred_check
    _
  $region19: #{basic_block_forward.6} parent=0 // pred_check_branch
    %1578 = sbr.rel (0) target = $region21
  $region20: #{basic_block_forward.6} parent=0 // pred_region
    _
  $region21: #{basic_block_forward.6} parent=0 // pred_fallthru
    _
  // Predicated region
  $region22: #{basic_block_forward.6} parent=0 // pred_check
    _
  $region23: #{basic_block_forward.6} parent=0 // pred_check_branch
    %1580 = sbr.rel (0) target = $region25
  $region24: #{basic_block_forward.6} parent=0 // pred_region
    _
  $region25: #{basic_block_forward.6} parent=0 // pred_fallthru
    _
  // Predicated region
  $region26: #{basic_block_forward.6} parent=0 // pred_check
    _
  $region27: #{basic_block_forward.6} parent=0 // pred_check_branch
    %1582 = sbr.rel (0) target = $region29
  $region28: #{basic_block_forward.6} parent=0 // pred_region
    _
  $region29: #{basic_block_forward.6} parent=0 // pred_fallthru
    _
  // Predicated region
  $region30: #{basic_block_forward.6} parent=0 // pred_check
    _
  $region31: #{basic_block_forward.6} parent=0 // pred_check_branch
    %1584 = sbr.rel (0) target = $region33
  $region32: #{basic_block_forward.6} parent=0 // pred_region
    _
  $region33: #{basic_block_forward.6} parent=0 // pred_fallthru
    _
  // Predicated region
  $region34: #{basic_block_forward.6} parent=0 // pred_check
    _
  $region35: #{basic_block_forward.6} parent=0 // pred_check_branch
    %1586 = sbr.rel (0) target = $region37
  $region36: #{basic_block_forward.6} parent=0 // pred_region
    _
  $region37: #{basic_block_forward.6} parent=0 // pred_fallthru
    _
  // Predicated region
  $region38: #{basic_block_forward.6} parent=0 // pred_check
    _
  $region39: #{basic_block_forward.6} parent=0 // pred_check_branch
    %1588 = sbr.rel (0) target = $region41
  $region40: #{basic_block_forward.6} parent=0 // pred_region
    _
  $region41: #{basic_block_forward.6} parent=0 // pred_fallthru
    _
  // Predicated region
  $region42: #{basic_block_forward.6} parent=0 // pred_check
    _
  $region43: #{basic_block_forward.6} parent=0 // pred_check_branch
    %1590 = sbr.rel (0) target = $region45
  $region44: #{basic_block_forward.6} parent=0 // pred_region
    _
  $region45: #{basic_block_forward.6} parent=0 // pred_fallthru
    _
  // Predicated region
  $region46: #{basic_block_forward.6} parent=0 // pred_check
    _
  $region47: #{basic_block_forward.6} parent=0 // pred_check_branch
    %1592 = sbr.rel (0) target = $region49
  $region48: #{basic_block_forward.6} parent=0 // pred_region
    _
  $region49: #{basic_block_forward.6} parent=0 // pred_fallthru
    _

</llo_original>
